<compile_context>
chip_gen: v6e
topology: v6e:2x2x1
jax: 0.10.0
libtpu: 0.0.40
codegen_flags: <defaults>
</compile_context>

<pallas_src>
import functools

import jax
import jax.numpy as jnp
from jax.experimental import pallas as pl
from jax.experimental.pallas import tpu as pltpu


# ------------------ fused CNN1DDoubleMaxpool block (conv+relu, conv+relu, maxpool) ------------------

def _cnn_block_kernel(x_ref, w1_ref, b1_ref, w2_ref, b2_ref, o_ref, *,
                      K, pad, maxpool, lstm_layout):
    # x_ref : (1, Ci, Lp1) zero-padded input slab for one batch element
    # w1_ref: (Co, K*Ci)   packed conv1 weight (tap-major columns), b1_ref: (Co, 1)
    # w2_ref: (Co, K*Co)   packed conv2 weight,                      b2_ref: (Co, 1)
    # o_ref : (1, Co, Lf)  NCL   when lstm_layout=False
    #         (1, Lf, Co)  (T,C) when lstm_layout=True  (feeds the LSTM directly)
    x = x_ref[0]                              # (Ci, Lp1)
    Lp1 = x.shape[1]
    L1 = Lp1 - (K - 1)

    # conv1: single im2col matmul (collapses the K-tap loop into one MXU push).
    if K > 1:
        p1 = jnp.concatenate([x[:, dk:dk + L1] for dk in range(K)], axis=0)   # (K*Ci, L1)
    else:
        p1 = x
    y1 = jnp.maximum(
        jnp.dot(w1_ref[...], p1, preferred_element_type=jnp.float32) + b1_ref[...], 0.0)

    Co = y1.shape[0]
    # conv2: zero-pad the intermediate inside VMEM, im2col again, one matmul.
    if pad > 0:
        zpad = jnp.zeros((Co, pad), jnp.float32)
        y1p = jnp.concatenate([zpad, y1, zpad], axis=1)                       # (Co, L1 + 2*pad)
    else:
        y1p = y1
    L2 = (L1 + 2 * pad) - (K - 1)
    if K > 1:
        p2 = jnp.concatenate([y1p[:, dk:dk + L2] for dk in range(K)], axis=0)  # (K*Co, L2)
    else:
        p2 = y1p
    y2 = jnp.maximum(
        jnp.dot(w2_ref[...], p2, preferred_element_type=jnp.float32) + b2_ref[...], 0.0)

    if maxpool is not None:
        m = maxpool
        Lf = L2 // m
        # NOTE: reshape-max kept (proven lowering); strided-lane max would avoid the lane reshape.
        y2 = y2[:, :Lf * m].reshape(Co, Lf, m).max(axis=-1)

    # TODO(synk): nn.Dropout is identity at inference; stochastic dropout not applied.
    if lstm_layout:
        # Emit (T, C) per batch element so the LSTM consumes it without a wrapper transpose.
        o_ref[0] = jnp.transpose(y2, (1, 0)).astype(o_ref.dtype)
    else:
        o_ref[0] = y2.astype(o_ref.dtype)


def cnn_block(x, p, *, kernel_size, maxpool, lstm_layout=False):
    """CNN1DDoubleMaxpool.forward (batch_norm=False, eval-mode dropout).
    x: (B, Ci, L) NCL.  Returns (B, Co, Lf) or, if lstm_layout, (B, Lf, Co)."""
    B, Ci, L = x.shape
    Co = p["w1"].shape[0]
    K = kernel_size
    pad = (K - 1) // 2                              # torch padding_same (odd K)
    L1 = L + 2 * pad - (K - 1)
    L2 = L1 + 2 * pad - (K - 1)
    Lf = L2 if maxpool is None else L2 // maxpool
    Lp1 = L + 2 * pad

    x_pad = jnp.pad(x, ((0, 0), (0, 0), (pad, pad)))
    # Pack weights for the im2col matmul: w[co, ci, k] -> w_packed[co, k*Ci + ci].
    w1p = jnp.transpose(p["w1"], (0, 2, 1)).reshape(Co, K * Ci)
    w2p = jnp.transpose(p["w2"], (0, 2, 1)).reshape(Co, K * Co)
    b1 = p["b1"].reshape(Co, 1)
    b2 = p["b2"].reshape(Co, 1)

    if lstm_layout:
        out_shape = jax.ShapeDtypeStruct((B, Lf, Co), x.dtype)
        out_specs = pl.BlockSpec((1, Lf, Co), lambda bi: (bi, 0, 0))
    else:
        out_shape = jax.ShapeDtypeStruct((B, Co, Lf), x.dtype)
        out_specs = pl.BlockSpec((1, Co, Lf), lambda bi: (bi, 0, 0))

    # Whole-array VMEM refs for the (re-used) weights: resident once, no double-buffering.
    wspec = pl.BlockSpec(memory_space=pltpu.MemorySpace.VMEM)
    kern = functools.partial(_cnn_block_kernel, K=K, pad=pad, maxpool=maxpool,
                             lstm_layout=lstm_layout)
    return pl.pallas_call(
        kern,
        out_shape=out_shape,
        grid_spec=pltpu.PrefetchScalarGridSpec(
            num_scalar_prefetch=0,
            grid=(B,),
            in_specs=[pl.BlockSpec((1, Ci, Lp1), lambda bi: (bi, 0, 0)),
                      wspec, wspec, wspec, wspec],
            out_specs=out_specs),
        compiler_params=pltpu.CompilerParams(dimension_semantics=("parallel",)),
    )(x_pad, w1p, b1, w2p, b2)


# ----------------------- hoisted input projection: gates_x = X @ W_ih^T + b -----------------------

def _matmul_bias_kernel(x_ref, w_ref, b_ref, o_ref):
    o_ref[...] = (
        jnp.dot(x_ref[...], w_ref[...], preferred_element_type=jnp.float32) + b_ref[...]
    ).astype(o_ref.dtype)


def matmul_bias(x2d, w_t, b_row):
    """x2d: (M, I); w_t: (I, N); b_row: (1, N). Single-shot whole-array matmul (small M*I*N)."""
    M = x2d.shape[0]
    N = w_t.shape[1]
    return pl.pallas_call(
        _matmul_bias_kernel,
        out_shape=jax.ShapeDtypeStruct((M, N), x2d.dtype),
    )(x2d, w_t, b_row)


# ----------------------------------- LSTM recurrence (+ fused generator) --------------------------

def _lstm_kernel(*refs, T_blk, H, fuse_gen):
    if fuse_gen:
        gx_ref, whh_ref, gw_ref, gb_ref, logit_ref, h_sc, c_sc = refs
    else:
        gx_ref, whh_ref, out_ref, h_sc, c_sc = refs
    t_idx = pl.program_id(1)

    @pl.when(t_idx == 0)
    def _():
        h_sc[...] = jnp.zeros_like(h_sc)
        c_sc[...] = jnp.zeros_like(c_sc)

    h = h_sc[...]
    c = c_sc[...]
    whh = whh_ref[...]                                   # (H, 4H), resident in VMEM

    # Static unroll over the T_blk timesteps handled by this grid step (serial recurrence;
    # only the h @ W_hh matmul + gate math remain here, X @ W_ih was precomputed).
    for tt in range(T_blk):
        gates = gx_ref[:, tt, :] + jnp.dot(h, whh, preferred_element_type=jnp.float32)
        i = jax.nn.sigmoid(gates[:, 0 * H:1 * H])        # PyTorch gate order: i, f, g, o
        f = jax.nn.sigmoid(gates[:, 1 * H:2 * H])
        g = jnp.tanh(gates[:, 2 * H:3 * H])
        o = jax.nn.sigmoid(gates[:, 3 * H:4 * H])
        c = f * c + i * g
        h = o * jnp.tanh(c)
        if not fuse_gen:
            out_ref[:, tt, :] = h.astype(out_ref.dtype)

    h_sc[...] = h
    c_sc[...] = c

    if fuse_gen:
        # Generator (Linear) fused into the last grid step: last_h never touches HBM.
        @pl.when(t_idx == pl.num_programs(1) - 1)
        def _():
            logit_ref[...] = (
                jnp.dot(h, gw_ref[...], preferred_element_type=jnp.float32) + gb_ref[...]
            ).astype(logit_ref.dtype)


def _pick_time_block(T, max_blk=32):
    if T <= max_blk:
        return T
    for cand in range(max_blk, 7, -1):                   # multiples of 8 keep blocks tile-aligned
        if cand % 8 == 0 and T % cand == 0:
            return cand
    return T                                             # fallback: whole sequence in one block


def lstm_layer(x_btc, w_ih, w_hh, b_ih, b_hh, *, gen_w=None, gen_b=None,
               t_blk=None, batch_splits=1):
    """One nn.LSTM layer (batch_first).  x_btc: (B, T, I); weights in PyTorch layout
    (4H, I)/(4H, H).  If gen_w/gen_b are given, returns the fused generator logits (B, O)
    instead of the output sequence."""
    B, T, I = x_btc.shape
    H = w_hh.shape[1]

    # (1) Hoisted input projection for ALL timesteps: one (B*T, I) x (I, 4H) matmul.
    gx = matmul_bias(x_btc.reshape(B * T, I), w_ih.T, (b_ih + b_hh).reshape(1, 4 * H))
    gx = gx.reshape(B, T, 4 * H)

    # (2) Serial recurrence, T_blk timesteps per grid step.
    T_blk = t_blk if t_blk is not None else _pick_time_block(T)
    nt = T // T_blk
    nb = 1
    if batch_splits > 1 and B % batch_splits == 0 and (B // batch_splits) % 8 == 0:
        nb = batch_splits                                # v7x: split batch across the 2 TCs
    B_blk = B // nb

    fuse_gen = gen_w is not None
    wspec = pl.BlockSpec(memory_space=pltpu.MemorySpace.VMEM)
    in_specs = [pl.BlockSpec((B_blk, T_blk, 4 * H), lambda b, t: (b, t, 0)), wspec]
    args = [gx, w_hh.T]
    if fuse_gen:
        O = gen_w.shape[0]
        in_specs += [wspec, wspec]
        args += [gen_w.T, gen_b.reshape(1, O)]
        out_shape = jax.ShapeDtypeStruct((B, O), x_btc.dtype)
        out_specs = pl.BlockSpec((B_blk, O), lambda b, t: (b, 0))
    else:
        out_shape = jax.ShapeDtypeStruct((B, T, H), x_btc.dtype)
        out_specs = pl.BlockSpec((B_blk, T_blk, H), lambda b, t: (b, t, 0))

    kern = functools.partial(_lstm_kernel, T_blk=T_blk, H=H, fuse_gen=fuse_gen)
    return pl.pallas_call(
        kern,
        out_shape=out_shape,
        grid_spec=pltpu.PrefetchScalarGridSpec(
            num_scalar_prefetch=0,
            grid=(nb, nt),
            in_specs=in_specs,
            out_specs=out_specs,
            scratch_shapes=[pltpu.VMEM((B_blk, H), jnp.float32),
                            pltpu.VMEM((B_blk, H), jnp.float32)]),
        compiler_params=pltpu.CompilerParams(
            dimension_semantics=("parallel", "arbitrary")),
    )(*args)


# ----------------------------------------- model glue code ----------------------------------------

def init_params(key, channel_input, output_size, lp):
    def normal(k, shape):
        return 0.1 * jax.random.normal(k, shape, jnp.float32)

    keys = iter(jax.random.split(key, 64))
    params = {}

    def cnn(ci, co, k):
        return {"w1": normal(next(keys), (co, ci, k)), "b1": normal(next(keys), (co,)),
                "w2": normal(next(keys), (co, co, k)), "b2": normal(next(keys), (co,))}

    ci = channel_input
    params["cnn1"] = cnn(ci, lp["cnn1"], lp["kernel_1"])
    cnn_out = lp["cnn1"]
    if lp["cnn2"] is not None:
        params["cnn2"] = cnn(cnn_out, lp["cnn2"], lp["kernel_2"])
        cnn_out = lp["cnn2"]
    if lp["cnn3"] is not None:
        params["cnn3"] = cnn(cnn_out, lp["cnn3"], lp["kernel_3"])
        cnn_out = lp["cnn3"]

    H = lp["lstm_hidden_size"]
    lstm_layers = []
    in_size = cnn_out
    for _ in range(lp["nb_lstm"]):
        lstm_layers.append({
            "w_ih": normal(next(keys), (4 * H, in_size)),
            "w_hh": normal(next(keys), (4 * H, H)),
            "b_ih": normal(next(keys), (4 * H,)),
            "b_hh": normal(next(keys), (4 * H,)),
        })
        in_size = H
    params["lstm"] = lstm_layers
    params["gen_w"] = normal(next(keys), (output_size, H))
    params["gen_b"] = normal(next(keys), (output_size,))
    return params


def conv1d_into_lstm_forward(params, x, lp):
    # x: (B, C_in, L) -- PyTorch NCL.
    # TODO(synk): batch_norm=True path (nn.BatchNorm1d) not implemented; config uses False.
    n_blocks = 1 + (lp["cnn2"] is not None) + (lp["cnn3"] is not None)
    c = cnn_block(x, params["cnn1"], kernel_size=lp["kernel_1"], maxpool=lp["maxpool_1"],
                  lstm_layout=(n_blocks == 1))
    if lp["cnn2"] is not None:
        c = cnn_block(c, params["cnn2"], kernel_size=lp["kernel_2"], maxpool=lp["maxpool_2"],
                      lstm_layout=(n_blocks == 2))
    if lp["cnn3"] is not None:
        c = cnn_block(c, params["cnn3"], kernel_size=lp["kernel_3"], maxpool=lp["maxpool_3"],
                      lstm_layout=True)
    # c: (B, T, C) -- identical to torch's r_in = transpose(c_out, 1, 2), emitted in-kernel.
    r = c
    layers = params["lstm"]
    for li, layer in enumerate(layers):
        last = li == len(layers) - 1
        r = lstm_layer(
            r, layer["w_ih"], layer["w_hh"], layer["b_ih"], layer["b_hh"],
            gen_w=params["gen_w"] if last else None,
            gen_b=params["gen_b"] if last else None,
        )
    return r  # (B, output_size): generator(r_out[:, -1, :]) fused into the last LSTM layer


if __name__ == "__main__":
    B, C_in, L = 2, 4, 16
    output_size = 5
    layers_param = dict(
        cnn1=8, kernel_1=3, maxpool_1=2,
        cnn2=16, kernel_2=3, maxpool_2=2,
        cnn3=None, kernel_3=None, maxpool_3=None,
        dropout=0.5, batch_norm=False,
        lstm_hidden_size=32, nb_lstm=2,
    )

    root = jax.random.PRNGKey(0)
    k_params, k_x = jax.random.split(root)
    params = init_params(k_params, C_in, output_size, layers_param)
    x = jax.random.normal(k_x, (B, C_in, L), jnp.float32)

    fwd = jax.jit(functools.partial(conv1d_into_lstm_forward, lp=layers_param))
    out = jax.block_until_ready(fwd(params, x))
    assert out.shape == (B, output_size), out.shape
    print("KERNEL_OK")
</pallas_src>

<mosaic_0001>
module attributes {stable_mosaic.version = 11 : i64} {
  func.func @_cnn_block_kernel(%arg0: i32, %arg1: memref<1x4x18xf32, #tpu.memory_space<vmem>>, %arg2: memref<8x12xf32, #tpu.memory_space<vmem>>, %arg3: memref<8x1xf32, #tpu.memory_space<vmem>>, %arg4: memref<8x24xf32, #tpu.memory_space<vmem>>, %arg5: memref<8x1xf32, #tpu.memory_space<vmem>>, %arg6: memref<1x8x8xf32, #tpu.memory_space<vmem>>) attributes {dimension_semantics = [#tpu.dimension_semantics<parallel>], iteration_bounds = array<i64: 2>, scalar_prefetch = 0 : i64, scratch_operands = 0 : i64, tpu.core_type = #tpu.core_type<tc>, window_params = [{transform_indices = @transform_0, window_bounds = array<i64: 1, 4, 18>}, {pipeline_mode = #tpu.pipeline_mode<synchronous>, transform_indices = @transform_1, window_bounds = array<i64: 8, 12>}, {pipeline_mode = #tpu.pipeline_mode<synchronous>, transform_indices = @transform_2, window_bounds = array<i64: 8, 1>}, {pipeline_mode = #tpu.pipeline_mode<synchronous>, transform_indices = @transform_3, window_bounds = array<i64: 8, 24>}, {pipeline_mode = #tpu.pipeline_mode<synchronous>, transform_indices = @transform_4, window_bounds = array<i64: 8, 1>}, {transform_indices = @transform_5, window_bounds = array<i64: 1, 8, 8>}]} {
    %c0 = arith.constant 0 : index
    %c0_0 = arith.constant 0 : index
    %c0_1 = arith.constant 0 : index
    %0 = vector.load %arg1[%c0, %c0_0, %c0_1] : memref<1x4x18xf32, #tpu.memory_space<vmem>>, vector<1x4x18xf32>
    %1 = vector.shape_cast %0 : vector<1x4x18xf32> to vector<4x18xf32>
    %2 = vector.extract_strided_slice %1 {offsets = [0, 0], sizes = [4, 16], strides = [1, 1]} : vector<4x18xf32> to vector<4x16xf32>
    %3 = vector.extract_strided_slice %1 {offsets = [0, 1], sizes = [4, 16], strides = [1, 1]} : vector<4x18xf32> to vector<4x16xf32>
    %4 = vector.extract_strided_slice %1 {offsets = [0, 2], sizes = [4, 16], strides = [1, 1]} : vector<4x18xf32> to vector<4x16xf32>
    %5 = tpu.concatenate %2, %3, %4 in 0 : vector<4x16xf32>, vector<4x16xf32>, vector<4x16xf32> -> vector<12x16xf32>
    %c0_2 = arith.constant 0 : index
    %c0_3 = arith.constant 0 : index
    %6 = vector.load %arg2[%c0_2, %c0_3] : memref<8x12xf32, #tpu.memory_space<vmem>>, vector<8x12xf32>
    %cst = arith.constant dense<0.000000e+00> : vector<8x16xf32>
    %7 = tpu.matmul %6, %5, %cst {dimension_numbers = #tpu.dot_dimension_numbers<[1], [0], [0], [1], [0, 0, 1, 1], [], []>} : vector<8x12xf32>, vector<12x16xf32>, vector<8x16xf32> -> vector<8x16xf32>
    %c0_4 = arith.constant 0 : index
    %c0_5 = arith.constant 0 : index
    %8 = vector.load %arg3[%c0_4, %c0_5] : memref<8x1xf32, #tpu.memory_space<vmem>>, vector<8x1xf32>
    %9 = vector.broadcast %8 : vector<8x1xf32> to vector<8x16xf32>
    %10 = arith.addf %7, %9 : vector<8x16xf32>
    %cst_6 = arith.constant 0.000000e+00 : f32
    %11 = vector.broadcast %cst_6 : f32 to vector<8x16xf32>
    %12 = arith.maximumf %10, %11 : vector<8x16xf32>
    %cst_7 = arith.constant 0.000000e+00 : f32
    %13 = vector.broadcast %cst_7 : f32 to vector<8x1xf32>
    %14 = tpu.concatenate %13, %12, %13 in 1 : vector<8x1xf32>, vector<8x16xf32>, vector<8x1xf32> -> vector<8x18xf32>
    %15 = vector.extract_strided_slice %14 {offsets = [0, 0], sizes = [8, 16], strides = [1, 1]} : vector<8x18xf32> to vector<8x16xf32>
    %16 = vector.extract_strided_slice %14 {offsets = [0, 1], sizes = [8, 16], strides = [1, 1]} : vector<8x18xf32> to vector<8x16xf32>
    %17 = vector.extract_strided_slice %14 {offsets = [0, 2], sizes = [8, 16], strides = [1, 1]} : vector<8x18xf32> to vector<8x16xf32>
    %18 = tpu.concatenate %15, %16, %17 in 0 : vector<8x16xf32>, vector<8x16xf32>, vector<8x16xf32> -> vector<24x16xf32>
    %c0_8 = arith.constant 0 : index
    %c0_9 = arith.constant 0 : index
    %19 = vector.load %arg4[%c0_8, %c0_9] : memref<8x24xf32, #tpu.memory_space<vmem>>, vector<8x24xf32>
    %cst_10 = arith.constant dense<0.000000e+00> : vector<8x16xf32>
    %20 = tpu.matmul %19, %18, %cst_10 {dimension_numbers = #tpu.dot_dimension_numbers<[1], [0], [0], [1], [0, 0, 1, 1], [], []>} : vector<8x24xf32>, vector<24x16xf32>, vector<8x16xf32> -> vector<8x16xf32>
    %c0_11 = arith.constant 0 : index
    %c0_12 = arith.constant 0 : index
    %21 = vector.load %arg5[%c0_11, %c0_12] : memref<8x1xf32, #tpu.memory_space<vmem>>, vector<8x1xf32>
    %22 = vector.broadcast %21 : vector<8x1xf32> to vector<8x16xf32>
    %23 = arith.addf %20, %22 : vector<8x16xf32>
    %cst_13 = arith.constant 0.000000e+00 : f32
    %24 = vector.broadcast %cst_13 : f32 to vector<8x16xf32>
    %25 = arith.maximumf %23, %24 : vector<8x16xf32>
    %26 = vector.shape_cast %25 : vector<8x16xf32> to vector<8x8x2xf32>
    %cst_14 = arith.constant dense<0xFF800000> : vector<8x8xf32>
    %27 = vector.multi_reduction <maximumf>, %26, %cst_14 [2] : vector<8x8x2xf32> to vector<8x8xf32>
    %c0_15 = arith.constant 0 : index
    %c0_16 = arith.constant 0 : index
    %c0_17 = arith.constant 0 : index
    %28 = vector.load %arg6[%c0_15, %c0_16, %c0_17] : memref<1x8x8xf32, #tpu.memory_space<vmem>>, vector<1x8x8xf32>
    %29 = vector.shape_cast %28 : vector<1x8x8xf32> to vector<8x8xf32>
    %30 = vector.shape_cast %27 : vector<8x8xf32> to vector<1x8x8xf32>
    tpu.vector_store %arg6[%c0_15, %c0_16, %c0_17], %30 {strides = array<i32>} : memref<1x8x8xf32, #tpu.memory_space<vmem>>, vector<1x8x8xf32>,
    return
  }
  func.func @transform_0(%arg0: i32) -> (i32, i32, i32) {
    %c0_i32 = arith.constant 0 : i32
    %c0_i32_0 = arith.constant 0 : i32
    %c0_i32_1 = arith.constant 0 : i32
    return %arg0, %c0_i32, %c0_i32_0 : i32, i32, i32
  }
  func.func @transform_1(%arg0: i32) -> (i32, i32) {
    %c0_i32 = arith.constant 0 : i32
    %c0_i32_0 = arith.constant 0 : i32
    %c0_i32_1 = arith.constant 0 : i32
    return %c0_i32, %c0_i32_0 : i32, i32
  }
  func.func @transform_2(%arg0: i32) -> (i32, i32) {
    %c0_i32 = arith.constant 0 : i32
    %c0_i32_0 = arith.constant 0 : i32
    %c0_i32_1 = arith.constant 0 : i32
    return %c0_i32, %c0_i32_0 : i32, i32
  }
  func.func @transform_3(%arg0: i32) -> (i32, i32) {
    %c0_i32 = arith.constant 0 : i32
    %c0_i32_0 = arith.constant 0 : i32
    %c0_i32_1 = arith.constant 0 : i32
    return %c0_i32, %c0_i32_0 : i32, i32
  }
  func.func @transform_4(%arg0: i32) -> (i32, i32) {
    %c0_i32 = arith.constant 0 : i32
    %c0_i32_0 = arith.constant 0 : i32
    %c0_i32_1 = arith.constant 0 : i32
    return %c0_i32, %c0_i32_0 : i32, i32
  }
  func.func @transform_5(%arg0: i32) -> (i32, i32, i32) {
    %c0_i32 = arith.constant 0 : i32
    %c0_i32_0 = arith.constant 0 : i32
    %c0_i32_1 = arith.constant 0 : i32
    return %arg0, %c0_i32, %c0_i32_0 : i32, i32, i32
  }
}

module attributes {stable_mosaic.version = 11 : i64} {
  func.func @_matmul_bias_kernel(%arg0: memref<8x16xf32, #tpu.memory_space<vmem>>, %arg1: memref<16x128xf32, #tpu.memory_space<vmem>>, %arg2: memref<1x128xf32, #tpu.memory_space<vmem>>, %arg3: memref<8x128xf32, #tpu.memory_space<vmem>>) attributes {dimension_semantics = [], scalar_prefetch = 0 : i64, scratch_operands = 0 : i64, tpu.core_type = #tpu.core_type<tc>} {
    %c0 = arith.constant 0 : index
    %c0_0 = arith.constant 0 : index
    %0 = vector.load %arg0[%c0, %c0_0] : memref<8x16xf32, #tpu.memory_space<vmem>>, vector<8x16xf32>
    %c0_1 = arith.constant 0 : index
    %c0_2 = arith.constant 0 : index
    %1 = vector.load %arg1[%c0_1, %c0_2] : memref<16x128xf32, #tpu.memory_space<vmem>>, vector<16x128xf32>
    %cst = arith.constant dense<0.000000e+00> : vector<8x128xf32>
    %2 = tpu.matmul %0, %1, %cst {dimension_numbers = #tpu.dot_dimension_numbers<[1], [0], [0], [1], [0, 0, 1, 1], [], []>} : vector<8x16xf32>, vector<16x128xf32>, vector<8x128xf32> -> vector<8x128xf32>
    %c0_3 = arith.constant 0 : index
    %c0_4 = arith.constant 0 : index
    %3 = vector.load %arg2[%c0_3, %c0_4] : memref<1x128xf32, #tpu.memory_space<vmem>>, vector<1x128xf32>
    %4 = vector.broadcast %3 : vector<1x128xf32> to vector<8x128xf32>
    %5 = arith.addf %2, %4 : vector<8x128xf32>
    %c0_5 = arith.constant 0 : index
    %c0_6 = arith.constant 0 : index
    %6 = vector.load %arg3[%c0_5, %c0_6] : memref<8x128xf32, #tpu.memory_space<vmem>>, vector<8x128xf32>
    tpu.vector_store %arg3[%c0_5, %c0_6], %5 {strides = array<i32>} : memref<8x128xf32, #tpu.memory_space<vmem>>, vector<8x128xf32>,
    return
  }
}

module attributes {stable_mosaic.version = 11 : i64} {
  func.func @_cnn_block_kernel(%arg0: i32, %arg1: memref<1x8x10xf32, #tpu.memory_space<vmem>>, %arg2: memref<16x24xf32, #tpu.memory_space<vmem>>, %arg3: memref<16x1xf32, #tpu.memory_space<vmem>>, %arg4: memref<16x48xf32, #tpu.memory_space<vmem>>, %arg5: memref<16x1xf32, #tpu.memory_space<vmem>>, %arg6: memref<1x4x16xf32, #tpu.memory_space<vmem>>) attributes {dimension_semantics = [#tpu.dimension_semantics<parallel>], iteration_bounds = array<i64: 2>, scalar_prefetch = 0 : i64, scratch_operands = 0 : i64, tpu.core_type = #tpu.core_type<tc>, window_params = [{transform_indices = @transform_0, window_bounds = array<i64: 1, 8, 10>}, {pipeline_mode = #tpu.pipeline_mode<synchronous>, transform_indices = @transform_1, window_bounds = array<i64: 16, 24>}, {pipeline_mode = #tpu.pipeline_mode<synchronous>, transform_indices = @transform_2, window_bounds = array<i64: 16, 1>}, {pipeline_mode = #tpu.pipeline_mode<synchronous>, transform_indices = @transform_3, window_bounds = array<i64: 16, 48>}, {pipeline_mode = #tpu.pipeline_mode<synchronous>, transform_indices = @transform_4, window_bounds = array<i64: 16, 1>}, {transform_indices = @transform_5, window_bounds = array<i64: 1, 4, 16>}]} {
    %c0 = arith.constant 0 : index
    %c0_0 = arith.constant 0 : index
    %c0_1 = arith.constant 0 : index
    %0 = vector.load %arg1[%c0, %c0_0, %c0_1] : memref<1x8x10xf32, #tpu.memory_space<vmem>>, vector<1x8x10xf32>
    %1 = vector.shape_cast %0 : vector<1x8x10xf32> to vector<8x10xf32>
    %2 = vector.extract_strided_slice %1 {offsets = [0, 0], sizes = [8, 8], strides = [1, 1]} : vector<8x10xf32> to vector<8x8xf32>
    %3 = vector.extract_strided_slice %1 {offsets = [0, 1], sizes = [8, 8], strides = [1, 1]} : vector<8x10xf32> to vector<8x8xf32>
    %4 = vector.extract_strided_slice %1 {offsets = [0, 2], sizes = [8, 8], strides = [1, 1]} : vector<8x10xf32> to vector<8x8xf32>
    %5 = tpu.concatenate %2, %3, %4 in 0 : vector<8x8xf32>, vector<8x8xf32>, vector<8x8xf32> -> vector<24x8xf32>
    %c0_2 = arith.constant 0 : index
    %c0_3 = arith.constant 0 : index
    %6 = vector.load %arg2[%c0_2, %c0_3] : memref<16x24xf32, #tpu.memory_space<vmem>>, vector<16x24xf32>
    %cst = arith.constant dense<0.000000e+00> : vector<16x8xf32>
    %7 = tpu.matmul %6, %5, %cst {dimension_numbers = #tpu.dot_dimension_numbers<[1], [0], [0], [1], [0, 0, 1, 1], [], []>} : vector<16x24xf32>, vector<24x8xf32>, vector<16x8xf32> -> vector<16x8xf32>
    %c0_4 = arith.constant 0 : index
    %c0_5 = arith.constant 0 : index
    %8 = vector.load %arg3[%c0_4, %c0_5] : memref<16x1xf32, #tpu.memory_space<vmem>>, vector<16x1xf32>
    %9 = vector.broadcast %8 : vector<16x1xf32> to vector<16x8xf32>
    %10 = arith.addf %7, %9 : vector<16x8xf32>
    %cst_6 = arith.constant 0.000000e+00 : f32
    %11 = vector.broadcast %cst_6 : f32 to vector<16x8xf32>
    %12 = arith.maximumf %10, %11 : vector<16x8xf32>
    %cst_7 = arith.constant 0.000000e+00 : f32
    %13 = vector.broadcast %cst_7 : f32 to vector<16x1xf32>
    %14 = tpu.concatenate %13, %12, %13 in 1 : vector<16x1xf32>, vector<16x8xf32>, vector<16x1xf32> -> vector<16x10xf32>
    %15 = vector.extract_strided_slice %14 {offsets = [0, 0], sizes = [16, 8], strides = [1, 1]} : vector<16x10xf32> to vector<16x8xf32>
    %16 = vector.extract_strided_slice %14 {offsets = [0, 1], sizes = [16, 8], strides = [1, 1]} : vector<16x10xf32> to vector<16x8xf32>
    %17 = vector.extract_strided_slice %14 {offsets = [0, 2], sizes = [16, 8], strides = [1, 1]} : vector<16x10xf32> to vector<16x8xf32>
    %18 = tpu.concatenate %15, %16, %17 in 0 : vector<16x8xf32>, vector<16x8xf32>, vector<16x8xf32> -> vector<48x8xf32>
    %c0_8 = arith.constant 0 : index
    %c0_9 = arith.constant 0 : index
    %19 = vector.load %arg4[%c0_8, %c0_9] : memref<16x48xf32, #tpu.memory_space<vmem>>, vector<16x48xf32>
    %cst_10 = arith.constant dense<0.000000e+00> : vector<16x8xf32>
    %20 = tpu.matmul %19, %18, %cst_10 {dimension_numbers = #tpu.dot_dimension_numbers<[1], [0], [0], [1], [0, 0, 1, 1], [], []>} : vector<16x48xf32>, vector<48x8xf32>, vector<16x8xf32> -> vector<16x8xf32>
    %c0_11 = arith.constant 0 : index
    %c0_12 = arith.constant 0 : index
    %21 = vector.load %arg5[%c0_11, %c0_12] : memref<16x1xf32, #tpu.memory_space<vmem>>, vector<16x1xf32>
    %22 = vector.broadcast %21 : vector<16x1xf32> to vector<16x8xf32>
    %23 = arith.addf %20, %22 : vector<16x8xf32>
    %cst_13 = arith.constant 0.000000e+00 : f32
    %24 = vector.broadcast %cst_13 : f32 to vector<16x8xf32>
    %25 = arith.maximumf %23, %24 : vector<16x8xf32>
    %26 = vector.shape_cast %25 : vector<16x8xf32> to vector<16x4x2xf32>
    %cst_14 = arith.constant dense<0xFF800000> : vector<16x4xf32>
    %27 = vector.multi_reduction <maximumf>, %26, %cst_14 [2] : vector<16x4x2xf32> to vector<16x4xf32>
    %28 = tpu.transpose %27, [1, 0] : vector<16x4xf32> -> vector<4x16xf32>
    %c0_15 = arith.constant 0 : index
    %c0_16 = arith.constant 0 : index
    %c0_17 = arith.constant 0 : index
    %29 = vector.load %arg6[%c0_15, %c0_16, %c0_17] : memref<1x4x16xf32, #tpu.memory_space<vmem>>, vector<1x4x16xf32>
    %30 = vector.shape_cast %29 : vector<1x4x16xf32> to vector<4x16xf32>
    %31 = vector.shape_cast %28 : vector<4x16xf32> to vector<1x4x16xf32>
    tpu.vector_store %arg6[%c0_15, %c0_16, %c0_17], %31 {strides = array<i32>} : memref<1x4x16xf32, #tpu.memory_space<vmem>>, vector<1x4x16xf32>,
    return
  }
  func.func @transform_0(%arg0: i32) -> (i32, i32, i32) {
    %c0_i32 = arith.constant 0 : i32
    %c0_i32_0 = arith.constant 0 : i32
    %c0_i32_1 = arith.constant 0 : i32
    return %arg0, %c0_i32, %c0_i32_0 : i32, i32, i32
  }
  func.func @transform_1(%arg0: i32) -> (i32, i32) {
    %c0_i32 = arith.constant 0 : i32
    %c0_i32_0 = arith.constant 0 : i32
    %c0_i32_1 = arith.constant 0 : i32
    return %c0_i32, %c0_i32_0 : i32, i32
  }
  func.func @transform_2(%arg0: i32) -> (i32, i32) {
    %c0_i32 = arith.constant 0 : i32
    %c0_i32_0 = arith.constant 0 : i32
    %c0_i32_1 = arith.constant 0 : i32
    return %c0_i32, %c0_i32_0 : i32, i32
  }
  func.func @transform_3(%arg0: i32) -> (i32, i32) {
    %c0_i32 = arith.constant 0 : i32
    %c0_i32_0 = arith.constant 0 : i32
    %c0_i32_1 = arith.constant 0 : i32
    return %c0_i32, %c0_i32_0 : i32, i32
  }
  func.func @transform_4(%arg0: i32) -> (i32, i32) {
    %c0_i32 = arith.constant 0 : i32
    %c0_i32_0 = arith.constant 0 : i32
    %c0_i32_1 = arith.constant 0 : i32
    return %c0_i32, %c0_i32_0 : i32, i32
  }
  func.func @transform_5(%arg0: i32) -> (i32, i32, i32) {
    %c0_i32 = arith.constant 0 : i32
    %c0_i32_0 = arith.constant 0 : i32
    %c0_i32_1 = arith.constant 0 : i32
    return %arg0, %c0_i32, %c0_i32_0 : i32, i32, i32
  }
}

module attributes {stable_mosaic.version = 11 : i64} {
  func.func @_lstm_kernel(%arg0: i32, %arg1: i32, %arg2: memref<2x4x128xf32, #tpu.memory_space<vmem>>, %arg3: memref<32x128xf32, #tpu.memory_space<vmem>>, %arg4: memref<2x4x32xf32, #tpu.memory_space<vmem>>, %arg5: memref<2x32xf32, #tpu.memory_space<vmem>>, %arg6: memref<2x32xf32, #tpu.memory_space<vmem>>) attributes {dimension_semantics = [#tpu.dimension_semantics<parallel>, #tpu.dimension_semantics<arbitrary>], iteration_bounds = array<i64: 1, 1>, scalar_prefetch = 0 : i64, scratch_operands = 2 : i64, tpu.core_type = #tpu.core_type<tc>, window_params = [{transform_indices = @transform_0, window_bounds = array<i64: 2, 4, 128>}, {pipeline_mode = #tpu.pipeline_mode<synchronous>, transform_indices = @transform_1, window_bounds = array<i64: 32, 128>}, {transform_indices = @transform_2, window_bounds = array<i64: 2, 4, 32>}]} {
    %c0_i32 = arith.constant 0 : i32
    %0 = arith.cmpi eq, %arg1, %c0_i32 : i32
    %1 = arith.extui %0 : i1 to i32
    %c0_i32_0 = arith.constant 0 : i32
    %2 = arith.cmpi ne, %1, %c0_i32_0 : i32
    scf.if %2 {
      %cst_46 = arith.constant 0.000000e+00 : f32
      %136 = vector.broadcast %cst_46 : f32 to vector<2x32xf32>
      %c0_47 = arith.constant 0 : index
      %c0_48 = arith.constant 0 : index
      %137 = vector.load %arg5[%c0_47, %c0_48] : memref<2x32xf32, #tpu.memory_space<vmem>>, vector<2x32xf32>
      tpu.vector_store %arg5[%c0_47, %c0_48], %136 {strides = array<i32>} : memref<2x32xf32, #tpu.memory_space<vmem>>, vector<2x32xf32>,
      %cst_49 = arith.constant 0.000000e+00 : f32
      %138 = vector.broadcast %cst_49 : f32 to vector<2x32xf32>
      %c0_50 = arith.constant 0 : index
      %c0_51 = arith.constant 0 : index
      %139 = vector.load %arg6[%c0_50, %c0_51] : memref<2x32xf32, #tpu.memory_space<vmem>>, vector<2x32xf32>
      tpu.vector_store %arg6[%c0_50, %c0_51], %138 {strides = array<i32>} : memref<2x32xf32, #tpu.memory_space<vmem>>, vector<2x32xf32>,
    } else {
    }
    %c0 = arith.constant 0 : index
    %c0_1 = arith.constant 0 : index
    %3 = vector.load %arg5[%c0, %c0_1] : memref<2x32xf32, #tpu.memory_space<vmem>>, vector<2x32xf32>
    %c0_2 = arith.constant 0 : index
    %c0_3 = arith.constant 0 : index
    %4 = vector.load %arg6[%c0_2, %c0_3] : memref<2x32xf32, #tpu.memory_space<vmem>>, vector<2x32xf32>
    %c0_4 = arith.constant 0 : index
    %c0_5 = arith.constant 0 : index
    %5 = vector.load %arg3[%c0_4, %c0_5] : memref<32x128xf32, #tpu.memory_space<vmem>>, vector<32x128xf32>
    %c0_6 = arith.constant 0 : index
    %c0_7 = arith.constant 0 : index
    %c0_8 = arith.constant 0 : index
    %6 = vector.load %arg2[%c0_6, %c0_7, %c0_8] : memref<2x4x128xf32, #tpu.memory_space<vmem>>, vector<2x1x128xf32>
    %7 = vector.shape_cast %6 : vector<2x1x128xf32> to vector<2x128xf32>
    %cst = arith.constant dense<0.000000e+00> : vector<2x128xf32>
    %8 = tpu.matmul %3, %5, %cst {dimension_numbers = #tpu.dot_dimension_numbers<[1], [0], [0], [1], [0, 0, 1, 1], [], []>} : vector<2x32xf32>, vector<32x128xf32>, vector<2x128xf32> -> vector<2x128xf32>
    %9 = arith.addf %7, %8 : vector<2x128xf32>
    %10 = vector.extract_strided_slice %9 {offsets = [0, 0], sizes = [2, 32], strides = [1, 1]} : vector<2x128xf32> to vector<2x32xf32>
    %11 = arith.negf %10 : vector<2x32xf32>
    %12 = math.exp %11 : vector<2x32xf32>
    %cst_9 = arith.constant 1.000000e+00 : f32
    %13 = vector.broadcast %cst_9 : f32 to vector<2x32xf32>
    %14 = arith.addf %13, %12 : vector<2x32xf32>
    %15 = arith.divf %13, %14 : vector<2x32xf32>
    %16 = vector.extract_strided_slice %9 {offsets = [0, 32], sizes = [2, 32], strides = [1, 1]} : vector<2x128xf32> to vector<2x32xf32>
    %17 = arith.negf %16 : vector<2x32xf32>
    %18 = math.exp %17 : vector<2x32xf32>
    %cst_10 = arith.constant 1.000000e+00 : f32
    %19 = vector.broadcast %cst_10 : f32 to vector<2x32xf32>
    %20 = arith.addf %19, %18 : vector<2x32xf32>
    %21 = arith.divf %19, %20 : vector<2x32xf32>
    %22 = vector.extract_strided_slice %9 {offsets = [0, 64], sizes = [2, 32], strides = [1, 1]} : vector<2x128xf32> to vector<2x32xf32>
    %23 = math.tanh %22 : vector<2x32xf32>
    %24 = vector.extract_strided_slice %9 {offsets = [0, 96], sizes = [2, 32], strides = [1, 1]} : vector<2x128xf32> to vector<2x32xf32>
    %25 = arith.negf %24 : vector<2x32xf32>
    %26 = math.exp %25 : vector<2x32xf32>
    %cst_11 = arith.constant 1.000000e+00 : f32
    %27 = vector.broadcast %cst_11 : f32 to vector<2x32xf32>
    %28 = arith.addf %27, %26 : vector<2x32xf32>
    %29 = arith.divf %27, %28 : vector<2x32xf32>
    %30 = arith.mulf %21, %4 : vector<2x32xf32>
    %31 = arith.mulf %15, %23 : vector<2x32xf32>
    %32 = arith.addf %30, %31 : vector<2x32xf32>
    %33 = math.tanh %32 : vector<2x32xf32>
    %34 = arith.mulf %29, %33 : vector<2x32xf32>
    %c0_12 = arith.constant 0 : index
    %c0_13 = arith.constant 0 : index
    %c0_14 = arith.constant 0 : index
    %35 = vector.load %arg4[%c0_12, %c0_13, %c0_14] : memref<2x4x32xf32, #tpu.memory_space<vmem>>, vector<2x1x32xf32>
    %36 = vector.shape_cast %35 : vector<2x1x32xf32> to vector<2x32xf32>
    %37 = vector.shape_cast %34 : vector<2x32xf32> to vector<2x1x32xf32>
    tpu.vector_store %arg4[%c0_12, %c0_13, %c0_14], %37 {strides = array<i32>} : memref<2x4x32xf32, #tpu.memory_space<vmem>>, vector<2x1x32xf32>,
    %c0_15 = arith.constant 0 : index
    %c1 = arith.constant 1 : index
    %c0_16 = arith.constant 0 : index
    %38 = vector.load %arg2[%c0_15, %c1, %c0_16] : memref<2x4x128xf32, #tpu.memory_space<vmem>>, vector<2x1x128xf32>
    %39 = vector.shape_cast %38 : vector<2x1x128xf32> to vector<2x128xf32>
    %cst_17 = arith.constant dense<0.000000e+00> : vector<2x128xf32>
    %40 = tpu.matmul %34, %5, %cst_17 {dimension_numbers = #tpu.dot_dimension_numbers<[1], [0], [0], [1], [0, 0, 1, 1], [], []>} : vector<2x32xf32>, vector<32x128xf32>, vector<2x128xf32> -> vector<2x128xf32>
    %41 = arith.addf %39, %40 : vector<2x128xf32>
    %42 = vector.extract_strided_slice %41 {offsets = [0, 0], sizes = [2, 32], strides = [1, 1]} : vector<2x128xf32> to vector<2x32xf32>
    %43 = arith.negf %42 : vector<2x32xf32>
    %44 = math.exp %43 : vector<2x32xf32>
    %cst_18 = arith.constant 1.000000e+00 : f32
    %45 = vector.broadcast %cst_18 : f32 to vector<2x32xf32>
    %46 = arith.addf %45, %44 : vector<2x32xf32>
    %47 = arith.divf %45, %46 : vector<2x32xf32>
    %48 = vector.extract_strided_slice %41 {offsets = [0, 32], sizes = [2, 32], strides = [1, 1]} : vector<2x128xf32> to vector<2x32xf32>
    %49 = arith.negf %48 : vector<2x32xf32>
    %50 = math.exp %49 : vector<2x32xf32>
    %cst_19 = arith.constant 1.000000e+00 : f32
    %51 = vector.broadcast %cst_19 : f32 to vector<2x32xf32>
    %52 = arith.addf %51, %50 : vector<2x32xf32>
    %53 = arith.divf %51, %52 : vector<2x32xf32>
    %54 = vector.extract_strided_slice %41 {offsets = [0, 64], sizes = [2, 32], strides = [1, 1]} : vector<2x128xf32> to vector<2x32xf32>
    %55 = math.tanh %54 : vector<2x32xf32>
    %56 = vector.extract_strided_slice %41 {offsets = [0, 96], sizes = [2, 32], strides = [1, 1]} : vector<2x128xf32> to vector<2x32xf32>
    %57 = arith.negf %56 : vector<2x32xf32>
    %58 = math.exp %57 : vector<2x32xf32>
    %cst_20 = arith.constant 1.000000e+00 : f32
    %59 = vector.broadcast %cst_20 : f32 to vector<2x32xf32>
    %60 = arith.addf %59, %58 : vector<2x32xf32>
    %61 = arith.divf %59, %60 : vector<2x32xf32>
    %62 = arith.mulf %53, %32 : vector<2x32xf32>
    %63 = arith.mulf %47, %55 : vector<2x32xf32>
    %64 = arith.addf %62, %63 : vector<2x32xf32>
    %65 = math.tanh %64 : vector<2x32xf32>
    %66 = arith.mulf %61, %65 : vector<2x32xf32>
    %c0_21 = arith.constant 0 : index
    %c1_22 = arith.constant 1 : index
    %c0_23 = arith.constant 0 : index
    %67 = vector.load %arg4[%c0_21, %c1_22, %c0_23] : memref<2x4x32xf32, #tpu.memory_space<vmem>>, vector<2x1x32xf32>
    %68 = vector.shape_cast %67 : vector<2x1x32xf32> to vector<2x32xf32>
    %69 = vector.shape_cast %66 : vector<2x32xf32> to vector<2x1x32xf32>
    tpu.vector_store %arg4[%c0_21, %c1_22, %c0_23], %69 {strides = array<i32>} : memref<2x4x32xf32, #tpu.memory_space<vmem>>, vector<2x1x32xf32>,
    %c0_24 = arith.constant 0 : index
    %c2 = arith.constant 2 : index
    %c0_25 = arith.constant 0 : index
    %70 = vector.load %arg2[%c0_24, %c2, %c0_25] : memref<2x4x128xf32, #tpu.memory_space<vmem>>, vector<2x1x128xf32>
    %71 = vector.shape_cast %70 : vector<2x1x128xf32> to vector<2x128xf32>
    %cst_26 = arith.constant dense<0.000000e+00> : vector<2x128xf32>
    %72 = tpu.matmul %66, %5, %cst_26 {dimension_numbers = #tpu.dot_dimension_numbers<[1], [0], [0], [1], [0, 0, 1, 1], [], []>} : vector<2x32xf32>, vector<32x128xf32>, vector<2x128xf32> -> vector<2x128xf32>
    %73 = arith.addf %71, %72 : vector<2x128xf32>
    %74 = vector.extract_strided_slice %73 {offsets = [0, 0], sizes = [2, 32], strides = [1, 1]} : vector<2x128xf32> to vector<2x32xf32>
    %75 = arith.negf %74 : vector<2x32xf32>
    %76 = math.exp %75 : vector<2x32xf32>
    %cst_27 = arith.constant 1.000000e+00 : f32
    %77 = vector.broadcast %cst_27 : f32 to vector<2x32xf32>
    %78 = arith.addf %77, %76 : vector<2x32xf32>
    %79 = arith.divf %77, %78 : vector<2x32xf32>
    %80 = vector.extract_strided_slice %73 {offsets = [0, 32], sizes = [2, 32], strides = [1, 1]} : vector<2x128xf32> to vector<2x32xf32>
    %81 = arith.negf %80 : vector<2x32xf32>
    %82 = math.exp %81 : vector<2x32xf32>
    %cst_28 = arith.constant 1.000000e+00 : f32
    %83 = vector.broadcast %cst_28 : f32 to vector<2x32xf32>
    %84 = arith.addf %83, %82 : vector<2x32xf32>
    %85 = arith.divf %83, %84 : vector<2x32xf32>
    %86 = vector.extract_strided_slice %73 {offsets = [0, 64], sizes = [2, 32], strides = [1, 1]} : vector<2x128xf32> to vector<2x32xf32>
    %87 = math.tanh %86 : vector<2x32xf32>
    %88 = vector.extract_strided_slice %73 {offsets = [0, 96], sizes = [2, 32], strides = [1, 1]} : vector<2x128xf32> to vector<2x32xf32>
    %89 = arith.negf %88 : vector<2x32xf32>
    %90 = math.exp %89 : vector<2x32xf32>
    %cst_29 = arith.constant 1.000000e+00 : f32
    %91 = vector.broadcast %cst_29 : f32 to vector<2x32xf32>
    %92 = arith.addf %91, %90 : vector<2x32xf32>
    %93 = arith.divf %91, %92 : vector<2x32xf32>
    %94 = arith.mulf %85, %64 : vector<2x32xf32>
    %95 = arith.mulf %79, %87 : vector<2x32xf32>
    %96 = arith.addf %94, %95 : vector<2x32xf32>
    %97 = math.tanh %96 : vector<2x32xf32>
    %98 = arith.mulf %93, %97 : vector<2x32xf32>
    %c0_30 = arith.constant 0 : index
    %c2_31 = arith.constant 2 : index
    %c0_32 = arith.constant 0 : index
    %99 = vector.load %arg4[%c0_30, %c2_31, %c0_32] : memref<2x4x32xf32, #tpu.memory_space<vmem>>, vector<2x1x32xf32>
    %100 = vector.shape_cast %99 : vector<2x1x32xf32> to vector<2x32xf32>
    %101 = vector.shape_cast %98 : vector<2x32xf32> to vector<2x1x32xf32>
    tpu.vector_store %arg4[%c0_30, %c2_31, %c0_32], %101 {strides = array<i32>} : memref<2x4x32xf32, #tpu.memory_space<vmem>>, vector<2x1x32xf32>,
    %c0_33 = arith.constant 0 : index
    %c3 = arith.constant 3 : index
    %c0_34 = arith.constant 0 : index
    %102 = vector.load %arg2[%c0_33, %c3, %c0_34] : memref<2x4x128xf32, #tpu.memory_space<vmem>>, vector<2x1x128xf32>
    %103 = vector.shape_cast %102 : vector<2x1x128xf32> to vector<2x128xf32>
    %cst_35 = arith.constant dense<0.000000e+00> : vector<2x128xf32>
    %104 = tpu.matmul %98, %5, %cst_35 {dimension_numbers = #tpu.dot_dimension_numbers<[1], [0], [0], [1], [0, 0, 1, 1], [], []>} : vector<2x32xf32>, vector<32x128xf32>, vector<2x128xf32> -> vector<2x128xf32>
    %105 = arith.addf %103, %104 : vector<2x128xf32>
    %106 = vector.extract_strided_slice %105 {offsets = [0, 0], sizes = [2, 32], strides = [1, 1]} : vector<2x128xf32> to vector<2x32xf32>
    %107 = arith.negf %106 : vector<2x32xf32>
    %108 = math.exp %107 : vector<2x32xf32>
    %cst_36 = arith.constant 1.000000e+00 : f32
    %109 = vector.broadcast %cst_36 : f32 to vector<2x32xf32>
    %110 = arith.addf %109, %108 : vector<2x32xf32>
    %111 = arith.divf %109, %110 : vector<2x32xf32>
    %112 = vector.extract_strided_slice %105 {offsets = [0, 32], sizes = [2, 32], strides = [1, 1]} : vector<2x128xf32> to vector<2x32xf32>
    %113 = arith.negf %112 : vector<2x32xf32>
    %114 = math.exp %113 : vector<2x32xf32>
    %cst_37 = arith.constant 1.000000e+00 : f32
    %115 = vector.broadcast %cst_37 : f32 to vector<2x32xf32>
    %116 = arith.addf %115, %114 : vector<2x32xf32>
    %117 = arith.divf %115, %116 : vector<2x32xf32>
    %118 = vector.extract_strided_slice %105 {offsets = [0, 64], sizes = [2, 32], strides = [1, 1]} : vector<2x128xf32> to vector<2x32xf32>
    %119 = math.tanh %118 : vector<2x32xf32>
    %120 = vector.extract_strided_slice %105 {offsets = [0, 96], sizes = [2, 32], strides = [1, 1]} : vector<2x128xf32> to vector<2x32xf32>
    %121 = arith.negf %120 : vector<2x32xf32>
    %122 = math.exp %121 : vector<2x32xf32>
    %cst_38 = arith.constant 1.000000e+00 : f32
    %123 = vector.broadcast %cst_38 : f32 to vector<2x32xf32>
    %124 = arith.addf %123, %122 : vector<2x32xf32>
    %125 = arith.divf %123, %124 : vector<2x32xf32>
    %126 = arith.mulf %117, %96 : vector<2x32xf32>
    %127 = arith.mulf %111, %119 : vector<2x32xf32>
    %128 = arith.addf %126, %127 : vector<2x32xf32>
    %129 = math.tanh %128 : vector<2x32xf32>
    %130 = arith.mulf %125, %129 : vector<2x32xf32>
    %c0_39 = arith.constant 0 : index
    %c3_40 = arith.constant 3 : index
    %c0_41 = arith.constant 0 : index
    %131 = vector.load %arg4[%c0_39, %c3_40, %c0_41] : memref<2x4x32xf32, #tpu.memory_space<vmem>>, vector<2x1x32xf32>
    %132 = vector.shape_cast %131 : vector<2x1x32xf32> to vector<2x32xf32>
    %133 = vector.shape_cast %130 : vector<2x32xf32> to vector<2x1x32xf32>
    tpu.vector_store %arg4[%c0_39, %c3_40, %c0_41], %133 {strides = array<i32>} : memref<2x4x32xf32, #tpu.memory_space<vmem>>, vector<2x1x32xf32>,
    %c0_42 = arith.constant 0 : index
    %c0_43 = arith.constant 0 : index
    %134 = vector.load %arg5[%c0_42, %c0_43] : memref<2x32xf32, #tpu.memory_space<vmem>>, vector<2x32xf32>
    tpu.vector_store %arg5[%c0_42, %c0_43], %130 {strides = array<i32>} : memref<2x32xf32, #tpu.memory_space<vmem>>, vector<2x32xf32>,
    %c0_44 = arith.constant 0 : index
    %c0_45 = arith.constant 0 : index
    %135 = vector.load %arg6[%c0_44, %c0_45] : memref<2x32xf32, #tpu.memory_space<vmem>>, vector<2x32xf32>
    tpu.vector_store %arg6[%c0_44, %c0_45], %128 {strides = array<i32>} : memref<2x32xf32, #tpu.memory_space<vmem>>, vector<2x32xf32>,
    return
  }
  func.func @transform_0(%arg0: i32, %arg1: i32) -> (i32, i32, i32) {
    %c0_i32 = arith.constant 0 : i32
    %c0_i32_0 = arith.constant 0 : i32
    return %arg0, %arg1, %c0_i32 : i32, i32, i32
  }
  func.func @transform_1(%arg0: i32, %arg1: i32) -> (i32, i32) {
    %c0_i32 = arith.constant 0 : i32
    %c0_i32_0 = arith.constant 0 : i32
    %c0_i32_1 = arith.constant 0 : i32
    return %c0_i32, %c0_i32_0 : i32, i32
  }
  func.func @transform_2(%arg0: i32, %arg1: i32) -> (i32, i32, i32) {
    %c0_i32 = arith.constant 0 : i32
    %c0_i32_0 = arith.constant 0 : i32
    return %arg0, %arg1, %c0_i32 : i32, i32, i32
  }
}

module attributes {stable_mosaic.version = 11 : i64} {
  func.func @_matmul_bias_kernel(%arg0: memref<8x32xf32, #tpu.memory_space<vmem>>, %arg1: memref<32x128xf32, #tpu.memory_space<vmem>>, %arg2: memref<1x128xf32, #tpu.memory_space<vmem>>, %arg3: memref<8x128xf32, #tpu.memory_space<vmem>>) attributes {dimension_semantics = [], scalar_prefetch = 0 : i64, scratch_operands = 0 : i64, tpu.core_type = #tpu.core_type<tc>} {
    %c0 = arith.constant 0 : index
    %c0_0 = arith.constant 0 : index
    %0 = vector.load %arg0[%c0, %c0_0] : memref<8x32xf32, #tpu.memory_space<vmem>>, vector<8x32xf32>
    %c0_1 = arith.constant 0 : index
    %c0_2 = arith.constant 0 : index
    %1 = vector.load %arg1[%c0_1, %c0_2] : memref<32x128xf32, #tpu.memory_space<vmem>>, vector<32x128xf32>
    %cst = arith.constant dense<0.000000e+00> : vector<8x128xf32>
    %2 = tpu.matmul %0, %1, %cst {dimension_numbers = #tpu.dot_dimension_numbers<[1], [0], [0], [1], [0, 0, 1, 1], [], []>} : vector<8x32xf32>, vector<32x128xf32>, vector<8x128xf32> -> vector<8x128xf32>
    %c0_3 = arith.constant 0 : index
    %c0_4 = arith.constant 0 : index
    %3 = vector.load %arg2[%c0_3, %c0_4] : memref<1x128xf32, #tpu.memory_space<vmem>>, vector<1x128xf32>
    %4 = vector.broadcast %3 : vector<1x128xf32> to vector<8x128xf32>
    %5 = arith.addf %2, %4 : vector<8x128xf32>
    %c0_5 = arith.constant 0 : index
    %c0_6 = arith.constant 0 : index
    %6 = vector.load %arg3[%c0_5, %c0_6] : memref<8x128xf32, #tpu.memory_space<vmem>>, vector<8x128xf32>
    tpu.vector_store %arg3[%c0_5, %c0_6], %5 {strides = array<i32>} : memref<8x128xf32, #tpu.memory_space<vmem>>, vector<8x128xf32>,
    return
  }
}

module attributes {stable_mosaic.version = 11 : i64} {
  func.func @_lstm_kernel(%arg0: i32, %arg1: i32, %arg2: memref<2x4x128xf32, #tpu.memory_space<vmem>>, %arg3: memref<32x128xf32, #tpu.memory_space<vmem>>, %arg4: memref<32x5xf32, #tpu.memory_space<vmem>>, %arg5: memref<1x5xf32, #tpu.memory_space<vmem>>, %arg6: memref<2x5xf32, #tpu.memory_space<vmem>>, %arg7: memref<2x32xf32, #tpu.memory_space<vmem>>, %arg8: memref<2x32xf32, #tpu.memory_space<vmem>>) attributes {dimension_semantics = [#tpu.dimension_semantics<parallel>, #tpu.dimension_semantics<arbitrary>], iteration_bounds = array<i64: 1, 1>, scalar_prefetch = 0 : i64, scratch_operands = 2 : i64, tpu.core_type = #tpu.core_type<tc>, window_params = [{transform_indices = @transform_0, window_bounds = array<i64: 2, 4, 128>}, {pipeline_mode = #tpu.pipeline_mode<synchronous>, transform_indices = @transform_1, window_bounds = array<i64: 32, 128>}, {pipeline_mode = #tpu.pipeline_mode<synchronous>, transform_indices = @transform_2, window_bounds = array<i64: 32, 5>}, {pipeline_mode = #tpu.pipeline_mode<synchronous>, transform_indices = @transform_3, window_bounds = array<i64: 1, 5>}, {transform_indices = @transform_4, window_bounds = array<i64: 2, 5>}]} {
    %c0_i32 = arith.constant 0 : i32
    %0 = arith.cmpi eq, %arg1, %c0_i32 : i32
    %1 = arith.extui %0 : i1 to i32
    %c0_i32_0 = arith.constant 0 : i32
    %2 = arith.cmpi ne, %1, %c0_i32_0 : i32
    scf.if %2 {
      %cst_36 = arith.constant 0.000000e+00 : f32
      %127 = vector.broadcast %cst_36 : f32 to vector<2x32xf32>
      %c0_37 = arith.constant 0 : index
      %c0_38 = arith.constant 0 : index
      %128 = vector.load %arg7[%c0_37, %c0_38] : memref<2x32xf32, #tpu.memory_space<vmem>>, vector<2x32xf32>
      tpu.vector_store %arg7[%c0_37, %c0_38], %127 {strides = array<i32>} : memref<2x32xf32, #tpu.memory_space<vmem>>, vector<2x32xf32>,
      %cst_39 = arith.constant 0.000000e+00 : f32
      %129 = vector.broadcast %cst_39 : f32 to vector<2x32xf32>
      %c0_40 = arith.constant 0 : index
      %c0_41 = arith.constant 0 : index
      %130 = vector.load %arg8[%c0_40, %c0_41] : memref<2x32xf32, #tpu.memory_space<vmem>>, vector<2x32xf32>
      tpu.vector_store %arg8[%c0_40, %c0_41], %129 {strides = array<i32>} : memref<2x32xf32, #tpu.memory_space<vmem>>, vector<2x32xf32>,
    } else {
    }
    %c0 = arith.constant 0 : index
    %c0_1 = arith.constant 0 : index
    %3 = vector.load %arg7[%c0, %c0_1] : memref<2x32xf32, #tpu.memory_space<vmem>>, vector<2x32xf32>
    %c0_2 = arith.constant 0 : index
    %c0_3 = arith.constant 0 : index
    %4 = vector.load %arg8[%c0_2, %c0_3] : memref<2x32xf32, #tpu.memory_space<vmem>>, vector<2x32xf32>
    %c0_4 = arith.constant 0 : index
    %c0_5 = arith.constant 0 : index
    %5 = vector.load %arg3[%c0_4, %c0_5] : memref<32x128xf32, #tpu.memory_space<vmem>>, vector<32x128xf32>
    %c0_6 = arith.constant 0 : index
    %c0_7 = arith.constant 0 : index
    %c0_8 = arith.constant 0 : index
    %6 = vector.load %arg2[%c0_6, %c0_7, %c0_8] : memref<2x4x128xf32, #tpu.memory_space<vmem>>, vector<2x1x128xf32>
    %7 = vector.shape_cast %6 : vector<2x1x128xf32> to vector<2x128xf32>
    %cst = arith.constant dense<0.000000e+00> : vector<2x128xf32>
    %8 = tpu.matmul %3, %5, %cst {dimension_numbers = #tpu.dot_dimension_numbers<[1], [0], [0], [1], [0, 0, 1, 1], [], []>} : vector<2x32xf32>, vector<32x128xf32>, vector<2x128xf32> -> vector<2x128xf32>
    %9 = arith.addf %7, %8 : vector<2x128xf32>
    %10 = vector.extract_strided_slice %9 {offsets = [0, 0], sizes = [2, 32], strides = [1, 1]} : vector<2x128xf32> to vector<2x32xf32>
    %11 = arith.negf %10 : vector<2x32xf32>
    %12 = math.exp %11 : vector<2x32xf32>
    %cst_9 = arith.constant 1.000000e+00 : f32
    %13 = vector.broadcast %cst_9 : f32 to vector<2x32xf32>
    %14 = arith.addf %13, %12 : vector<2x32xf32>
    %15 = arith.divf %13, %14 : vector<2x32xf32>
    %16 = vector.extract_strided_slice %9 {offsets = [0, 32], sizes = [2, 32], strides = [1, 1]} : vector<2x128xf32> to vector<2x32xf32>
    %17 = arith.negf %16 : vector<2x32xf32>
    %18 = math.exp %17 : vector<2x32xf32>
    %cst_10 = arith.constant 1.000000e+00 : f32
    %19 = vector.broadcast %cst_10 : f32 to vector<2x32xf32>
    %20 = arith.addf %19, %18 : vector<2x32xf32>
    %21 = arith.divf %19, %20 : vector<2x32xf32>
    %22 = vector.extract_strided_slice %9 {offsets = [0, 64], sizes = [2, 32], strides = [1, 1]} : vector<2x128xf32> to vector<2x32xf32>
    %23 = math.tanh %22 : vector<2x32xf32>
    %24 = vector.extract_strided_slice %9 {offsets = [0, 96], sizes = [2, 32], strides = [1, 1]} : vector<2x128xf32> to vector<2x32xf32>
    %25 = arith.negf %24 : vector<2x32xf32>
    %26 = math.exp %25 : vector<2x32xf32>
    %cst_11 = arith.constant 1.000000e+00 : f32
    %27 = vector.broadcast %cst_11 : f32 to vector<2x32xf32>
    %28 = arith.addf %27, %26 : vector<2x32xf32>
    %29 = arith.divf %27, %28 : vector<2x32xf32>
    %30 = arith.mulf %21, %4 : vector<2x32xf32>
    %31 = arith.mulf %15, %23 : vector<2x32xf32>
    %32 = arith.addf %30, %31 : vector<2x32xf32>
    %33 = math.tanh %32 : vector<2x32xf32>
    %34 = arith.mulf %29, %33 : vector<2x32xf32>
    %c0_12 = arith.constant 0 : index
    %c1 = arith.constant 1 : index
    %c0_13 = arith.constant 0 : index
    %35 = vector.load %arg2[%c0_12, %c1, %c0_13] : memref<2x4x128xf32, #tpu.memory_space<vmem>>, vector<2x1x128xf32>
    %36 = vector.shape_cast %35 : vector<2x1x128xf32> to vector<2x128xf32>
    %cst_14 = arith.constant dense<0.000000e+00> : vector<2x128xf32>
    %37 = tpu.matmul %34, %5, %cst_14 {dimension_numbers = #tpu.dot_dimension_numbers<[1], [0], [0], [1], [0, 0, 1, 1], [], []>} : vector<2x32xf32>, vector<32x128xf32>, vector<2x128xf32> -> vector<2x128xf32>
    %38 = arith.addf %36, %37 : vector<2x128xf32>
    %39 = vector.extract_strided_slice %38 {offsets = [0, 0], sizes = [2, 32], strides = [1, 1]} : vector<2x128xf32> to vector<2x32xf32>
    %40 = arith.negf %39 : vector<2x32xf32>
    %41 = math.exp %40 : vector<2x32xf32>
    %cst_15 = arith.constant 1.000000e+00 : f32
    %42 = vector.broadcast %cst_15 : f32 to vector<2x32xf32>
    %43 = arith.addf %42, %41 : vector<2x32xf32>
    %44 = arith.divf %42, %43 : vector<2x32xf32>
    %45 = vector.extract_strided_slice %38 {offsets = [0, 32], sizes = [2, 32], strides = [1, 1]} : vector<2x128xf32> to vector<2x32xf32>
    %46 = arith.negf %45 : vector<2x32xf32>
    %47 = math.exp %46 : vector<2x32xf32>
    %cst_16 = arith.constant 1.000000e+00 : f32
    %48 = vector.broadcast %cst_16 : f32 to vector<2x32xf32>
    %49 = arith.addf %48, %47 : vector<2x32xf32>
    %50 = arith.divf %48, %49 : vector<2x32xf32>
    %51 = vector.extract_strided_slice %38 {offsets = [0, 64], sizes = [2, 32], strides = [1, 1]} : vector<2x128xf32> to vector<2x32xf32>
    %52 = math.tanh %51 : vector<2x32xf32>
    %53 = vector.extract_strided_slice %38 {offsets = [0, 96], sizes = [2, 32], strides = [1, 1]} : vector<2x128xf32> to vector<2x32xf32>
    %54 = arith.negf %53 : vector<2x32xf32>
    %55 = math.exp %54 : vector<2x32xf32>
    %cst_17 = arith.constant 1.000000e+00 : f32
    %56 = vector.broadcast %cst_17 : f32 to vector<2x32xf32>
    %57 = arith.addf %56, %55 : vector<2x32xf32>
    %58 = arith.divf %56, %57 : vector<2x32xf32>
    %59 = arith.mulf %50, %32 : vector<2x32xf32>
    %60 = arith.mulf %44, %52 : vector<2x32xf32>
    %61 = arith.addf %59, %60 : vector<2x32xf32>
    %62 = math.tanh %61 : vector<2x32xf32>
    %63 = arith.mulf %58, %62 : vector<2x32xf32>
    %c0_18 = arith.constant 0 : index
    %c2 = arith.constant 2 : index
    %c0_19 = arith.constant 0 : index
    %64 = vector.load %arg2[%c0_18, %c2, %c0_19] : memref<2x4x128xf32, #tpu.memory_space<vmem>>, vector<2x1x128xf32>
    %65 = vector.shape_cast %64 : vector<2x1x128xf32> to vector<2x128xf32>
    %cst_20 = arith.constant dense<0.000000e+00> : vector<2x128xf32>
    %66 = tpu.matmul %63, %5, %cst_20 {dimension_numbers = #tpu.dot_dimension_numbers<[1], [0], [0], [1], [0, 0, 1, 1], [], []>} : vector<2x32xf32>, vector<32x128xf32>, vector<2x128xf32> -> vector<2x128xf32>
    %67 = arith.addf %65, %66 : vector<2x128xf32>
    %68 = vector.extract_strided_slice %67 {offsets = [0, 0], sizes = [2, 32], strides = [1, 1]} : vector<2x128xf32> to vector<2x32xf32>
    %69 = arith.negf %68 : vector<2x32xf32>
    %70 = math.exp %69 : vector<2x32xf32>
    %cst_21 = arith.constant 1.000000e+00 : f32
    %71 = vector.broadcast %cst_21 : f32 to vector<2x32xf32>
    %72 = arith.addf %71, %70 : vector<2x32xf32>
    %73 = arith.divf %71, %72 : vector<2x32xf32>
    %74 = vector.extract_strided_slice %67 {offsets = [0, 32], sizes = [2, 32], strides = [1, 1]} : vector<2x128xf32> to vector<2x32xf32>
    %75 = arith.negf %74 : vector<2x32xf32>
    %76 = math.exp %75 : vector<2x32xf32>
    %cst_22 = arith.constant 1.000000e+00 : f32
    %77 = vector.broadcast %cst_22 : f32 to vector<2x32xf32>
    %78 = arith.addf %77, %76 : vector<2x32xf32>
    %79 = arith.divf %77, %78 : vector<2x32xf32>
    %80 = vector.extract_strided_slice %67 {offsets = [0, 64], sizes = [2, 32], strides = [1, 1]} : vector<2x128xf32> to vector<2x32xf32>
    %81 = math.tanh %80 : vector<2x32xf32>
    %82 = vector.extract_strided_slice %67 {offsets = [0, 96], sizes = [2, 32], strides = [1, 1]} : vector<2x128xf32> to vector<2x32xf32>
    %83 = arith.negf %82 : vector<2x32xf32>
    %84 = math.exp %83 : vector<2x32xf32>
    %cst_23 = arith.constant 1.000000e+00 : f32
    %85 = vector.broadcast %cst_23 : f32 to vector<2x32xf32>
    %86 = arith.addf %85, %84 : vector<2x32xf32>
    %87 = arith.divf %85, %86 : vector<2x32xf32>
    %88 = arith.mulf %79, %61 : vector<2x32xf32>
    %89 = arith.mulf %73, %81 : vector<2x32xf32>
    %90 = arith.addf %88, %89 : vector<2x32xf32>
    %91 = math.tanh %90 : vector<2x32xf32>
    %92 = arith.mulf %87, %91 : vector<2x32xf32>
    %c0_24 = arith.constant 0 : index
    %c3 = arith.constant 3 : index
    %c0_25 = arith.constant 0 : index
    %93 = vector.load %arg2[%c0_24, %c3, %c0_25] : memref<2x4x128xf32, #tpu.memory_space<vmem>>, vector<2x1x128xf32>
    %94 = vector.shape_cast %93 : vector<2x1x128xf32> to vector<2x128xf32>
    %cst_26 = arith.constant dense<0.000000e+00> : vector<2x128xf32>
    %95 = tpu.matmul %92, %5, %cst_26 {dimension_numbers = #tpu.dot_dimension_numbers<[1], [0], [0], [1], [0, 0, 1, 1], [], []>} : vector<2x32xf32>, vector<32x128xf32>, vector<2x128xf32> -> vector<2x128xf32>
    %96 = arith.addf %94, %95 : vector<2x128xf32>
    %97 = vector.extract_strided_slice %96 {offsets = [0, 0], sizes = [2, 32], strides = [1, 1]} : vector<2x128xf32> to vector<2x32xf32>
    %98 = arith.negf %97 : vector<2x32xf32>
    %99 = math.exp %98 : vector<2x32xf32>
    %cst_27 = arith.constant 1.000000e+00 : f32
    %100 = vector.broadcast %cst_27 : f32 to vector<2x32xf32>
    %101 = arith.addf %100, %99 : vector<2x32xf32>
    %102 = arith.divf %100, %101 : vector<2x32xf32>
    %103 = vector.extract_strided_slice %96 {offsets = [0, 32], sizes = [2, 32], strides = [1, 1]} : vector<2x128xf32> to vector<2x32xf32>
    %104 = arith.negf %103 : vector<2x32xf32>
    %105 = math.exp %104 : vector<2x32xf32>
    %cst_28 = arith.constant 1.000000e+00 : f32
    %106 = vector.broadcast %cst_28 : f32 to vector<2x32xf32>
    %107 = arith.addf %106, %105 : vector<2x32xf32>
    %108 = arith.divf %106, %107 : vector<2x32xf32>
    %109 = vector.extract_strided_slice %96 {offsets = [0, 64], sizes = [2, 32], strides = [1, 1]} : vector<2x128xf32> to vector<2x32xf32>
    %110 = math.tanh %109 : vector<2x32xf32>
    %111 = vector.extract_strided_slice %96 {offsets = [0, 96], sizes = [2, 32], strides = [1, 1]} : vector<2x128xf32> to vector<2x32xf32>
    %112 = arith.negf %111 : vector<2x32xf32>
    %113 = math.exp %112 : vector<2x32xf32>
    %cst_29 = arith.constant 1.000000e+00 : f32
    %114 = vector.broadcast %cst_29 : f32 to vector<2x32xf32>
    %115 = arith.addf %114, %113 : vector<2x32xf32>
    %116 = arith.divf %114, %115 : vector<2x32xf32>
    %117 = arith.mulf %108, %90 : vector<2x32xf32>
    %118 = arith.mulf %102, %110 : vector<2x32xf32>
    %119 = arith.addf %117, %118 : vector<2x32xf32>
    %120 = math.tanh %119 : vector<2x32xf32>
    %121 = arith.mulf %116, %120 : vector<2x32xf32>
    %c0_30 = arith.constant 0 : index
    %c0_31 = arith.constant 0 : index
    %122 = vector.load %arg7[%c0_30, %c0_31] : memref<2x32xf32, #tpu.memory_space<vmem>>, vector<2x32xf32>
    tpu.vector_store %arg7[%c0_30, %c0_31], %121 {strides = array<i32>} : memref<2x32xf32, #tpu.memory_space<vmem>>, vector<2x32xf32>,
    %c0_32 = arith.constant 0 : index
    %c0_33 = arith.constant 0 : index
    %123 = vector.load %arg8[%c0_32, %c0_33] : memref<2x32xf32, #tpu.memory_space<vmem>>, vector<2x32xf32>
    tpu.vector_store %arg8[%c0_32, %c0_33], %119 {strides = array<i32>} : memref<2x32xf32, #tpu.memory_space<vmem>>, vector<2x32xf32>,
    %c0_i32_34 = arith.constant 0 : i32
    %124 = arith.cmpi eq, %arg1, %c0_i32_34 : i32
    %125 = arith.extui %124 : i1 to i32
    %c0_i32_35 = arith.constant 0 : i32
    %126 = arith.cmpi ne, %125, %c0_i32_35 : i32
    scf.if %126 {
      %c0_36 = arith.constant 0 : index
      %c0_37 = arith.constant 0 : index
      %127 = vector.load %arg4[%c0_36, %c0_37] : memref<32x5xf32, #tpu.memory_space<vmem>>, vector<32x5xf32>
      %cst_38 = arith.constant dense<0.000000e+00> : vector<2x5xf32>
      %128 = tpu.matmul %121, %127, %cst_38 {dimension_numbers = #tpu.dot_dimension_numbers<[1], [0], [0], [1], [0, 0, 1, 1], [], []>} : vector<2x32xf32>, vector<32x5xf32>, vector<2x5xf32> -> vector<2x5xf32>
      %c0_39 = arith.constant 0 : index
      %c0_40 = arith.constant 0 : index
      %129 = vector.load %arg5[%c0_39, %c0_40] : memref<1x5xf32, #tpu.memory_space<vmem>>, vector<1x5xf32>
      %130 = vector.broadcast %129 : vector<1x5xf32> to vector<2x5xf32>
      %131 = arith.addf %128, %130 : vector<2x5xf32>
      %c0_41 = arith.constant 0 : index
      %c0_42 = arith.constant 0 : index
      %132 = vector.load %arg6[%c0_41, %c0_42] : memref<2x5xf32, #tpu.memory_space<vmem>>, vector<2x5xf32>
      tpu.vector_store %arg6[%c0_41, %c0_42], %131 {strides = array<i32>} : memref<2x5xf32, #tpu.memory_space<vmem>>, vector<2x5xf32>,
    } else {
    }
    return
  }
  func.func @transform_0(%arg0: i32, %arg1: i32) -> (i32, i32, i32) {
    %c0_i32 = arith.constant 0 : i32
    %c0_i32_0 = arith.constant 0 : i32
    return %arg0, %arg1, %c0_i32 : i32, i32, i32
  }
  func.func @transform_1(%arg0: i32, %arg1: i32) -> (i32, i32) {
    %c0_i32 = arith.constant 0 : i32
    %c0_i32_0 = arith.constant 0 : i32
    %c0_i32_1 = arith.constant 0 : i32
    return %c0_i32, %c0_i32_0 : i32, i32
  }
  func.func @transform_2(%arg0: i32, %arg1: i32) -> (i32, i32) {
    %c0_i32 = arith.constant 0 : i32
    %c0_i32_0 = arith.constant 0 : i32
    %c0_i32_1 = arith.constant 0 : i32
    return %c0_i32, %c0_i32_0 : i32, i32
  }
  func.func @transform_3(%arg0: i32, %arg1: i32) -> (i32, i32) {
    %c0_i32 = arith.constant 0 : i32
    %c0_i32_0 = arith.constant 0 : i32
    %c0_i32_1 = arith.constant 0 : i32
    return %c0_i32, %c0_i32_0 : i32, i32
  }
  func.func @transform_4(%arg0: i32, %arg1: i32) -> (i32, i32) {
    %c0_i32 = arith.constant 0 : i32
    %c0_i32_0 = arith.constant 0 : i32
    return %arg0, %c0_i32 : i32, i32
  }
}

</mosaic_0001>

<llo_original>
// kernel: conv1d_into_lstm_forward.8
$region0: #{conv1d_into_lstm_forward.8}
  #allocation0 [shape = 'u32[]', space=smem, size = 0x4, offset = 0x4, fixed_abs, tag = 'smem constant byte address 0x4 - core index']
  #allocation1 [shape = 'u32[144,128]{1,0:T(1,128)}', space=vmem, size = 0x12000, scoped, tag = 'internal scratch']
  %s0 = inlined_call_operand.vmem [shape: f32[8,16], index: 0, kind: input, shape index: {}]
  %s1 = inlined_call_operand.vmem [shape: f32[16,128], index: 1, kind: input, shape index: {}]
  %s2 = inlined_call_operand.vmem [shape: f32[1,128], index: 2, kind: input, shape index: {}]
  %s3 = inlined_call_operand.vmem [shape: f32[8,128], index: 3, kind: output, shape index: {}]
  %s4 = sld [smem:[#allocation0]]
  $region22: #{conv1d_into_lstm_forward.8} parent=0
    _
  %s6 = ssub.s32 1, %s4
  %s7 = scalar_select 0, %s6, %s4
  // Predicated region
  $region2: #{conv1d_into_lstm_forward.8} parent=0 // pred_check
    _
  $region3: #{conv1d_into_lstm_forward.8} parent=0 // pred_check_branch
    %9 = sbr.rel (0) target = $region5
  $region4: #{conv1d_into_lstm_forward.8} parent=0 // pred_region
    _
  $region5: #{conv1d_into_lstm_forward.8} parent=0 // pred_fallthru
    _
  // Predicated region
  $region6: #{conv1d_into_lstm_forward.8} parent=0 // pred_check
    _
  $region7: #{conv1d_into_lstm_forward.8} parent=0 // pred_check_branch
    %11 = sbr.rel (0) target = $region9
  $region8: #{conv1d_into_lstm_forward.8} parent=0 // pred_region
    _
  $region9: #{conv1d_into_lstm_forward.8} parent=0 // pred_fallthru
    _
  // Predicated region
  $region10: #{conv1d_into_lstm_forward.8} parent=0 // pred_check
    _
  $region11: #{conv1d_into_lstm_forward.8} parent=0 // pred_check_branch
    %13 = sbr.rel (0) target = $region13
  $region12: #{conv1d_into_lstm_forward.8} parent=0 // pred_region
    _
  $region13: #{conv1d_into_lstm_forward.8} parent=0 // pred_fallthru
    _
  %v14 = vld [vmem:[%s0] sm:$0xff]
  %v15 = vld [vmem:[%s1] sm:$0xff]
  %v16 = vld [vmem:[%s1 + $0x8] sm:$0xff]
  %v17 = vld [vmem:[%s2] sm:$0x1]
  %v19 = vlaneseq
  %v20 = vshrl.u32 %v19, 7
  %v21 = vsub.s32 0, %v20
  %v22 = vrot.slane %v17, %v21
  %vm24 = vcmask 130048
  %v26 = vsel %vm24, %v14, 0
  %28 = vmatprep.subr.mxu0 0.0
  %29 = vmatpush1.msra.mxu0 0.0
  %30 = vmatprep.subr.mxu0 0.0
  %31 = vmatpush1.msra.mxu0 0.0
  %32 = vmatprep.subr.mxu0 0.0
  %33 = vmatpush1.msra.mxu0 0.0
  %34 = vmatprep.subr.mxu0 0.0
  %35 = vmatpush1.msra.mxu0 0.0
  %36 = vmatprep.subr.mxu0 0.0
  %37 = vmatpush1.msra.mxu0 0.0
  %38 = vmatprep.subr.mxu0 0.0
  %39 = vmatpush1.msra.mxu0 0.0
  %40 = vmatprep.subr.mxu0 0.0
  %41 = vmatpush1.msra.mxu0 0.0
  %42 = vmatprep.subr.mxu0 0.0
  %43 = vmatpush1.msra.mxu0 0.0
  %44 = vmatprep.subr.mxu0 0.0
  %45 = vmatpush1.msra.mxu0 0.0
  %46 = vmatprep.subr.mxu0 0.0
  %47 = vmatpush1.msra.mxu0 0.0
  %48 = vmatprep.subr.mxu0 0.0
  %49 = vmatpush1.msra.mxu0 0.0
  %50 = vmatprep.subr.mxu0 0.0
  %51 = vmatpush1.msra.mxu0 0.0
  %52 = vmatprep.subr.mxu0 0.0
  %53 = vmatpush1.msra.mxu0 0.0
  %54 = vmatprep.subr.mxu0 0.0
  %55 = vmatpush1.msra.mxu0 0.0
  %56 = vmatprep.subr.mxu0 0.0
  %57 = vmatpush1.msra.mxu0 %v16
  %58 = vmatprep.subr.mxu0 0.0
  %59 = vmatpush1.msra.mxu0 %v15
  %60 = vmatprep.subr.mxu0 0.0
  %61 = vmatpush2.msra.mxu0 0.0
  %62 = vmatprep.subr.mxu0 0.0
  %63 = vmatpush2.msra.mxu0 0.0
  %64 = vmatprep.subr.mxu0 0.0
  %65 = vmatpush2.msra.mxu0 0.0
  %66 = vmatprep.subr.mxu0 0.0
  %67 = vmatpush2.msra.mxu0 0.0
  %68 = vmatprep.subr.mxu0 0.0
  %69 = vmatpush2.msra.mxu0 0.0
  %70 = vmatprep.subr.mxu0 0.0
  %71 = vmatpush2.msra.mxu0 0.0
  %72 = vmatprep.subr.mxu0 0.0
  %73 = vmatpush2.msra.mxu0 0.0
  %74 = vmatprep.subr.mxu0 0.0
  %75 = vmatpush2.msra.mxu0 0.0
  %76 = vmatprep.subr.mxu0 0.0
  %77 = vmatpush2.msra.mxu0 0.0
  %78 = vmatprep.subr.mxu0 0.0
  %79 = vmatpush2.msra.mxu0 0.0
  %80 = vmatprep.subr.mxu0 0.0
  %81 = vmatpush2.msra.mxu0 0.0
  %82 = vmatprep.subr.mxu0 0.0
  %83 = vmatpush2.msra.mxu0 0.0
  %84 = vmatprep.subr.mxu0 0.0
  %85 = vmatpush2.msra.mxu0 0.0
  %86 = vmatprep.subr.mxu0 0.0
  %87 = vmatpush2.msra.mxu0 0.0
  %88 = vmatprep.subr.mxu0 0.0
  %89 = vmatpush2.msra.mxu0 0.0
  %90 = vmatprep.subr.mxu0 0.0
  %91 = vmatpush2.msra.mxu0 0.0
  %92 = vmatprep.mubr.f32.mxu0 0.0
  %93 = vmatmul.mubr.f32.gmra.mxu0 %v26
  %v94 = vpop.f32.mrf.mxu0
  %v95 = vadd.f32 %v22, %v94
  %v96 = vpop.f32.mrf.mxu0
  %97 = vdwg.mxu0
  %98 = vst [vmem:[%s3] sm:$0xff] %v95
  // Predicated region
  $region14: #{conv1d_into_lstm_forward.8} parent=0 // pred_check
    _
  $region15: #{conv1d_into_lstm_forward.8} parent=0 // pred_check_branch
    %100 = sbr.rel (0) target = $region17
  $region16: #{conv1d_into_lstm_forward.8} parent=0 // pred_region
    _
  $region17: #{conv1d_into_lstm_forward.8} parent=0 // pred_fallthru
    _
  // Predicated region
  $region18: #{conv1d_into_lstm_forward.8} parent=0 // pred_check
    _
  $region19: #{conv1d_into_lstm_forward.8} parent=0 // pred_check_branch
    %102 = sbr.rel (0) target = $region21
  $region20: #{conv1d_into_lstm_forward.8} parent=0 // pred_region
    _
  $region21: #{conv1d_into_lstm_forward.8} parent=0 // pred_fallthru
    _

// kernel: conv1d_into_lstm_forward.6
$region0: #{conv1d_into_lstm_forward.6}
  #allocation0 [shape = 'u32[]', space=smem, size = 0x4, offset = 0x4, fixed_abs, tag = 'smem constant byte address 0x4 - core index']
  #allocation1 [shape = 'u32[144,128]{1,0:T(1,128)}', space=vmem, size = 0x12000, scoped, tag = 'internal scratch']
  %s0 = inlined_call_operand.vmem [shape: f32[2,4,18], index: 0, kind: input, shape index: {}]
  %s1 = inlined_call_operand.vmem [shape: f32[8,12], index: 1, kind: input, shape index: {}]
  %s2 = inlined_call_operand.vmem [shape: f32[8,1], index: 2, kind: input, shape index: {}]
  %s3 = inlined_call_operand.vmem [shape: f32[8,24], index: 3, kind: input, shape index: {}]
  %s4 = inlined_call_operand.vmem [shape: f32[8,1], index: 4, kind: input, shape index: {}]
  %s5 = inlined_call_operand.vmem [shape: f32[2,8,8], index: 5, kind: output, shape index: {}]
  %s6 = sld [smem:[#allocation0]]
  $region53: #{conv1d_into_lstm_forward.6} parent=0
    _
  %s8 = ssub.s32 1, %s6
  %s9 = scalar_select 0, %s8, %s6
  loop: start=0, step=1, limit=4
  $region2: #{conv1d_into_lstm_forward.6} parent=0 // loop_pre_header
    _
  $region3: #{conv1d_into_lstm_forward.6} parent=0 // loop_header
    %s11 = sphi 0, %s15
    %p12 = scmp.ge.s32.totalorder %s11, 4
    %s21 = sphi 0, %s23
    %s24 = sphi 0, %s21
    %s25 = sphi 0, %s24
    %s41 = sphi 0, %s25
    %s45 = sphi 0, %s45
    %s47 = sphi 0, %s45
    %s48 = sphi 0, %s47
    %s62 = sphi 0, %s48
    %s66 = sphi 0, %s66
    %s68 = sphi 0, %s66
    %s69 = sphi 0, %s68
    %s83 = sphi 0, %s69
    %s87 = sphi 0, %s87
    %s89 = sphi 0, %s87
    %s90 = sphi 0, %s89
    %s104 = sphi 0, %s90
    %s108 = sphi 0, %s108
    %s110 = sphi 0, %s108
    %s111 = sphi 0, %s110
    %s125 = sphi 0, %s111
    %s131 = sphi 0, %s133
    %s134 = sphi 0, %s131
    %s135 = sphi 0, %s134
    %s151 = sphi 0, %s135
  $region4: #{conv1d_into_lstm_forward.6} parent=0 // loop_header_branch
    %14 = sbr.rel (%p12) target = $region8
  $region5: #{conv1d_into_lstm_forward.6} parent=0 // loop_body
    %s16 = ssub.s32 %s11, 1
    %s17 = ssub.s32 %s11, 2
    %s18 = sadd.s32 %s11, 1
    %s19 = ssub.s32 %s11, %s18
    %p20 = scmp.eq.s32.totalorder %s19, 0
    %s22 = sadd.s32 %s21, 1
    %s23 = scalar_select %p20, %s21, %s22
    %p26 = pneg %p20
    %p27 = scmp.eq.s32.totalorder %s11, 1
    %p28 = por %p26, %p27
    %p29 = scmp.ne.s32.totalorder %s21, %s24
    %p30 = scmp.eq.s32.totalorder %s11, 0
    %p31 = por %p29, %p30
    %p32 = scmp.ne.s32.totalorder %s21, %s24
    %p33 = scmp.eq.s32.totalorder %s16, 1
    %p34 = por %p32, %p33
    %p35 = scmp.ne.s32.totalorder %s24, %s25
    %p36 = scmp.eq.s32.totalorder %s16, 0
    %p37 = por %p35, %p36
    %p38 = scmp.ne.s32.totalorder %s24, %s25
    %p39 = scmp.eq.s32.totalorder %s17, 1
    %p40 = por %p38, %p39
    %p42 = scmp.ne.s32.totalorder %s25, %s41
    %p43 = scmp.eq.s32.totalorder %s17, 0
    %p44 = por %p42, %p43
    %s46 = sadd.s32 %s45, 1
    %p49 = scmp.eq.s32.totalorder %s11, 1
    %p50 = scmp.ne.s32.totalorder %s45, %s47
    %p51 = scmp.eq.s32.totalorder %s11, 0
    %p52 = por %p50, %p51
    %p53 = scmp.ne.s32.totalorder %s45, %s47
    %p54 = scmp.eq.s32.totalorder %s16, 1
    %p55 = por %p53, %p54
    %p56 = scmp.ne.s32.totalorder %s47, %s48
    %p57 = scmp.eq.s32.totalorder %s16, 0
    %p58 = por %p56, %p57
    %p59 = scmp.ne.s32.totalorder %s47, %s48
    %p60 = scmp.eq.s32.totalorder %s17, 1
    %p61 = por %p59, %p60
    %p63 = scmp.ne.s32.totalorder %s48, %s62
    %p64 = scmp.eq.s32.totalorder %s17, 0
    %p65 = por %p63, %p64
    %s67 = sadd.s32 %s66, 1
    %p70 = scmp.eq.s32.totalorder %s11, 1
    %p71 = scmp.ne.s32.totalorder %s66, %s68
    %p72 = scmp.eq.s32.totalorder %s11, 0
    %p73 = por %p71, %p72
    %p74 = scmp.ne.s32.totalorder %s66, %s68
    %p75 = scmp.eq.s32.totalorder %s16, 1
    %p76 = por %p74, %p75
    %p77 = scmp.ne.s32.totalorder %s68, %s69
    %p78 = scmp.eq.s32.totalorder %s16, 0
    %p79 = por %p77, %p78
    %p80 = scmp.ne.s32.totalorder %s68, %s69
    %p81 = scmp.eq.s32.totalorder %s17, 1
    %p82 = por %p80, %p81
    %p84 = scmp.ne.s32.totalorder %s69, %s83
    %p85 = scmp.eq.s32.totalorder %s17, 0
    %p86 = por %p84, %p85
    %s88 = sadd.s32 %s87, 1
    %p91 = scmp.eq.s32.totalorder %s11, 1
    %p92 = scmp.ne.s32.totalorder %s87, %s89
    %p93 = scmp.eq.s32.totalorder %s11, 0
    %p94 = por %p92, %p93
    %p95 = scmp.ne.s32.totalorder %s87, %s89
    %p96 = scmp.eq.s32.totalorder %s16, 1
    %p97 = por %p95, %p96
    %p98 = scmp.ne.s32.totalorder %s89, %s90
    %p99 = scmp.eq.s32.totalorder %s16, 0
    %p100 = por %p98, %p99
    %p101 = scmp.ne.s32.totalorder %s89, %s90
    %p102 = scmp.eq.s32.totalorder %s17, 1
    %p103 = por %p101, %p102
    %p105 = scmp.ne.s32.totalorder %s90, %s104
    %p106 = scmp.eq.s32.totalorder %s17, 0
    %p107 = por %p105, %p106
    %s109 = sadd.s32 %s108, 1
    %p112 = scmp.eq.s32.totalorder %s11, 1
    %p113 = scmp.ne.s32.totalorder %s108, %s110
    %p114 = scmp.eq.s32.totalorder %s11, 0
    %p115 = por %p113, %p114
    %p116 = scmp.ne.s32.totalorder %s108, %s110
    %p117 = scmp.eq.s32.totalorder %s16, 1
    %p118 = por %p116, %p117
    %p119 = scmp.ne.s32.totalorder %s110, %s111
    %p120 = scmp.eq.s32.totalorder %s16, 0
    %p121 = por %p119, %p120
    %p122 = scmp.ne.s32.totalorder %s110, %s111
    %p123 = scmp.eq.s32.totalorder %s17, 1
    %p124 = por %p122, %p123
    %p126 = scmp.ne.s32.totalorder %s111, %s125
    %p127 = scmp.eq.s32.totalorder %s17, 0
    %p128 = por %p126, %p127
    %s129 = ssub.s32 %s11, %s18
    %p130 = scmp.eq.s32.totalorder %s129, 0
    %s132 = sadd.s32 %s131, 1
    %s133 = scalar_select %p130, %s131, %s132
    %p136 = pneg %p130
    %p137 = scmp.eq.s32.totalorder %s11, 1
    %p138 = por %p136, %p137
    %p139 = scmp.ne.s32.totalorder %s131, %s134
    %p140 = scmp.eq.s32.totalorder %s11, 0
    %p141 = por %p139, %p140
    %p142 = scmp.ne.s32.totalorder %s131, %s134
    %p143 = scmp.eq.s32.totalorder %s16, 1
    %p144 = por %p142, %p143
    %p145 = scmp.ne.s32.totalorder %s134, %s135
    %p146 = scmp.eq.s32.totalorder %s16, 0
    %p147 = por %p145, %p146
    %p148 = scmp.ne.s32.totalorder %s134, %s135
    %p149 = scmp.eq.s32.totalorder %s17, 1
    %p150 = por %p148, %p149
    %p152 = scmp.ne.s32.totalorder %s135, %s151
    %p153 = scmp.eq.s32.totalorder %s17, 0
    %p154 = por %p152, %p153
    %p155 = scmp.le.s32.totalorder 1, %s11
    %p156 = scmp.lt.s32.totalorder %s11, 3
    %p157 = pnand %p155, %p156
    %p158 = pneg %p157
    // Predicated region
    $region9: #{conv1d_into_lstm_forward.6} parent=5 // pred_check
      _
    $region10: #{conv1d_into_lstm_forward.6} parent=5 // pred_check_branch
      %160 = sbr.rel (%p157) target = $region12
    $region11: #{conv1d_into_lstm_forward.6} parent=5 // pred_region
      %s161 = ssub.s32 %s11, 1
      // Predicated region
      $region13: #{conv1d_into_lstm_forward.6} parent=11 // pred_check
        %p162 = pneg %p58
      $region14: #{conv1d_into_lstm_forward.6} parent=11 // pred_check_branch
        %164 = sbr.rel (%p162) target = $region16
      $region15: #{conv1d_into_lstm_forward.6} parent=11 // pred_region
        _
      $region16: #{conv1d_into_lstm_forward.6} parent=11 // pred_fallthru
        _
      // Predicated region
      $region17: #{conv1d_into_lstm_forward.6} parent=11 // pred_check
        %p165 = pneg %p79
      $region18: #{conv1d_into_lstm_forward.6} parent=11 // pred_check_branch
        %167 = sbr.rel (%p165) target = $region20
      $region19: #{conv1d_into_lstm_forward.6} parent=11 // pred_region
        _
      $region20: #{conv1d_into_lstm_forward.6} parent=11 // pred_fallthru
        _
      // Predicated region
      $region21: #{conv1d_into_lstm_forward.6} parent=11 // pred_check
        %p168 = pneg %p100
      $region22: #{conv1d_into_lstm_forward.6} parent=11 // pred_check_branch
        %170 = sbr.rel (%p168) target = $region24
      $region23: #{conv1d_into_lstm_forward.6} parent=11 // pred_region
        _
      $region24: #{conv1d_into_lstm_forward.6} parent=11 // pred_fallthru
        _
      // Predicated region
      $region25: #{conv1d_into_lstm_forward.6} parent=11 // pred_check
        %p171 = pneg %p121
      $region26: #{conv1d_into_lstm_forward.6} parent=11 // pred_check_branch
        %173 = sbr.rel (%p171) target = $region28
      $region27: #{conv1d_into_lstm_forward.6} parent=11 // pred_region
        _
      $region28: #{conv1d_into_lstm_forward.6} parent=11 // pred_fallthru
        _
    $region12: #{conv1d_into_lstm_forward.6} parent=5 // pred_fallthru
      _
    %p174 = scmp.lt.s32.totalorder %s11, 2
    // Predicated region
    $region29: #{conv1d_into_lstm_forward.6} parent=5 // pred_check
      %p175 = pneg %p174
    $region30: #{conv1d_into_lstm_forward.6} parent=5 // pred_check_branch
      %177 = sbr.rel (%p175) target = $region32
    $region31: #{conv1d_into_lstm_forward.6} parent=5 // pred_region
      // Predicated region
      $region33: #{conv1d_into_lstm_forward.6} parent=31 // pred_check
        %p178 = pneg %p31
      $region34: #{conv1d_into_lstm_forward.6} parent=31 // pred_check_branch
        %180 = sbr.rel (%p178) target = $region36
      $region35: #{conv1d_into_lstm_forward.6} parent=31 // pred_region
        %p181 = scmp.lt.s32.totalorder %s11, 1
        %s182 = scalar_select %p181, %s11, 1
        %s183 = smul.addr %s182, 4
        %s184 = scalar_lea.vmem %s0, %s183
      $region36: #{conv1d_into_lstm_forward.6} parent=31 // pred_fallthru
        _
    $region32: #{conv1d_into_lstm_forward.6} parent=5 // pred_fallthru
      _
    %p185 = scmp.le.s32.totalorder 1, %s11
    %p186 = scmp.lt.s32.totalorder %s11, 3
    %p187 = pnand %p185, %p186
    %p188 = pneg %p187
    // Predicated region
    $region37: #{conv1d_into_lstm_forward.6} parent=5 // pred_check
      _
    $region38: #{conv1d_into_lstm_forward.6} parent=5 // pred_check_branch
      %190 = sbr.rel (%p187) target = $region40
    $region39: #{conv1d_into_lstm_forward.6} parent=5 // pred_region
      %s191 = ssub.s32 %s11, 1
      %p192 = scmp.lt.s32.totalorder %s16, 1
      %s193 = scalar_select %p192, %s16, 1
      %s194 = smul.addr %s193, 4
      %s195 = scalar_lea.vmem %s0, %s194
      %p196 = pneg %p37
      %p197 = pneg %p34
      %p198 = pneg %p58
      %p199 = pneg %p55
      %p200 = pneg %p79
      %p201 = pneg %p76
      %p202 = pneg %p100
      %p203 = pneg %p97
      %p204 = pneg %p121
      %p205 = pneg %p118
      %p206 = pneg %p147
      %p207 = pneg %p144
      %p208 = scmp.lt.s32.totalorder %s16, 1
      %s209 = scalar_select %p208, %s16, 1
      %s210 = smul.addr %s209, 8
      %s211 = scalar_lea.vmem %s5, %s210
      %p212 = scmp.lt.s32.totalorder %s16, 1
      %s213 = scalar_select %p212, %s16, 1
      %s214 = smul.addr %s213, 4
      %s215 = scalar_lea.vmem %s0, %s214
      %p216 = scmp.lt.s32.totalorder %s16, 1
      %s217 = scalar_select %p216, %s16, 1
      %s218 = smul.addr %s217, 8
      %s219 = scalar_lea.vmem %s5, %s218
      %v220 = vld [vmem:[%s215] sm:$0xf]
      %v222 = vrot.slane %v220, 4
      %223 = vrot.lane.b32.xlu0 %v222, 127
      %v224 = vpop.permute.xlu0 %223
      %226 = vrot.lane.b32.xlu0 %v220, 126
      %v227 = vpop.permute.xlu0 %226
      %vm228 = vcmask 1043456
      %v229 = vsel %vm228, %v220, %v224
      %v230 = vld [vmem:[%s1] sm:$0xff]
      %v231 = vld [vmem:[%s2] sm:$0xff]
      %233 = vset.pattern.permute.xlu0 0
      %234 = vperm.xlu0 %233, %v231
      %v235 = vpop.permute.xlu0 %234
      %vm237 = vcmask 97280
      %v239 = vsel %vm237, %v230, 0
      %v241 = vsel %vm228, %v227, 0
      %243 = vmatprep.subr.mxu0 0.0
      %244 = vmatpush1.msra.mxu0 0.0
      %245 = vmatprep.subr.mxu0 0.0
      %246 = vmatpush1.msra.mxu0 0.0
      %247 = vmatprep.subr.mxu0 0.0
      %248 = vmatpush1.msra.mxu0 0.0
      %249 = vmatprep.subr.mxu0 0.0
      %250 = vmatpush1.msra.mxu0 0.0
      %251 = vmatprep.subr.mxu0 0.0
      %252 = vmatpush1.msra.mxu0 0.0
      %253 = vmatprep.subr.mxu0 0.0
      %254 = vmatpush1.msra.mxu0 0.0
      %255 = vmatprep.subr.mxu0 0.0
      %256 = vmatpush1.msra.mxu0 0.0
      %257 = vmatprep.subr.mxu0 0.0
      %258 = vmatpush1.msra.mxu0 0.0
      %259 = vmatprep.subr.mxu0 0.0
      %260 = vmatpush1.msra.mxu0 0.0
      %261 = vmatprep.subr.mxu0 0.0
      %262 = vmatpush1.msra.mxu0 0.0
      %263 = vmatprep.subr.mxu0 0.0
      %264 = vmatpush1.msra.mxu0 0.0
      %265 = vmatprep.subr.mxu0 0.0
      %266 = vmatpush1.msra.mxu0 0.0
      %267 = vmatprep.subr.mxu0 0.0
      %268 = vmatpush1.msra.mxu0 0.0
      %269 = vmatprep.subr.mxu0 0.0
      %270 = vmatpush1.msra.mxu0 0.0
      %271 = vmatprep.subr.mxu0 0.0
      %272 = vmatpush1.msra.mxu0 %v241
      %273 = vmatprep.subr.mxu0 0.0
      %274 = vmatpush1.msra.mxu0 %v229
      %275 = vmatprep.subr.mxu0 0.0
      %276 = vmatpush2.msra.mxu0 0.0
      %277 = vmatprep.subr.mxu0 0.0
      %278 = vmatpush2.msra.mxu0 0.0
      %279 = vmatprep.subr.mxu0 0.0
      %280 = vmatpush2.msra.mxu0 0.0
      %281 = vmatprep.subr.mxu0 0.0
      %282 = vmatpush2.msra.mxu0 0.0
      %283 = vmatprep.subr.mxu0 0.0
      %284 = vmatpush2.msra.mxu0 0.0
      %285 = vmatprep.subr.mxu0 0.0
      %286 = vmatpush2.msra.mxu0 0.0
      %287 = vmatprep.subr.mxu0 0.0
      %288 = vmatpush2.msra.mxu0 0.0
      %289 = vmatprep.subr.mxu0 0.0
      %290 = vmatpush2.msra.mxu0 0.0
      %291 = vmatprep.subr.mxu0 0.0
      %292 = vmatpush2.msra.mxu0 0.0
      %293 = vmatprep.subr.mxu0 0.0
      %294 = vmatpush2.msra.mxu0 0.0
      %295 = vmatprep.subr.mxu0 0.0
      %296 = vmatpush2.msra.mxu0 0.0
      %297 = vmatprep.subr.mxu0 0.0
      %298 = vmatpush2.msra.mxu0 0.0
      %299 = vmatprep.subr.mxu0 0.0
      %300 = vmatpush2.msra.mxu0 0.0
      %301 = vmatprep.subr.mxu0 0.0
      %302 = vmatpush2.msra.mxu0 0.0
      %303 = vmatprep.subr.mxu0 0.0
      %304 = vmatpush2.msra.mxu0 0.0
      %305 = vmatprep.subr.mxu0 0.0
      %306 = vmatpush2.msra.mxu0 0.0
      %307 = vmatprep.mubr.f32.mxu0 0.0
      %308 = vmatmul.mubr.f32.gmra.mxu0 %v239
      %v309 = vpop.f32.mrf.mxu0
      %v310 = vadd.f32 %v235, %v309
      %v311 = vpop.f32.mrf.mxu0
      %312 = vdwg.mxu0
      %v313 = vmax.f32 %v310, 0.0
      %315 = vrot.lane.b32.xlu0 %v313, 1
      %v316 = vpop.permute.xlu0 %315
      %vm318 = vcmask 7168
      %v319 = vsel %vm318, 0.0, %v316
      %vm320 = vcmask 138240
      %v321 = vsel %vm320, %v319, 0.0
      %323 = vrot.lane.b32.xlu0 %v321, 127
      %v324 = vpop.permute.xlu0 %323
      %326 = vrot.lane.b32.xlu0 %v321, 126
      %v327 = vpop.permute.xlu0 %326
      %v329 = vld [vmem:[%s3] sm:$0xff]
      %v330 = vld [vmem:[%s4] sm:$0xff]
      %332 = vset.pattern.permute.xlu0 0
      %333 = vperm.xlu0 %332, %v330
      %v334 = vpop.permute.xlu0 %333
      %vm336 = vcmask 195584
      %v338 = vsel %vm336, %v329, 0
      %340 = vmatprep.subr.mxu0 0.0
      %341 = vmatpush1.msra.mxu0 0.0
      %342 = vmatprep.subr.mxu0 0.0
      %343 = vmatpush1.msra.mxu0 0.0
      %344 = vmatprep.subr.mxu0 0.0
      %345 = vmatpush1.msra.mxu0 0.0
      %346 = vmatprep.subr.mxu0 0.0
      %347 = vmatpush1.msra.mxu0 0.0
      %348 = vmatprep.subr.mxu0 0.0
      %349 = vmatpush1.msra.mxu0 0.0
      %350 = vmatprep.subr.mxu0 0.0
      %351 = vmatpush1.msra.mxu0 0.0
      %352 = vmatprep.subr.mxu0 0.0
      %353 = vmatpush1.msra.mxu0 0.0
      %354 = vmatprep.subr.mxu0 0.0
      %355 = vmatpush1.msra.mxu0 0.0
      %356 = vmatprep.subr.mxu0 0.0
      %357 = vmatpush1.msra.mxu0 0.0
      %358 = vmatprep.subr.mxu0 0.0
      %359 = vmatpush1.msra.mxu0 0.0
      %360 = vmatprep.subr.mxu0 0.0
      %361 = vmatpush1.msra.mxu0 0.0
      %362 = vmatprep.subr.mxu0 0.0
      %363 = vmatpush1.msra.mxu0 0.0
      %364 = vmatprep.subr.mxu0 0.0
      %365 = vmatpush1.msra.mxu0 0.0
      %366 = vmatprep.subr.mxu0 0.0
      %367 = vmatpush1.msra.mxu0 %v327
      %368 = vmatprep.subr.mxu0 0.0
      %369 = vmatpush1.msra.mxu0 %v324
      %370 = vmatprep.subr.mxu0 0.0
      %371 = vmatpush1.msra.mxu0 %v321
      %372 = vmatprep.subr.mxu0 0.0
      %373 = vmatpush2.msra.mxu0 0.0
      %374 = vmatprep.subr.mxu0 0.0
      %375 = vmatpush2.msra.mxu0 0.0
      %376 = vmatprep.subr.mxu0 0.0
      %377 = vmatpush2.msra.mxu0 0.0
      %378 = vmatprep.subr.mxu0 0.0
      %379 = vmatpush2.msra.mxu0 0.0
      %380 = vmatprep.subr.mxu0 0.0
      %381 = vmatpush2.msra.mxu0 0.0
      %382 = vmatprep.subr.mxu0 0.0
      %383 = vmatpush2.msra.mxu0 0.0
      %384 = vmatprep.subr.mxu0 0.0
      %385 = vmatpush2.msra.mxu0 0.0
      %386 = vmatprep.subr.mxu0 0.0
      %387 = vmatpush2.msra.mxu0 0.0
      %388 = vmatprep.subr.mxu0 0.0
      %389 = vmatpush2.msra.mxu0 0.0
      %390 = vmatprep.subr.mxu0 0.0
      %391 = vmatpush2.msra.mxu0 0.0
      %392 = vmatprep.subr.mxu0 0.0
      %393 = vmatpush2.msra.mxu0 0.0
      %394 = vmatprep.subr.mxu0 0.0
      %395 = vmatpush2.msra.mxu0 0.0
      %396 = vmatprep.subr.mxu0 0.0
      %397 = vmatpush2.msra.mxu0 0.0
      %398 = vmatprep.subr.mxu0 0.0
      %399 = vmatpush2.msra.mxu0 0.0
      %400 = vmatprep.subr.mxu0 0.0
      %401 = vmatpush2.msra.mxu0 0.0
      %402 = vmatprep.subr.mxu0 0.0
      %403 = vmatpush2.msra.mxu0 0.0
      %404 = vmatprep.mubr.f32.mxu0 0.0
      %405 = vmatmul.mubr.f32.gmra.mxu0 %v338
      %v406 = vpop.f32.mrf.mxu0
      %v407 = vadd.f32 %v334, %v406
      %v408 = vpop.f32.mrf.mxu0
      %409 = vdwg.mxu0
      %v410 = vmax.f32 %v407, 0.0
      %412 = vrot.lane.b32.xlu0 %v410, 126
      %v413 = vpop.permute.xlu0 %412
      %415 = vrot.lane.b32.xlu0 %v410, 124
      %v416 = vpop.permute.xlu0 %415
      %418 = vrot.lane.b32.xlu0 %v410, 122
      %v419 = vpop.permute.xlu0 %418
      %421 = vrot.lane.b32.xlu0 %v410, 120
      %v422 = vpop.permute.xlu0 %421
      %424 = vrot.lane.b32.xlu0 %v410, 118
      %v425 = vpop.permute.xlu0 %424
      %427 = vrot.lane.b32.xlu0 %v410, 116
      %v428 = vpop.permute.xlu0 %427
      %430 = vrot.lane.b32.xlu0 %v410, 114
      %v431 = vpop.permute.xlu0 %430
      %v433 = vcombine.low %v410, %v416
      %v434 = vcombine.high %v410, %v416
      %v436 = vunpack.c.l.s4 1983009808
      %v437 = vunpack.c.0.s8 %v436
      %v438 = vlaneseq
      %v439 = vshrl.u32 %v438, 7
      %v440 = vsub.s32 %v437, %v439
      %v441 = vrot.slane %v433, %v440
      %v443 = vunpack.c.l.s4 1983009808
      %v444 = vunpack.c.0.s8 %v443
      %v445 = vlaneseq
      %v446 = vshrl.u32 %v445, 7
      %v447 = vsub.s32 %v444, %v446
      %v448 = vrot.slane %v434, %v447
      %v449 = vcombine.low %v413, %v419
      %v450 = vcombine.high %v413, %v419
      %v452 = vunpack.c.l.s4 1983009808
      %v453 = vunpack.c.0.s8 %v452
      %v454 = vlaneseq
      %v455 = vshrl.u32 %v454, 7
      %v456 = vsub.s32 %v453, %v455
      %v457 = vrot.slane %v449, %v456
      %v459 = vunpack.c.l.s4 1983009808
      %v460 = vunpack.c.0.s8 %v459
      %v461 = vlaneseq
      %v462 = vshrl.u32 %v461, 7
      %v463 = vsub.s32 %v460, %v462
      %v464 = vrot.slane %v450, %v463
      %v465 = vcombine.low %v422, %v428
      %v466 = vcombine.high %v422, %v428
      %v468 = vunpack.c.l.s4 1983009808
      %v469 = vunpack.c.0.s8 %v468
      %v470 = vlaneseq
      %v471 = vshrl.u32 %v470, 7
      %v472 = vsub.s32 %v469, %v471
      %v473 = vrot.slane %v465, %v472
      %v475 = vunpack.c.l.s4 1983009808
      %v476 = vunpack.c.0.s8 %v475
      %v477 = vlaneseq
      %v478 = vshrl.u32 %v477, 7
      %v479 = vsub.s32 %v476, %v478
      %v480 = vrot.slane %v466, %v479
      %v481 = vcombine.low %v425, %v431
      %v482 = vcombine.high %v425, %v431
      %v484 = vunpack.c.l.s4 1983009808
      %v485 = vunpack.c.0.s8 %v484
      %v486 = vlaneseq
      %v487 = vshrl.u32 %v486, 7
      %v488 = vsub.s32 %v485, %v487
      %v489 = vrot.slane %v481, %v488
      %v491 = vunpack.c.l.s4 1983009808
      %v492 = vunpack.c.0.s8 %v491
      %v493 = vlaneseq
      %v494 = vshrl.u32 %v493, 7
      %v495 = vsub.s32 %v492, %v494
      %v496 = vrot.slane %v482, %v495
      %v497 = vcombine.low %v441, %v457
      %v498 = vcombine.high %v441, %v457
      %v500 = vunpack.c.l.s4 1934713408
      %v501 = vunpack.c.0.s8 %v500
      %v502 = vlaneseq
      %v503 = vshrl.u32 %v502, 7
      %v504 = vsub.s32 %v501, %v503
      %v505 = vrot.slane %v497, %v504
      %v507 = vunpack.c.l.s4 1934713408
      %v508 = vunpack.c.0.s8 %v507
      %v509 = vlaneseq
      %v510 = vshrl.u32 %v509, 7
      %v511 = vsub.s32 %v508, %v510
      %v512 = vrot.slane %v498, %v511
      %v513 = vcombine.low %v448, %v464
      %v514 = vcombine.high %v448, %v464
      %v516 = vunpack.c.l.s4 1934713408
      %v517 = vunpack.c.0.s8 %v516
      %v518 = vlaneseq
      %v519 = vshrl.u32 %v518, 7
      %v520 = vsub.s32 %v517, %v519
      %v521 = vrot.slane %v513, %v520
      %v523 = vunpack.c.l.s4 1934713408
      %v524 = vunpack.c.0.s8 %v523
      %v525 = vlaneseq
      %v526 = vshrl.u32 %v525, 7
      %v527 = vsub.s32 %v524, %v526
      %v528 = vrot.slane %v514, %v527
      %v529 = vcombine.low %v473, %v489
      %v530 = vcombine.high %v473, %v489
      %v532 = vunpack.c.l.s4 1934713408
      %v533 = vunpack.c.0.s8 %v532
      %v534 = vlaneseq
      %v535 = vshrl.u32 %v534, 7
      %v536 = vsub.s32 %v533, %v535
      %v537 = vrot.slane %v529, %v536
      %v539 = vunpack.c.l.s4 1934713408
      %v540 = vunpack.c.0.s8 %v539
      %v541 = vlaneseq
      %v542 = vshrl.u32 %v541, 7
      %v543 = vsub.s32 %v540, %v542
      %v544 = vrot.slane %v530, %v543
      %v545 = vcombine.low %v480, %v496
      %v546 = vcombine.high %v480, %v496
      %v548 = vunpack.c.l.s4 1934713408
      %v549 = vunpack.c.0.s8 %v548
      %v550 = vlaneseq
      %v551 = vshrl.u32 %v550, 7
      %v552 = vsub.s32 %v549, %v551
      %v553 = vrot.slane %v545, %v552
      %v555 = vunpack.c.l.s4 1934713408
      %v556 = vunpack.c.0.s8 %v555
      %v557 = vlaneseq
      %v558 = vshrl.u32 %v557, 7
      %v559 = vsub.s32 %v556, %v558
      %v560 = vrot.slane %v546, %v559
      %v561 = vcombine.low %v505, %v537
      %v562 = vcombine.high %v505, %v537
      %v563 = vcombine.low %v512, %v544
      %v564 = vcombine.high %v512, %v544
      %v565 = vcombine.low %v521, %v553
      %v566 = vcombine.high %v521, %v553
      %v567 = vcombine.low %v528, %v560
      %v568 = vcombine.high %v528, %v560
      %vm569 = vcmask 15360
      %v570 = vsel %vm569, %v561, -inf
      %571 = vmax.xlane.f32.xlu0 %v570
      %v572 = vpop.xlane.xlu0 %571
      %v573 = vsel %vm569, %v562, -inf
      %574 = vmax.xlane.f32.xlu0 %v573
      %v575 = vpop.xlane.xlu0 %574
      %v576 = vsel %vm569, %v563, -inf
      %577 = vmax.xlane.f32.xlu0 %v576
      %v578 = vpop.xlane.xlu0 %577
      %v579 = vsel %vm569, %v564, -inf
      %580 = vmax.xlane.f32.xlu0 %v579
      %v581 = vpop.xlane.xlu0 %580
      %v582 = vsel %vm569, %v565, -inf
      %583 = vmax.xlane.f32.xlu0 %v582
      %v584 = vpop.xlane.xlu0 %583
      %v585 = vsel %vm569, %v566, -inf
      %586 = vmax.xlane.f32.xlu0 %v585
      %v587 = vpop.xlane.xlu0 %586
      %v588 = vsel %vm569, %v567, -inf
      %589 = vmax.xlane.f32.xlu0 %v588
      %v590 = vpop.xlane.xlu0 %589
      %v591 = vsel %vm569, %v568, -inf
      %592 = vmax.xlane.f32.xlu0 %v591
      %v593 = vpop.xlane.xlu0 %592
      %v602 = vlaneseq
      %v603 = vand.u32 %v602, 127
      %v604 = vlaneseq
      %v605 = vshrl.u32 %v604, 7
      %v606 = vsub.s32 %v603, %v605
      %v607 = vrot.slane %v572, %v606
      %v608 = vlaneseq
      %v609 = vshrl.u32 %v608, 7
      %v610 = vsub.s32 %v603, %v609
      %v611 = vrot.slane %v575, %v610
      %v612 = vlaneseq
      %v613 = vshrl.u32 %v612, 7
      %v614 = vsub.s32 %v603, %v613
      %v615 = vrot.slane %v578, %v614
      %v616 = vlaneseq
      %v617 = vshrl.u32 %v616, 7
      %v618 = vsub.s32 %v603, %v617
      %v619 = vrot.slane %v581, %v618
      %v620 = vlaneseq
      %v621 = vshrl.u32 %v620, 7
      %v622 = vsub.s32 %v603, %v621
      %v623 = vrot.slane %v584, %v622
      %v624 = vlaneseq
      %v625 = vshrl.u32 %v624, 7
      %v626 = vsub.s32 %v603, %v625
      %v627 = vrot.slane %v587, %v626
      %v628 = vlaneseq
      %v629 = vshrl.u32 %v628, 7
      %v630 = vsub.s32 %v603, %v629
      %v631 = vrot.slane %v590, %v630
      %v632 = vlaneseq
      %v633 = vshrl.u32 %v632, 7
      %v634 = vsub.s32 %v603, %v633
      %v635 = vrot.slane %v593, %v634
      %vm636 = vcmask 1041409
      %v637 = vsel %vm636, %v611, %v607
      %vm638 = vcmask 1042434
      %v639 = vsel %vm638, %v615, %v637
      %vm640 = vcmask 1043459
      %v641 = vsel %vm640, %v619, %v639
      %vm642 = vcmask 1044484
      %v643 = vsel %vm642, %v623, %v641
      %vm644 = vcmask 1045509
      %v645 = vsel %vm644, %v627, %v643
      %vm646 = vcmask 1046534
      %v647 = vsel %vm646, %v631, %v645
      %vm648 = vcmask 1047559
      %v649 = vsel %vm648, %v635, %v647
      %vm651 = vcmask 64512
      %652 = vst.msk [vmem:[%s219] sm:$0xff] %vm651, %v649
      %p653 = scmp.lt.s32.totalorder %s16, 1
      %s654 = scalar_select %p653, %s16, 1
      %s655 = smul.addr %s654, 8
      %s656 = scalar_lea.vmem %s5, %s655
      // Predicated region
      $region41: #{conv1d_into_lstm_forward.6} parent=39 // pred_check
        %p657 = pneg %p144
      $region42: #{conv1d_into_lstm_forward.6} parent=39 // pred_check_branch
        %659 = sbr.rel (%p657) target = $region44
      $region43: #{conv1d_into_lstm_forward.6} parent=39 // pred_region
        _
      $region44: #{conv1d_into_lstm_forward.6} parent=39 // pred_fallthru
        _
    $region40: #{conv1d_into_lstm_forward.6} parent=5 // pred_fallthru
      _
    %p660 = scmp.le.s32.totalorder 2, %s11
    // Predicated region
    $region45: #{conv1d_into_lstm_forward.6} parent=5 // pred_check
      %p661 = pneg %p660
    $region46: #{conv1d_into_lstm_forward.6} parent=5 // pred_check_branch
      %663 = sbr.rel (%p661) target = $region48
    $region47: #{conv1d_into_lstm_forward.6} parent=5 // pred_region
      %s664 = ssub.s32 %s11, 2
      // Predicated region
      $region49: #{conv1d_into_lstm_forward.6} parent=47 // pred_check
        %p665 = pneg %p150
      $region50: #{conv1d_into_lstm_forward.6} parent=47 // pred_check_branch
        %667 = sbr.rel (%p665) target = $region52
      $region51: #{conv1d_into_lstm_forward.6} parent=47 // pred_region
        %p668 = scmp.lt.s32.totalorder %s17, 1
        %s669 = scalar_select %p668, %s17, 1
        %s670 = smul.addr %s669, 8
        %s671 = scalar_lea.vmem %s5, %s670
      $region52: #{conv1d_into_lstm_forward.6} parent=47 // pred_fallthru
        _
    $region48: #{conv1d_into_lstm_forward.6} parent=5 // pred_fallthru
      _
  $region6: #{conv1d_into_lstm_forward.6} parent=0 // loop_footer
    %s15 = sadd.s32 1, %s11
  $region7: #{conv1d_into_lstm_forward.6} parent=0 // loop_footer_branch
    %10 = sbr.rel target = $region3
  $region8: #{conv1d_into_lstm_forward.6} parent=0 // loop_exit
    _

// kernel: conv1d_into_lstm_forward.7
$region0: #{conv1d_into_lstm_forward.7}
  #allocation0 [shape = 'u32[]', space=smem, size = 0x4, offset = 0x4, fixed_abs, tag = 'smem constant byte address 0x4 - core index']
  #allocation1 [shape = 'u32[144,128]{1,0:T(1,128)}', space=vmem, size = 0x12000, scoped, tag = 'internal scratch']
  %s0 = inlined_call_operand.vmem [shape: f32[2,8,10], index: 0, kind: input, shape index: {}]
  %s1 = inlined_call_operand.vmem [shape: f32[16,24], index: 1, kind: input, shape index: {}]
  %s2 = inlined_call_operand.vmem [shape: f32[16,1], index: 2, kind: input, shape index: {}]
  %s3 = inlined_call_operand.vmem [shape: f32[16,48], index: 3, kind: input, shape index: {}]
  %s4 = inlined_call_operand.vmem [shape: f32[16,1], index: 4, kind: input, shape index: {}]
  %s5 = inlined_call_operand.vmem [shape: f32[2,4,16], index: 5, kind: output, shape index: {}]
  %s6 = sld [smem:[#allocation0]]
  $region53: #{conv1d_into_lstm_forward.7} parent=0
    _
  %s8 = ssub.s32 1, %s6
  %s9 = scalar_select 0, %s8, %s6
  loop: start=0, step=1, limit=4
  $region2: #{conv1d_into_lstm_forward.7} parent=0 // loop_pre_header
    _
  $region3: #{conv1d_into_lstm_forward.7} parent=0 // loop_header
    %s11 = sphi 0, %s15
    %p12 = scmp.ge.s32.totalorder %s11, 4
    %s21 = sphi 0, %s23
    %s24 = sphi 0, %s21
    %s25 = sphi 0, %s24
    %s41 = sphi 0, %s25
    %s45 = sphi 0, %s45
    %s47 = sphi 0, %s45
    %s48 = sphi 0, %s47
    %s62 = sphi 0, %s48
    %s66 = sphi 0, %s66
    %s68 = sphi 0, %s66
    %s69 = sphi 0, %s68
    %s83 = sphi 0, %s69
    %s87 = sphi 0, %s87
    %s89 = sphi 0, %s87
    %s90 = sphi 0, %s89
    %s104 = sphi 0, %s90
    %s108 = sphi 0, %s108
    %s110 = sphi 0, %s108
    %s111 = sphi 0, %s110
    %s125 = sphi 0, %s111
    %s131 = sphi 0, %s133
    %s134 = sphi 0, %s131
    %s135 = sphi 0, %s134
    %s151 = sphi 0, %s135
  $region4: #{conv1d_into_lstm_forward.7} parent=0 // loop_header_branch
    %14 = sbr.rel (%p12) target = $region8
  $region5: #{conv1d_into_lstm_forward.7} parent=0 // loop_body
    %s16 = ssub.s32 %s11, 1
    %s17 = ssub.s32 %s11, 2
    %s18 = sadd.s32 %s11, 1
    %s19 = ssub.s32 %s11, %s18
    %p20 = scmp.eq.s32.totalorder %s19, 0
    %s22 = sadd.s32 %s21, 1
    %s23 = scalar_select %p20, %s21, %s22
    %p26 = pneg %p20
    %p27 = scmp.eq.s32.totalorder %s11, 1
    %p28 = por %p26, %p27
    %p29 = scmp.ne.s32.totalorder %s21, %s24
    %p30 = scmp.eq.s32.totalorder %s11, 0
    %p31 = por %p29, %p30
    %p32 = scmp.ne.s32.totalorder %s21, %s24
    %p33 = scmp.eq.s32.totalorder %s16, 1
    %p34 = por %p32, %p33
    %p35 = scmp.ne.s32.totalorder %s24, %s25
    %p36 = scmp.eq.s32.totalorder %s16, 0
    %p37 = por %p35, %p36
    %p38 = scmp.ne.s32.totalorder %s24, %s25
    %p39 = scmp.eq.s32.totalorder %s17, 1
    %p40 = por %p38, %p39
    %p42 = scmp.ne.s32.totalorder %s25, %s41
    %p43 = scmp.eq.s32.totalorder %s17, 0
    %p44 = por %p42, %p43
    %s46 = sadd.s32 %s45, 1
    %p49 = scmp.eq.s32.totalorder %s11, 1
    %p50 = scmp.ne.s32.totalorder %s45, %s47
    %p51 = scmp.eq.s32.totalorder %s11, 0
    %p52 = por %p50, %p51
    %p53 = scmp.ne.s32.totalorder %s45, %s47
    %p54 = scmp.eq.s32.totalorder %s16, 1
    %p55 = por %p53, %p54
    %p56 = scmp.ne.s32.totalorder %s47, %s48
    %p57 = scmp.eq.s32.totalorder %s16, 0
    %p58 = por %p56, %p57
    %p59 = scmp.ne.s32.totalorder %s47, %s48
    %p60 = scmp.eq.s32.totalorder %s17, 1
    %p61 = por %p59, %p60
    %p63 = scmp.ne.s32.totalorder %s48, %s62
    %p64 = scmp.eq.s32.totalorder %s17, 0
    %p65 = por %p63, %p64
    %s67 = sadd.s32 %s66, 1
    %p70 = scmp.eq.s32.totalorder %s11, 1
    %p71 = scmp.ne.s32.totalorder %s66, %s68
    %p72 = scmp.eq.s32.totalorder %s11, 0
    %p73 = por %p71, %p72
    %p74 = scmp.ne.s32.totalorder %s66, %s68
    %p75 = scmp.eq.s32.totalorder %s16, 1
    %p76 = por %p74, %p75
    %p77 = scmp.ne.s32.totalorder %s68, %s69
    %p78 = scmp.eq.s32.totalorder %s16, 0
    %p79 = por %p77, %p78
    %p80 = scmp.ne.s32.totalorder %s68, %s69
    %p81 = scmp.eq.s32.totalorder %s17, 1
    %p82 = por %p80, %p81
    %p84 = scmp.ne.s32.totalorder %s69, %s83
    %p85 = scmp.eq.s32.totalorder %s17, 0
    %p86 = por %p84, %p85
    %s88 = sadd.s32 %s87, 1
    %p91 = scmp.eq.s32.totalorder %s11, 1
    %p92 = scmp.ne.s32.totalorder %s87, %s89
    %p93 = scmp.eq.s32.totalorder %s11, 0
    %p94 = por %p92, %p93
    %p95 = scmp.ne.s32.totalorder %s87, %s89
    %p96 = scmp.eq.s32.totalorder %s16, 1
    %p97 = por %p95, %p96
    %p98 = scmp.ne.s32.totalorder %s89, %s90
    %p99 = scmp.eq.s32.totalorder %s16, 0
    %p100 = por %p98, %p99
    %p101 = scmp.ne.s32.totalorder %s89, %s90
    %p102 = scmp.eq.s32.totalorder %s17, 1
    %p103 = por %p101, %p102
    %p105 = scmp.ne.s32.totalorder %s90, %s104
    %p106 = scmp.eq.s32.totalorder %s17, 0
    %p107 = por %p105, %p106
    %s109 = sadd.s32 %s108, 1
    %p112 = scmp.eq.s32.totalorder %s11, 1
    %p113 = scmp.ne.s32.totalorder %s108, %s110
    %p114 = scmp.eq.s32.totalorder %s11, 0
    %p115 = por %p113, %p114
    %p116 = scmp.ne.s32.totalorder %s108, %s110
    %p117 = scmp.eq.s32.totalorder %s16, 1
    %p118 = por %p116, %p117
    %p119 = scmp.ne.s32.totalorder %s110, %s111
    %p120 = scmp.eq.s32.totalorder %s16, 0
    %p121 = por %p119, %p120
    %p122 = scmp.ne.s32.totalorder %s110, %s111
    %p123 = scmp.eq.s32.totalorder %s17, 1
    %p124 = por %p122, %p123
    %p126 = scmp.ne.s32.totalorder %s111, %s125
    %p127 = scmp.eq.s32.totalorder %s17, 0
    %p128 = por %p126, %p127
    %s129 = ssub.s32 %s11, %s18
    %p130 = scmp.eq.s32.totalorder %s129, 0
    %s132 = sadd.s32 %s131, 1
    %s133 = scalar_select %p130, %s131, %s132
    %p136 = pneg %p130
    %p137 = scmp.eq.s32.totalorder %s11, 1
    %p138 = por %p136, %p137
    %p139 = scmp.ne.s32.totalorder %s131, %s134
    %p140 = scmp.eq.s32.totalorder %s11, 0
    %p141 = por %p139, %p140
    %p142 = scmp.ne.s32.totalorder %s131, %s134
    %p143 = scmp.eq.s32.totalorder %s16, 1
    %p144 = por %p142, %p143
    %p145 = scmp.ne.s32.totalorder %s134, %s135
    %p146 = scmp.eq.s32.totalorder %s16, 0
    %p147 = por %p145, %p146
    %p148 = scmp.ne.s32.totalorder %s134, %s135
    %p149 = scmp.eq.s32.totalorder %s17, 1
    %p150 = por %p148, %p149
    %p152 = scmp.ne.s32.totalorder %s135, %s151
    %p153 = scmp.eq.s32.totalorder %s17, 0
    %p154 = por %p152, %p153
    %p155 = scmp.le.s32.totalorder 1, %s11
    %p156 = scmp.lt.s32.totalorder %s11, 3
    %p157 = pnand %p155, %p156
    %p158 = pneg %p157
    // Predicated region
    $region9: #{conv1d_into_lstm_forward.7} parent=5 // pred_check
      _
    $region10: #{conv1d_into_lstm_forward.7} parent=5 // pred_check_branch
      %160 = sbr.rel (%p157) target = $region12
    $region11: #{conv1d_into_lstm_forward.7} parent=5 // pred_region
      %s161 = ssub.s32 %s11, 1
      // Predicated region
      $region13: #{conv1d_into_lstm_forward.7} parent=11 // pred_check
        %p162 = pneg %p58
      $region14: #{conv1d_into_lstm_forward.7} parent=11 // pred_check_branch
        %164 = sbr.rel (%p162) target = $region16
      $region15: #{conv1d_into_lstm_forward.7} parent=11 // pred_region
        _
      $region16: #{conv1d_into_lstm_forward.7} parent=11 // pred_fallthru
        _
      // Predicated region
      $region17: #{conv1d_into_lstm_forward.7} parent=11 // pred_check
        %p165 = pneg %p79
      $region18: #{conv1d_into_lstm_forward.7} parent=11 // pred_check_branch
        %167 = sbr.rel (%p165) target = $region20
      $region19: #{conv1d_into_lstm_forward.7} parent=11 // pred_region
        _
      $region20: #{conv1d_into_lstm_forward.7} parent=11 // pred_fallthru
        _
      // Predicated region
      $region21: #{conv1d_into_lstm_forward.7} parent=11 // pred_check
        %p168 = pneg %p100
      $region22: #{conv1d_into_lstm_forward.7} parent=11 // pred_check_branch
        %170 = sbr.rel (%p168) target = $region24
      $region23: #{conv1d_into_lstm_forward.7} parent=11 // pred_region
        _
      $region24: #{conv1d_into_lstm_forward.7} parent=11 // pred_fallthru
        _
      // Predicated region
      $region25: #{conv1d_into_lstm_forward.7} parent=11 // pred_check
        %p171 = pneg %p121
      $region26: #{conv1d_into_lstm_forward.7} parent=11 // pred_check_branch
        %173 = sbr.rel (%p171) target = $region28
      $region27: #{conv1d_into_lstm_forward.7} parent=11 // pred_region
        _
      $region28: #{conv1d_into_lstm_forward.7} parent=11 // pred_fallthru
        _
    $region12: #{conv1d_into_lstm_forward.7} parent=5 // pred_fallthru
      _
    %p174 = scmp.lt.s32.totalorder %s11, 2
    // Predicated region
    $region29: #{conv1d_into_lstm_forward.7} parent=5 // pred_check
      %p175 = pneg %p174
    $region30: #{conv1d_into_lstm_forward.7} parent=5 // pred_check_branch
      %177 = sbr.rel (%p175) target = $region32
    $region31: #{conv1d_into_lstm_forward.7} parent=5 // pred_region
      // Predicated region
      $region33: #{conv1d_into_lstm_forward.7} parent=31 // pred_check
        %p178 = pneg %p31
      $region34: #{conv1d_into_lstm_forward.7} parent=31 // pred_check_branch
        %180 = sbr.rel (%p178) target = $region36
      $region35: #{conv1d_into_lstm_forward.7} parent=31 // pred_region
        %p181 = scmp.lt.s32.totalorder %s11, 1
        %s182 = scalar_select %p181, %s11, 1
        %s183 = smul.addr %s182, 8
        %s184 = scalar_lea.vmem %s0, %s183
      $region36: #{conv1d_into_lstm_forward.7} parent=31 // pred_fallthru
        _
    $region32: #{conv1d_into_lstm_forward.7} parent=5 // pred_fallthru
      _
    %p185 = scmp.le.s32.totalorder 1, %s11
    %p186 = scmp.lt.s32.totalorder %s11, 3
    %p187 = pnand %p185, %p186
    %p188 = pneg %p187
    // Predicated region
    $region37: #{conv1d_into_lstm_forward.7} parent=5 // pred_check
      _
    $region38: #{conv1d_into_lstm_forward.7} parent=5 // pred_check_branch
      %190 = sbr.rel (%p187) target = $region40
    $region39: #{conv1d_into_lstm_forward.7} parent=5 // pred_region
      %s191 = ssub.s32 %s11, 1
      %p192 = scmp.lt.s32.totalorder %s16, 1
      %s193 = scalar_select %p192, %s16, 1
      %s194 = smul.addr %s193, 8
      %s195 = scalar_lea.vmem %s0, %s194
      %p196 = pneg %p37
      %p197 = pneg %p34
      %p198 = pneg %p58
      %p199 = pneg %p55
      %p200 = pneg %p79
      %p201 = pneg %p76
      %p202 = pneg %p100
      %p203 = pneg %p97
      %p204 = pneg %p121
      %p205 = pneg %p118
      %p206 = pneg %p147
      %p207 = pneg %p144
      %p208 = scmp.lt.s32.totalorder %s16, 1
      %s209 = scalar_select %p208, %s16, 1
      %s210 = smul.addr %s209, 4
      %s211 = scalar_lea.vmem %s5, %s210
      %p212 = scmp.lt.s32.totalorder %s16, 1
      %s213 = scalar_select %p212, %s16, 1
      %s214 = smul.addr %s213, 8
      %s215 = scalar_lea.vmem %s0, %s214
      %p216 = scmp.lt.s32.totalorder %s16, 1
      %s217 = scalar_select %p216, %s16, 1
      %s218 = smul.addr %s217, 4
      %s219 = scalar_lea.vmem %s5, %s218
      %v220 = vld [vmem:[%s215] sm:$0xff]
      %222 = vrot.lane.b32.xlu0 %v220, 127
      %v223 = vpop.permute.xlu0 %222
      %225 = vrot.lane.b32.xlu0 %v220, 126
      %v226 = vpop.permute.xlu0 %225
      %v228 = vld [vmem:[%s1] sm:$0xff]
      %v229 = vld [vmem:[%s1 + $0x8] sm:$0xff]
      %v230 = vld [vmem:[%s2] sm:$0xff]
      %v231 = vld [vmem:[%s2 + $0x8] sm:$0xff]
      %233 = vset.pattern.permute.xlu0 0
      %234 = vperm.xlu0 %233, %v230
      %v235 = vpop.permute.xlu0 %234
      %238 = vset.pattern.permute.xlu0 0
      %239 = vperm.xlu0 %238, %v231
      %v240 = vpop.permute.xlu0 %239
      %vm242 = vcmask 195584
      %v244 = vsel %vm242, %v228, 0
      %v247 = vsel %vm242, %v229, 0
      %249 = vmatprep.subr.mxu0 0.0
      %250 = vmatpush1.msra.mxu0 0.0
      %251 = vmatprep.subr.mxu0 0.0
      %252 = vmatpush1.msra.mxu0 0.0
      %253 = vmatprep.subr.mxu0 0.0
      %254 = vmatpush1.msra.mxu0 0.0
      %255 = vmatprep.subr.mxu0 0.0
      %256 = vmatpush1.msra.mxu0 0.0
      %257 = vmatprep.subr.mxu0 0.0
      %258 = vmatpush1.msra.mxu0 0.0
      %259 = vmatprep.subr.mxu0 0.0
      %260 = vmatpush1.msra.mxu0 0.0
      %261 = vmatprep.subr.mxu0 0.0
      %262 = vmatpush1.msra.mxu0 0.0
      %263 = vmatprep.subr.mxu0 0.0
      %264 = vmatpush1.msra.mxu0 0.0
      %265 = vmatprep.subr.mxu0 0.0
      %266 = vmatpush1.msra.mxu0 0.0
      %267 = vmatprep.subr.mxu0 0.0
      %268 = vmatpush1.msra.mxu0 0.0
      %269 = vmatprep.subr.mxu0 0.0
      %270 = vmatpush1.msra.mxu0 0.0
      %271 = vmatprep.subr.mxu0 0.0
      %272 = vmatpush1.msra.mxu0 0.0
      %273 = vmatprep.subr.mxu0 0.0
      %274 = vmatpush1.msra.mxu0 0.0
      %275 = vmatprep.subr.mxu0 0.0
      %276 = vmatpush1.msra.mxu0 %v226
      %277 = vmatprep.subr.mxu0 0.0
      %278 = vmatpush1.msra.mxu0 %v223
      %279 = vmatprep.subr.mxu0 0.0
      %280 = vmatpush1.msra.mxu0 %v220
      %281 = vmatprep.subr.mxu0 0.0
      %282 = vmatpush2.msra.mxu0 0.0
      %283 = vmatprep.subr.mxu0 0.0
      %284 = vmatpush2.msra.mxu0 0.0
      %285 = vmatprep.subr.mxu0 0.0
      %286 = vmatpush2.msra.mxu0 0.0
      %287 = vmatprep.subr.mxu0 0.0
      %288 = vmatpush2.msra.mxu0 0.0
      %289 = vmatprep.subr.mxu0 0.0
      %290 = vmatpush2.msra.mxu0 0.0
      %291 = vmatprep.subr.mxu0 0.0
      %292 = vmatpush2.msra.mxu0 0.0
      %293 = vmatprep.subr.mxu0 0.0
      %294 = vmatpush2.msra.mxu0 0.0
      %295 = vmatprep.subr.mxu0 0.0
      %296 = vmatpush2.msra.mxu0 0.0
      %297 = vmatprep.subr.mxu0 0.0
      %298 = vmatpush2.msra.mxu0 0.0
      %299 = vmatprep.subr.mxu0 0.0
      %300 = vmatpush2.msra.mxu0 0.0
      %301 = vmatprep.subr.mxu0 0.0
      %302 = vmatpush2.msra.mxu0 0.0
      %303 = vmatprep.subr.mxu0 0.0
      %304 = vmatpush2.msra.mxu0 0.0
      %305 = vmatprep.subr.mxu0 0.0
      %306 = vmatpush2.msra.mxu0 0.0
      %307 = vmatprep.subr.mxu0 0.0
      %308 = vmatpush2.msra.mxu0 0.0
      %309 = vmatprep.subr.mxu0 0.0
      %310 = vmatpush2.msra.mxu0 0.0
      %311 = vmatprep.subr.mxu0 0.0
      %312 = vmatpush2.msra.mxu0 0.0
      %313 = vmatprep.mubr.f32.mxu0 0.0
      %314 = vmatmul.mubr.f32.gmra.mxu0 %v244
      %v315 = vpop.f32.mrf.mxu0
      %v316 = vadd.f32 %v235, %v315
      %v317 = vpop.f32.mrf.mxu0
      %318 = vmatprep.mubr.f32.mxu0 0.0
      %319 = vmatmul.mubr.f32.gmra.mxu0 %v247
      %v320 = vpop.f32.mrf.mxu0
      %v321 = vadd.f32 %v240, %v320
      %v322 = vpop.f32.mrf.mxu0
      %323 = vdwg.mxu0
      %v324 = vmax.f32 %v316, 0.0
      %v325 = vmax.f32 %v321, 0.0
      %328 = vrot.lane.b32.xlu0 %v324, 1
      %v329 = vpop.permute.xlu0 %328
      %330 = vrot.lane.b32.xlu0 %v325, 1
      %v331 = vpop.permute.xlu0 %330
      %vm334 = vcmask 7168
      %v335 = vsel %vm334, 0.0, %v329
      %v336 = vsel %vm334, 0.0, %v331
      %vm337 = vcmask 72704
      %v338 = vsel %vm337, %v335, 0.0
      %v339 = vsel %vm337, %v336, 0.0
      %342 = vrot.lane.b32.xlu0 %v338, 127
      %v343 = vpop.permute.xlu0 %342
      %344 = vrot.lane.b32.xlu0 %v339, 127
      %v345 = vpop.permute.xlu0 %344
      %348 = vrot.lane.b32.xlu0 %v338, 126
      %v349 = vpop.permute.xlu0 %348
      %350 = vrot.lane.b32.xlu0 %v339, 126
      %v351 = vpop.permute.xlu0 %350
      %v354 = vld [vmem:[%s3] sm:$0xff]
      %v355 = vld [vmem:[%s3 + $0x8] sm:$0xff]
      %v356 = vld [vmem:[%s4] sm:$0xff]
      %v357 = vld [vmem:[%s4 + $0x8] sm:$0xff]
      %359 = vset.pattern.permute.xlu0 0
      %360 = vperm.xlu0 %359, %v356
      %v361 = vpop.permute.xlu0 %360
      %364 = vset.pattern.permute.xlu0 0
      %365 = vperm.xlu0 %364, %v357
      %v366 = vpop.permute.xlu0 %365
      %vm368 = vcmask 392192
      %v370 = vsel %vm368, %v354, 0
      %v373 = vsel %vm368, %v355, 0
      %375 = vmatprep.subr.mxu0 0.0
      %376 = vmatpush1.msra.mxu0 0.0
      %377 = vmatprep.subr.mxu0 0.0
      %378 = vmatpush1.msra.mxu0 0.0
      %379 = vmatprep.subr.mxu0 0.0
      %380 = vmatpush1.msra.mxu0 0.0
      %381 = vmatprep.subr.mxu0 0.0
      %382 = vmatpush1.msra.mxu0 0.0
      %383 = vmatprep.subr.mxu0 0.0
      %384 = vmatpush1.msra.mxu0 0.0
      %385 = vmatprep.subr.mxu0 0.0
      %386 = vmatpush1.msra.mxu0 0.0
      %387 = vmatprep.subr.mxu0 0.0
      %388 = vmatpush1.msra.mxu0 0.0
      %389 = vmatprep.subr.mxu0 0.0
      %390 = vmatpush1.msra.mxu0 0.0
      %391 = vmatprep.subr.mxu0 0.0
      %392 = vmatpush1.msra.mxu0 0.0
      %393 = vmatprep.subr.mxu0 0.0
      %394 = vmatpush1.msra.mxu0 0.0
      %395 = vmatprep.subr.mxu0 0.0
      %396 = vmatpush1.msra.mxu0 %v351
      %397 = vmatprep.subr.mxu0 0.0
      %398 = vmatpush1.msra.mxu0 %v349
      %399 = vmatprep.subr.mxu0 0.0
      %400 = vmatpush1.msra.mxu0 %v345
      %401 = vmatprep.subr.mxu0 0.0
      %402 = vmatpush1.msra.mxu0 %v343
      %403 = vmatprep.subr.mxu0 0.0
      %404 = vmatpush1.msra.mxu0 %v339
      %405 = vmatprep.subr.mxu0 0.0
      %406 = vmatpush1.msra.mxu0 %v338
      %407 = vmatprep.subr.mxu0 0.0
      %408 = vmatpush2.msra.mxu0 0.0
      %409 = vmatprep.subr.mxu0 0.0
      %410 = vmatpush2.msra.mxu0 0.0
      %411 = vmatprep.subr.mxu0 0.0
      %412 = vmatpush2.msra.mxu0 0.0
      %413 = vmatprep.subr.mxu0 0.0
      %414 = vmatpush2.msra.mxu0 0.0
      %415 = vmatprep.subr.mxu0 0.0
      %416 = vmatpush2.msra.mxu0 0.0
      %417 = vmatprep.subr.mxu0 0.0
      %418 = vmatpush2.msra.mxu0 0.0
      %419 = vmatprep.subr.mxu0 0.0
      %420 = vmatpush2.msra.mxu0 0.0
      %421 = vmatprep.subr.mxu0 0.0
      %422 = vmatpush2.msra.mxu0 0.0
      %423 = vmatprep.subr.mxu0 0.0
      %424 = vmatpush2.msra.mxu0 0.0
      %425 = vmatprep.subr.mxu0 0.0
      %426 = vmatpush2.msra.mxu0 0.0
      %427 = vmatprep.subr.mxu0 0.0
      %428 = vmatpush2.msra.mxu0 0.0
      %429 = vmatprep.subr.mxu0 0.0
      %430 = vmatpush2.msra.mxu0 0.0
      %431 = vmatprep.subr.mxu0 0.0
      %432 = vmatpush2.msra.mxu0 0.0
      %433 = vmatprep.subr.mxu0 0.0
      %434 = vmatpush2.msra.mxu0 0.0
      %435 = vmatprep.subr.mxu0 0.0
      %436 = vmatpush2.msra.mxu0 0.0
      %437 = vmatprep.subr.mxu0 0.0
      %438 = vmatpush2.msra.mxu0 0.0
      %439 = vmatprep.mubr.f32.mxu0 0.0
      %440 = vmatmul.mubr.f32.gmra.mxu0 %v370
      %v441 = vpop.f32.mrf.mxu0
      %v442 = vadd.f32 %v361, %v441
      %v443 = vpop.f32.mrf.mxu0
      %444 = vmatprep.mubr.f32.mxu0 0.0
      %445 = vmatmul.mubr.f32.gmra.mxu0 %v373
      %v446 = vpop.f32.mrf.mxu0
      %v447 = vadd.f32 %v366, %v446
      %v448 = vpop.f32.mrf.mxu0
      %449 = vdwg.mxu0
      %v450 = vmax.f32 %v442, 0.0
      %v451 = vmax.f32 %v447, 0.0
      %454 = vrot.lane.b32.xlu0 %v450, 126
      %v455 = vpop.permute.xlu0 %454
      %456 = vrot.lane.b32.xlu0 %v451, 126
      %v457 = vpop.permute.xlu0 %456
      %460 = vrot.lane.b32.xlu0 %v450, 124
      %v461 = vpop.permute.xlu0 %460
      %462 = vrot.lane.b32.xlu0 %v451, 124
      %v463 = vpop.permute.xlu0 %462
      %466 = vrot.lane.b32.xlu0 %v450, 122
      %v467 = vpop.permute.xlu0 %466
      %468 = vrot.lane.b32.xlu0 %v451, 122
      %v469 = vpop.permute.xlu0 %468
      %v472 = vcombine.low %v450, %v461
      %v473 = vcombine.high %v450, %v461
      %v475 = vunpack.c.l.s4 1983009808
      %v476 = vunpack.c.0.s8 %v475
      %v477 = vlaneseq
      %v478 = vshrl.u32 %v477, 7
      %v479 = vsub.s32 %v476, %v478
      %v480 = vrot.slane %v472, %v479
      %v482 = vunpack.c.l.s4 1983009808
      %v483 = vunpack.c.0.s8 %v482
      %v484 = vlaneseq
      %v485 = vshrl.u32 %v484, 7
      %v486 = vsub.s32 %v483, %v485
      %v487 = vrot.slane %v473, %v486
      %v488 = vcombine.low %v455, %v467
      %v489 = vcombine.high %v455, %v467
      %v491 = vunpack.c.l.s4 1983009808
      %v492 = vunpack.c.0.s8 %v491
      %v493 = vlaneseq
      %v494 = vshrl.u32 %v493, 7
      %v495 = vsub.s32 %v492, %v494
      %v496 = vrot.slane %v488, %v495
      %v498 = vunpack.c.l.s4 1983009808
      %v499 = vunpack.c.0.s8 %v498
      %v500 = vlaneseq
      %v501 = vshrl.u32 %v500, 7
      %v502 = vsub.s32 %v499, %v501
      %v503 = vrot.slane %v489, %v502
      %v504 = vcombine.low %v480, %v496
      %v505 = vcombine.high %v480, %v496
      %v507 = vunpack.c.l.s4 1934713408
      %v508 = vunpack.c.0.s8 %v507
      %v509 = vlaneseq
      %v510 = vshrl.u32 %v509, 7
      %v511 = vsub.s32 %v508, %v510
      %v512 = vrot.slane %v504, %v511
      %v514 = vunpack.c.l.s4 1934713408
      %v515 = vunpack.c.0.s8 %v514
      %v516 = vlaneseq
      %v517 = vshrl.u32 %v516, 7
      %v518 = vsub.s32 %v515, %v517
      %v519 = vrot.slane %v505, %v518
      %v520 = vcombine.low %v487, %v503
      %v521 = vcombine.high %v487, %v503
      %v523 = vunpack.c.l.s4 1934713408
      %v524 = vunpack.c.0.s8 %v523
      %v525 = vlaneseq
      %v526 = vshrl.u32 %v525, 7
      %v527 = vsub.s32 %v524, %v526
      %v528 = vrot.slane %v520, %v527
      %v530 = vunpack.c.l.s4 1934713408
      %v531 = vunpack.c.0.s8 %v530
      %v532 = vlaneseq
      %v533 = vshrl.u32 %v532, 7
      %v534 = vsub.s32 %v531, %v533
      %v535 = vrot.slane %v521, %v534
      %v536 = vcombine.high %v512, 0.0
      %v537 = vcombine.high %v519, 0.0
      %v538 = vcombine.high %v528, 0.0
      %v539 = vcombine.high %v535, 0.0
      %v540 = vcombine.low %v451, %v463
      %v541 = vcombine.high %v451, %v463
      %v543 = vunpack.c.l.s4 1983009808
      %v544 = vunpack.c.0.s8 %v543
      %v545 = vlaneseq
      %v546 = vshrl.u32 %v545, 7
      %v547 = vsub.s32 %v544, %v546
      %v548 = vrot.slane %v540, %v547
      %v550 = vunpack.c.l.s4 1983009808
      %v551 = vunpack.c.0.s8 %v550
      %v552 = vlaneseq
      %v553 = vshrl.u32 %v552, 7
      %v554 = vsub.s32 %v551, %v553
      %v555 = vrot.slane %v541, %v554
      %v556 = vcombine.low %v457, %v469
      %v557 = vcombine.high %v457, %v469
      %v559 = vunpack.c.l.s4 1983009808
      %v560 = vunpack.c.0.s8 %v559
      %v561 = vlaneseq
      %v562 = vshrl.u32 %v561, 7
      %v563 = vsub.s32 %v560, %v562
      %v564 = vrot.slane %v556, %v563
      %v566 = vunpack.c.l.s4 1983009808
      %v567 = vunpack.c.0.s8 %v566
      %v568 = vlaneseq
      %v569 = vshrl.u32 %v568, 7
      %v570 = vsub.s32 %v567, %v569
      %v571 = vrot.slane %v557, %v570
      %v572 = vcombine.low %v548, %v564
      %v573 = vcombine.high %v548, %v564
      %v575 = vunpack.c.l.s4 1934713408
      %v576 = vunpack.c.0.s8 %v575
      %v577 = vlaneseq
      %v578 = vshrl.u32 %v577, 7
      %v579 = vsub.s32 %v576, %v578
      %v580 = vrot.slane %v572, %v579
      %v582 = vunpack.c.l.s4 1934713408
      %v583 = vunpack.c.0.s8 %v582
      %v584 = vlaneseq
      %v585 = vshrl.u32 %v584, 7
      %v586 = vsub.s32 %v583, %v585
      %v587 = vrot.slane %v573, %v586
      %v588 = vcombine.low %v555, %v571
      %v589 = vcombine.high %v555, %v571
      %v591 = vunpack.c.l.s4 1934713408
      %v592 = vunpack.c.0.s8 %v591
      %v593 = vlaneseq
      %v594 = vshrl.u32 %v593, 7
      %v595 = vsub.s32 %v592, %v594
      %v596 = vrot.slane %v588, %v595
      %v598 = vunpack.c.l.s4 1934713408
      %v599 = vunpack.c.0.s8 %v598
      %v600 = vlaneseq
      %v601 = vshrl.u32 %v600, 7
      %v602 = vsub.s32 %v599, %v601
      %v603 = vrot.slane %v589, %v602
      %v604 = vcombine.high %v580, 0.0
      %v605 = vcombine.high %v587, 0.0
      %v606 = vcombine.high %v596, 0.0
      %v607 = vcombine.high %v603, 0.0
      %vm608 = vcmask 11264
      %v609 = vsel %vm608, %v512, -inf
      %610 = vmax.xlane.f32.xlu0 %v609
      %v611 = vpop.xlane.xlu0 %610
      %v612 = vsel %vm608, %v536, -inf
      %613 = vmax.xlane.f32.xlu0 %v612
      %v614 = vpop.xlane.xlu0 %613
      %v615 = vsel %vm608, %v519, -inf
      %616 = vmax.xlane.f32.xlu0 %v615
      %v617 = vpop.xlane.xlu0 %616
      %v618 = vsel %vm608, %v537, -inf
      %619 = vmax.xlane.f32.xlu0 %v618
      %v620 = vpop.xlane.xlu0 %619
      %v621 = vsel %vm608, %v528, -inf
      %622 = vmax.xlane.f32.xlu0 %v621
      %v623 = vpop.xlane.xlu0 %622
      %v624 = vsel %vm608, %v538, -inf
      %625 = vmax.xlane.f32.xlu0 %v624
      %v626 = vpop.xlane.xlu0 %625
      %v627 = vsel %vm608, %v535, -inf
      %628 = vmax.xlane.f32.xlu0 %v627
      %v629 = vpop.xlane.xlu0 %628
      %v630 = vsel %vm608, %v539, -inf
      %631 = vmax.xlane.f32.xlu0 %v630
      %v632 = vpop.xlane.xlu0 %631
      %v633 = vsel %vm608, %v580, -inf
      %634 = vmax.xlane.f32.xlu0 %v633
      %v635 = vpop.xlane.xlu0 %634
      %v636 = vsel %vm608, %v604, -inf
      %637 = vmax.xlane.f32.xlu0 %v636
      %v638 = vpop.xlane.xlu0 %637
      %v639 = vsel %vm608, %v587, -inf
      %640 = vmax.xlane.f32.xlu0 %v639
      %v641 = vpop.xlane.xlu0 %640
      %v642 = vsel %vm608, %v605, -inf
      %643 = vmax.xlane.f32.xlu0 %v642
      %v644 = vpop.xlane.xlu0 %643
      %v645 = vsel %vm608, %v596, -inf
      %646 = vmax.xlane.f32.xlu0 %v645
      %v647 = vpop.xlane.xlu0 %646
      %v648 = vsel %vm608, %v606, -inf
      %649 = vmax.xlane.f32.xlu0 %v648
      %v650 = vpop.xlane.xlu0 %649
      %v651 = vsel %vm608, %v603, -inf
      %652 = vmax.xlane.f32.xlu0 %v651
      %v653 = vpop.xlane.xlu0 %652
      %v654 = vsel %vm608, %v607, -inf
      %655 = vmax.xlane.f32.xlu0 %v654
      %v656 = vpop.xlane.xlu0 %655
      %v673 = vlaneseq
      %v674 = vand.u32 %v673, 127
      %v675 = vlaneseq
      %v676 = vshrl.u32 %v675, 7
      %v677 = vsub.s32 %v674, %v676
      %v678 = vrot.slane %v611, %v677
      %v679 = vlaneseq
      %v680 = vshrl.u32 %v679, 7
      %v681 = vsub.s32 %v674, %v680
      %v682 = vrot.slane %v614, %v681
      %v683 = vlaneseq
      %v684 = vshrl.u32 %v683, 7
      %v685 = vsub.s32 %v674, %v684
      %v686 = vrot.slane %v617, %v685
      %v687 = vlaneseq
      %v688 = vshrl.u32 %v687, 7
      %v689 = vsub.s32 %v674, %v688
      %v690 = vrot.slane %v620, %v689
      %v691 = vlaneseq
      %v692 = vshrl.u32 %v691, 7
      %v693 = vsub.s32 %v674, %v692
      %v694 = vrot.slane %v623, %v693
      %v695 = vlaneseq
      %v696 = vshrl.u32 %v695, 7
      %v697 = vsub.s32 %v674, %v696
      %v698 = vrot.slane %v626, %v697
      %v699 = vlaneseq
      %v700 = vshrl.u32 %v699, 7
      %v701 = vsub.s32 %v674, %v700
      %v702 = vrot.slane %v629, %v701
      %v703 = vlaneseq
      %v704 = vshrl.u32 %v703, 7
      %v705 = vsub.s32 %v674, %v704
      %v706 = vrot.slane %v632, %v705
      %v707 = vlaneseq
      %v708 = vshrl.u32 %v707, 7
      %v709 = vsub.s32 %v674, %v708
      %v710 = vrot.slane %v635, %v709
      %v711 = vlaneseq
      %v712 = vshrl.u32 %v711, 7
      %v713 = vsub.s32 %v674, %v712
      %v714 = vrot.slane %v638, %v713
      %v715 = vlaneseq
      %v716 = vshrl.u32 %v715, 7
      %v717 = vsub.s32 %v674, %v716
      %v718 = vrot.slane %v641, %v717
      %v719 = vlaneseq
      %v720 = vshrl.u32 %v719, 7
      %v721 = vsub.s32 %v674, %v720
      %v722 = vrot.slane %v644, %v721
      %v723 = vlaneseq
      %v724 = vshrl.u32 %v723, 7
      %v725 = vsub.s32 %v674, %v724
      %v726 = vrot.slane %v647, %v725
      %v727 = vlaneseq
      %v728 = vshrl.u32 %v727, 7
      %v729 = vsub.s32 %v674, %v728
      %v730 = vrot.slane %v650, %v729
      %v731 = vlaneseq
      %v732 = vshrl.u32 %v731, 7
      %v733 = vsub.s32 %v674, %v732
      %v734 = vrot.slane %v653, %v733
      %v735 = vlaneseq
      %v736 = vshrl.u32 %v735, 7
      %v737 = vsub.s32 %v674, %v736
      %v738 = vrot.slane %v656, %v737
      %vm739 = vcmask 1041409
      %v740 = vsel %vm739, %v682, %v678
      %vm741 = vcmask 1042434
      %v742 = vsel %vm741, %v686, %v740
      %vm743 = vcmask 1043459
      %v744 = vsel %vm743, %v690, %v742
      %vm745 = vcmask 1044484
      %v746 = vsel %vm745, %v694, %v744
      %vm747 = vcmask 1045509
      %v748 = vsel %vm747, %v698, %v746
      %vm749 = vcmask 1046534
      %v750 = vsel %vm749, %v702, %v748
      %vm751 = vcmask 1047559
      %v752 = vsel %vm751, %v706, %v750
      %v753 = vsel %vm739, %v714, %v710
      %v754 = vsel %vm741, %v718, %v753
      %v755 = vsel %vm743, %v722, %v754
      %v756 = vsel %vm745, %v726, %v755
      %v757 = vsel %vm747, %v730, %v756
      %v758 = vsel %vm749, %v734, %v757
      %v759 = vsel %vm751, %v738, %v758
      %762 = vxpose.xlu0.b32.start [1/16] %v752, 128
      %763 = vxpose.xlu0.b32.cont [2/16] %v759, 128
      %764 = vxpose.xlu0.b32.cont [3/16] 0.0, 128
      %765 = vxpose.xlu0.b32.cont [4/16] 0.0, 128
      %766 = vxpose.xlu0.b32.cont [5/16] 0.0, 128
      %767 = vxpose.xlu0.b32.cont [6/16] 0.0, 128
      %768 = vxpose.xlu0.b32.cont [7/16] 0.0, 128
      %769 = vxpose.xlu0.b32.cont [8/16] 0.0, 128
      %770 = vxpose.xlu0.b32.cont [9/16] 0.0, 128
      %771 = vxpose.xlu0.b32.cont [10/16] 0.0, 128
      %772 = vxpose.xlu0.b32.cont [11/16] 0.0, 128
      %773 = vxpose.xlu0.b32.cont [12/16] 0.0, 128
      %774 = vxpose.xlu0.b32.cont [13/16] 0.0, 128
      %775 = vxpose.xlu0.b32.cont [14/16] 0.0, 128
      %776 = vxpose.xlu0.b32.cont [15/16] 0.0, 128
      %777 = vxpose.xlu0.b32.end [16/16] 0.0, 128
      %v778 = vpop.trf.xlu0
      %v779 = vpop.trf.xlu0
      %v780 = vpop.trf.xlu0
      %v781 = vpop.trf.xlu0
      %v782 = vpop.trf.xlu0
      %v783 = vpop.trf.xlu0
      %v784 = vpop.trf.xlu0
      %v785 = vpop.trf.xlu0
      %v786 = vpop.trf.xlu0
      %v787 = vpop.trf.xlu0
      %v788 = vpop.trf.xlu0
      %v789 = vpop.trf.xlu0
      %v790 = vpop.trf.xlu0
      %v791 = vpop.trf.xlu0
      %v792 = vpop.trf.xlu0
      %v793 = vpop.trf.xlu0
      %vm794 = vcmask 125952
      %795 = vst.msk [vmem:[%s219] sm:$0xf] %vm794, %v778
      %p796 = scmp.lt.s32.totalorder %s16, 1
      %s797 = scalar_select %p796, %s16, 1
      %s798 = smul.addr %s797, 4
      %s799 = scalar_lea.vmem %s5, %s798
      // Predicated region
      $region41: #{conv1d_into_lstm_forward.7} parent=39 // pred_check
        %p800 = pneg %p144
      $region42: #{conv1d_into_lstm_forward.7} parent=39 // pred_check_branch
        %802 = sbr.rel (%p800) target = $region44
      $region43: #{conv1d_into_lstm_forward.7} parent=39 // pred_region
        _
      $region44: #{conv1d_into_lstm_forward.7} parent=39 // pred_fallthru
        _
    $region40: #{conv1d_into_lstm_forward.7} parent=5 // pred_fallthru
      _
    %p803 = scmp.le.s32.totalorder 2, %s11
    // Predicated region
    $region45: #{conv1d_into_lstm_forward.7} parent=5 // pred_check
      %p804 = pneg %p803
    $region46: #{conv1d_into_lstm_forward.7} parent=5 // pred_check_branch
      %806 = sbr.rel (%p804) target = $region48
    $region47: #{conv1d_into_lstm_forward.7} parent=5 // pred_region
      %s807 = ssub.s32 %s11, 2
      // Predicated region
      $region49: #{conv1d_into_lstm_forward.7} parent=47 // pred_check
        %p808 = pneg %p150
      $region50: #{conv1d_into_lstm_forward.7} parent=47 // pred_check_branch
        %810 = sbr.rel (%p808) target = $region52
      $region51: #{conv1d_into_lstm_forward.7} parent=47 // pred_region
        %p811 = scmp.lt.s32.totalorder %s17, 1
        %s812 = scalar_select %p811, %s17, 1
        %s813 = smul.addr %s812, 4
        %s814 = scalar_lea.vmem %s5, %s813
      $region52: #{conv1d_into_lstm_forward.7} parent=47 // pred_fallthru
        _
    $region48: #{conv1d_into_lstm_forward.7} parent=5 // pred_fallthru
      _
  $region6: #{conv1d_into_lstm_forward.7} parent=0 // loop_footer
    %s15 = sadd.s32 1, %s11
  $region7: #{conv1d_into_lstm_forward.7} parent=0 // loop_footer_branch
    %10 = sbr.rel target = $region3
  $region8: #{conv1d_into_lstm_forward.7} parent=0 // loop_exit
    _

// kernel: conv1d_into_lstm_forward.9
$region0: #{conv1d_into_lstm_forward.9}
  #allocation0 [shape = 'u32[]', space=smem, size = 0x4, offset = 0x4, fixed_abs, tag = 'smem constant byte address 0x4 - core index']
  #allocation1 [shape = 'u32[144,128]{1,0:T(1,128)}', space=vmem, size = 0x12000, scoped, tag = 'internal scratch']
  #allocation2 [shape = 'f32[2,32]{1,0:T(2,128)}', space=vmem, size = 0x400, scoped, tag = 'scratch operand']
  #allocation3 [shape = 'f32[2,32]{1,0:T(2,128)}', space=vmem, size = 0x400, scoped, tag = 'scratch operand']
  %s0 = inlined_call_operand.vmem [shape: f32[2,4,128], index: 0, kind: input, shape index: {}]
  %s1 = inlined_call_operand.vmem [shape: f32[32,128], index: 1, kind: input, shape index: {}]
  %s2 = inlined_call_operand.vmem [shape: f32[2,4,32], index: 2, kind: output, shape index: {}]
  %s3 = sld [smem:[#allocation0]]
  $region22: #{conv1d_into_lstm_forward.9} parent=0
    _
  %s5 = ssub.s32 1, %s3
  %s6 = scalar_select 0, %s5, %s3
  // Predicated region
  $region2: #{conv1d_into_lstm_forward.9} parent=0 // pred_check
    _
  $region3: #{conv1d_into_lstm_forward.9} parent=0 // pred_check_branch
    %8 = sbr.rel (0) target = $region5
  $region4: #{conv1d_into_lstm_forward.9} parent=0 // pred_region
    _
  $region5: #{conv1d_into_lstm_forward.9} parent=0 // pred_fallthru
    _
  // Predicated region
  $region6: #{conv1d_into_lstm_forward.9} parent=0 // pred_check
    _
  $region7: #{conv1d_into_lstm_forward.9} parent=0 // pred_check_branch
    %10 = sbr.rel (0) target = $region9
  $region8: #{conv1d_into_lstm_forward.9} parent=0 // pred_region
    _
  $region9: #{conv1d_into_lstm_forward.9} parent=0 // pred_fallthru
    _
  %p11 = scmp.eq.s32.totalorder 0, 0
  // Predicated region
  $region10: #{conv1d_into_lstm_forward.9} parent=0 // pred_check
    %p12 = pneg %p11
  $region11: #{conv1d_into_lstm_forward.9} parent=0 // pred_check_branch
    %14 = sbr.rel (%p12) target = $region13
  $region12: #{conv1d_into_lstm_forward.9} parent=0 // pred_region
    %vm15 = vcmask 254976
    %16 = vst.msk [vmem:[#allocation2] sm:$0x3] %vm15, 0.0
    %17 = vst.msk [vmem:[#allocation3] sm:$0x3] %vm15, 0.0
  $region13: #{conv1d_into_lstm_forward.9} parent=0 // pred_fallthru
    _
  %v18 = vld [vmem:[#allocation2] sm:$0x3]
  %v19 = vld [vmem:[#allocation3] sm:$0x3]
  %v20 = vld [vmem:[%s1] sm:$0xff]
  %v21 = vld [vmem:[%s1 + $0x8] sm:$0xff]
  %v22 = vld [vmem:[%s1 + $0x10] sm:$0xff]
  %v23 = vld [vmem:[%s1 + $0x18] sm:$0xff]
  %v24 = vld [vmem:[%s0] sm:$0x1]
  %v25 = vld [vmem:[%s0 + $0x4] sm:$0x1]
  %vm26 = vcmask 261120
  %v28 = vsel %vm26, %v18, 0
  %30 = vmatprep.subr.mxu0 0.0
  %31 = vmatpush1.msra.mxu0 0.0
  %32 = vmatprep.subr.mxu0 0.0
  %33 = vmatpush1.msra.mxu0 0.0
  %34 = vmatprep.subr.mxu0 0.0
  %35 = vmatpush1.msra.mxu0 0.0
  %36 = vmatprep.subr.mxu0 0.0
  %37 = vmatpush1.msra.mxu0 0.0
  %38 = vmatprep.subr.mxu0 0.0
  %39 = vmatpush1.msra.mxu0 0.0
  %40 = vmatprep.subr.mxu0 0.0
  %41 = vmatpush1.msra.mxu0 0.0
  %42 = vmatprep.subr.mxu0 0.0
  %43 = vmatpush1.msra.mxu0 0.0
  %44 = vmatprep.subr.mxu0 0.0
  %45 = vmatpush1.msra.mxu0 0.0
  %46 = vmatprep.subr.mxu0 0.0
  %47 = vmatpush1.msra.mxu0 0.0
  %48 = vmatprep.subr.mxu0 0.0
  %49 = vmatpush1.msra.mxu0 0.0
  %50 = vmatprep.subr.mxu0 0.0
  %51 = vmatpush1.msra.mxu0 0.0
  %52 = vmatprep.subr.mxu0 0.0
  %53 = vmatpush1.msra.mxu0 0.0
  %54 = vmatprep.subr.mxu0 0.0
  %55 = vmatpush1.msra.mxu0 %v23
  %56 = vmatprep.subr.mxu0 0.0
  %57 = vmatpush1.msra.mxu0 %v22
  %58 = vmatprep.subr.mxu0 0.0
  %59 = vmatpush1.msra.mxu0 %v21
  %60 = vmatprep.subr.mxu0 0.0
  %61 = vmatpush1.msra.mxu0 %v20
  %62 = vmatprep.subr.mxu0 0.0
  %63 = vmatpush2.msra.mxu0 0.0
  %64 = vmatprep.subr.mxu0 0.0
  %65 = vmatpush2.msra.mxu0 0.0
  %66 = vmatprep.subr.mxu0 0.0
  %67 = vmatpush2.msra.mxu0 0.0
  %68 = vmatprep.subr.mxu0 0.0
  %69 = vmatpush2.msra.mxu0 0.0
  %70 = vmatprep.subr.mxu0 0.0
  %71 = vmatpush2.msra.mxu0 0.0
  %72 = vmatprep.subr.mxu0 0.0
  %73 = vmatpush2.msra.mxu0 0.0
  %74 = vmatprep.subr.mxu0 0.0
  %75 = vmatpush2.msra.mxu0 0.0
  %76 = vmatprep.subr.mxu0 0.0
  %77 = vmatpush2.msra.mxu0 0.0
  %78 = vmatprep.subr.mxu0 0.0
  %79 = vmatpush2.msra.mxu0 0.0
  %80 = vmatprep.subr.mxu0 0.0
  %81 = vmatpush2.msra.mxu0 0.0
  %82 = vmatprep.subr.mxu0 0.0
  %83 = vmatpush2.msra.mxu0 0.0
  %84 = vmatprep.subr.mxu0 0.0
  %85 = vmatpush2.msra.mxu0 0.0
  %86 = vmatprep.subr.mxu0 0.0
  %87 = vmatpush2.msra.mxu0 0.0
  %88 = vmatprep.subr.mxu0 0.0
  %89 = vmatpush2.msra.mxu0 0.0
  %90 = vmatprep.subr.mxu0 0.0
  %91 = vmatpush2.msra.mxu0 0.0
  %92 = vmatprep.subr.mxu0 0.0
  %93 = vmatpush2.msra.mxu0 0.0
  %94 = vmatprep.mubr.f32.mxu0 0.0
  %95 = vmatmul.mubr.f32.gmra.mxu0 %v28
  %v96 = vpop.f32.mrf.mxu0
  %v97 = vadd.f32 0.0, %v96
  %v98 = vpop.f32.mrf.mxu0
  %99 = vdwg.mxu0
  %v101 = vrot.slane %v97, 1
  %v104 = vadd.f32 %v24, %v97
  %v105 = vadd.f32 %v25, %v101
  %v106 = vxor.u32 %v104, 2147483648
  %v107 = vxor.u32 %v105, 2147483648
  %v108 = vmul.f32 %v106, 1.442695
  %v109 = vpow.pop %v108
  %v110 = vmul.f32 %v107, 1.442695
  %v111 = vpow.pop %v110
  %v112 = vadd.f32 %v109, 1.0
  %v113 = vadd.f32 %v111, 1.0
  %v114 = vrcp.pop %v112
  %v115 = vmul.f32 1.0, %v114
  %v116 = vrcp.pop %v113
  %v117 = vmul.f32 1.0, %v116
  %v118 = vtanh.pop %v104
  %v119 = vtanh.pop %v105
  %v121 = vrot.slane %v19, 1
  %122 = vrot.lane.b32.xlu0 %v19, 32
  %v123 = vpop.permute.xlu0 %122
  %124 = vrot.lane.b32.xlu0 %v121, 32
  %v125 = vpop.permute.xlu0 %124
  %v128 = vmul.f32 %v115, %v123
  %v129 = vmul.f32 %v117, %v125
  %132 = vrot.lane.b32.xlu0 %v118, 64
  %v133 = vpop.permute.xlu0 %132
  %134 = vrot.lane.b32.xlu0 %v119, 64
  %v135 = vpop.permute.xlu0 %134
  %v138 = vmul.f32 %v115, %v133
  %v139 = vmul.f32 %v117, %v135
  %142 = vrot.lane.b32.xlu0 %v138, 32
  %v143 = vpop.permute.xlu0 %142
  %144 = vrot.lane.b32.xlu0 %v139, 32
  %v145 = vpop.permute.xlu0 %144
  %v148 = vadd.f32 %v128, %v143
  %v149 = vadd.f32 %v129, %v145
  %v150 = vtanh.pop %v148
  %v151 = vtanh.pop %v149
  %154 = vrot.lane.b32.xlu0 %v150, 64
  %v155 = vpop.permute.xlu0 %154
  %156 = vrot.lane.b32.xlu0 %v151, 64
  %v157 = vpop.permute.xlu0 %156
  %v160 = vmul.f32 %v115, %v155
  %v161 = vmul.f32 %v117, %v157
  %164 = vrot.lane.b32.xlu0 %v160, 32
  %v165 = vpop.permute.xlu0 %164
  %166 = vrot.lane.b32.xlu0 %v161, 32
  %v167 = vpop.permute.xlu0 %166
  %vm170 = vcmask 253952
  %171 = vst.msk [vmem:[%s2] sm:$0x1] %vm170, %v165
  %172 = vst.msk [vmem:[%s2 + $0x4] sm:$0x1] %vm170, %v167
  %v173 = vld [vmem:[%s0 + $0x1] sm:$0x1]
  %v174 = vld [vmem:[%s0 + $0x5] sm:$0x1]
  %v175 = vrot.slane %v161, 7
  %vm176 = vcmask 1041409
  %v177 = vsel %vm176, %v175, %v160
  %178 = vrot.lane.b32.xlu0 %v177, 32
  %v179 = vpop.permute.xlu0 %178
  %v180 = vsel %vm26, %v179, 0
  %182 = vmatprep.subr.mxu0 0.0
  %183 = vmatpush1.msra.mxu0 0.0
  %184 = vmatprep.subr.mxu0 0.0
  %185 = vmatpush1.msra.mxu0 0.0
  %186 = vmatprep.subr.mxu0 0.0
  %187 = vmatpush1.msra.mxu0 0.0
  %188 = vmatprep.subr.mxu0 0.0
  %189 = vmatpush1.msra.mxu0 0.0
  %190 = vmatprep.subr.mxu0 0.0
  %191 = vmatpush1.msra.mxu0 0.0
  %192 = vmatprep.subr.mxu0 0.0
  %193 = vmatpush1.msra.mxu0 0.0
  %194 = vmatprep.subr.mxu0 0.0
  %195 = vmatpush1.msra.mxu0 0.0
  %196 = vmatprep.subr.mxu0 0.0
  %197 = vmatpush1.msra.mxu0 0.0
  %198 = vmatprep.subr.mxu0 0.0
  %199 = vmatpush1.msra.mxu0 0.0
  %200 = vmatprep.subr.mxu0 0.0
  %201 = vmatpush1.msra.mxu0 0.0
  %202 = vmatprep.subr.mxu0 0.0
  %203 = vmatpush1.msra.mxu0 0.0
  %204 = vmatprep.subr.mxu0 0.0
  %205 = vmatpush1.msra.mxu0 0.0
  %206 = vmatprep.subr.mxu0 0.0
  %207 = vmatpush1.msra.mxu0 %v23
  %208 = vmatprep.subr.mxu0 0.0
  %209 = vmatpush1.msra.mxu0 %v22
  %210 = vmatprep.subr.mxu0 0.0
  %211 = vmatpush1.msra.mxu0 %v21
  %212 = vmatprep.subr.mxu0 0.0
  %213 = vmatpush1.msra.mxu0 %v20
  %214 = vmatprep.subr.mxu0 0.0
  %215 = vmatpush2.msra.mxu0 0.0
  %216 = vmatprep.subr.mxu0 0.0
  %217 = vmatpush2.msra.mxu0 0.0
  %218 = vmatprep.subr.mxu0 0.0
  %219 = vmatpush2.msra.mxu0 0.0
  %220 = vmatprep.subr.mxu0 0.0
  %221 = vmatpush2.msra.mxu0 0.0
  %222 = vmatprep.subr.mxu0 0.0
  %223 = vmatpush2.msra.mxu0 0.0
  %224 = vmatprep.subr.mxu0 0.0
  %225 = vmatpush2.msra.mxu0 0.0
  %226 = vmatprep.subr.mxu0 0.0
  %227 = vmatpush2.msra.mxu0 0.0
  %228 = vmatprep.subr.mxu0 0.0
  %229 = vmatpush2.msra.mxu0 0.0
  %230 = vmatprep.subr.mxu0 0.0
  %231 = vmatpush2.msra.mxu0 0.0
  %232 = vmatprep.subr.mxu0 0.0
  %233 = vmatpush2.msra.mxu0 0.0
  %234 = vmatprep.subr.mxu0 0.0
  %235 = vmatpush2.msra.mxu0 0.0
  %236 = vmatprep.subr.mxu0 0.0
  %237 = vmatpush2.msra.mxu0 0.0
  %238 = vmatprep.subr.mxu0 0.0
  %239 = vmatpush2.msra.mxu0 0.0
  %240 = vmatprep.subr.mxu0 0.0
  %241 = vmatpush2.msra.mxu0 0.0
  %242 = vmatprep.subr.mxu0 0.0
  %243 = vmatpush2.msra.mxu0 0.0
  %244 = vmatprep.subr.mxu0 0.0
  %245 = vmatpush2.msra.mxu0 0.0
  %246 = vmatprep.mubr.f32.mxu0 0.0
  %247 = vmatmul.mubr.f32.gmra.mxu0 %v180
  %v248 = vpop.f32.mrf.mxu0
  %v249 = vadd.f32 0.0, %v248
  %v250 = vpop.f32.mrf.mxu0
  %251 = vdwg.mxu0
  %v253 = vrot.slane %v249, 1
  %v256 = vadd.f32 %v173, %v249
  %v257 = vadd.f32 %v174, %v253
  %v258 = vxor.u32 %v256, 2147483648
  %v259 = vxor.u32 %v257, 2147483648
  %v260 = vmul.f32 %v258, 1.442695
  %v261 = vpow.pop %v260
  %v262 = vmul.f32 %v259, 1.442695
  %v263 = vpow.pop %v262
  %v264 = vadd.f32 %v261, 1.0
  %v265 = vadd.f32 %v263, 1.0
  %v266 = vrcp.pop %v264
  %v267 = vmul.f32 1.0, %v266
  %v268 = vrcp.pop %v265
  %v269 = vmul.f32 1.0, %v268
  %v270 = vtanh.pop %v256
  %v271 = vtanh.pop %v257
  %v272 = vmul.f32 %v267, %v148
  %v273 = vmul.f32 %v269, %v149
  %276 = vrot.lane.b32.xlu0 %v270, 64
  %v277 = vpop.permute.xlu0 %276
  %278 = vrot.lane.b32.xlu0 %v271, 64
  %v279 = vpop.permute.xlu0 %278
  %v282 = vmul.f32 %v267, %v277
  %v283 = vmul.f32 %v269, %v279
  %286 = vrot.lane.b32.xlu0 %v282, 32
  %v287 = vpop.permute.xlu0 %286
  %288 = vrot.lane.b32.xlu0 %v283, 32
  %v289 = vpop.permute.xlu0 %288
  %v292 = vadd.f32 %v272, %v287
  %v293 = vadd.f32 %v273, %v289
  %v294 = vtanh.pop %v292
  %v295 = vtanh.pop %v293
  %298 = vrot.lane.b32.xlu0 %v294, 64
  %v299 = vpop.permute.xlu0 %298
  %300 = vrot.lane.b32.xlu0 %v295, 64
  %v301 = vpop.permute.xlu0 %300
  %v304 = vmul.f32 %v267, %v299
  %v305 = vmul.f32 %v269, %v301
  %308 = vrot.lane.b32.xlu0 %v304, 32
  %v309 = vpop.permute.xlu0 %308
  %310 = vrot.lane.b32.xlu0 %v305, 32
  %v311 = vpop.permute.xlu0 %310
  %314 = vst.msk [vmem:[%s2 + $0x1] sm:$0x1] %vm170, %v309
  %315 = vst.msk [vmem:[%s2 + $0x5] sm:$0x1] %vm170, %v311
  %v316 = vld [vmem:[%s0 + $0x2] sm:$0x1]
  %v317 = vld [vmem:[%s0 + $0x6] sm:$0x1]
  %v318 = vrot.slane %v305, 7
  %v319 = vsel %vm176, %v318, %v304
  %320 = vrot.lane.b32.xlu0 %v319, 32
  %v321 = vpop.permute.xlu0 %320
  %v322 = vsel %vm26, %v321, 0
  %324 = vmatprep.subr.mxu0 0.0
  %325 = vmatpush1.msra.mxu0 0.0
  %326 = vmatprep.subr.mxu0 0.0
  %327 = vmatpush1.msra.mxu0 0.0
  %328 = vmatprep.subr.mxu0 0.0
  %329 = vmatpush1.msra.mxu0 0.0
  %330 = vmatprep.subr.mxu0 0.0
  %331 = vmatpush1.msra.mxu0 0.0
  %332 = vmatprep.subr.mxu0 0.0
  %333 = vmatpush1.msra.mxu0 0.0
  %334 = vmatprep.subr.mxu0 0.0
  %335 = vmatpush1.msra.mxu0 0.0
  %336 = vmatprep.subr.mxu0 0.0
  %337 = vmatpush1.msra.mxu0 0.0
  %338 = vmatprep.subr.mxu0 0.0
  %339 = vmatpush1.msra.mxu0 0.0
  %340 = vmatprep.subr.mxu0 0.0
  %341 = vmatpush1.msra.mxu0 0.0
  %342 = vmatprep.subr.mxu0 0.0
  %343 = vmatpush1.msra.mxu0 0.0
  %344 = vmatprep.subr.mxu0 0.0
  %345 = vmatpush1.msra.mxu0 0.0
  %346 = vmatprep.subr.mxu0 0.0
  %347 = vmatpush1.msra.mxu0 0.0
  %348 = vmatprep.subr.mxu0 0.0
  %349 = vmatpush1.msra.mxu0 %v23
  %350 = vmatprep.subr.mxu0 0.0
  %351 = vmatpush1.msra.mxu0 %v22
  %352 = vmatprep.subr.mxu0 0.0
  %353 = vmatpush1.msra.mxu0 %v21
  %354 = vmatprep.subr.mxu0 0.0
  %355 = vmatpush1.msra.mxu0 %v20
  %356 = vmatprep.subr.mxu0 0.0
  %357 = vmatpush2.msra.mxu0 0.0
  %358 = vmatprep.subr.mxu0 0.0
  %359 = vmatpush2.msra.mxu0 0.0
  %360 = vmatprep.subr.mxu0 0.0
  %361 = vmatpush2.msra.mxu0 0.0
  %362 = vmatprep.subr.mxu0 0.0
  %363 = vmatpush2.msra.mxu0 0.0
  %364 = vmatprep.subr.mxu0 0.0
  %365 = vmatpush2.msra.mxu0 0.0
  %366 = vmatprep.subr.mxu0 0.0
  %367 = vmatpush2.msra.mxu0 0.0
  %368 = vmatprep.subr.mxu0 0.0
  %369 = vmatpush2.msra.mxu0 0.0
  %370 = vmatprep.subr.mxu0 0.0
  %371 = vmatpush2.msra.mxu0 0.0
  %372 = vmatprep.subr.mxu0 0.0
  %373 = vmatpush2.msra.mxu0 0.0
  %374 = vmatprep.subr.mxu0 0.0
  %375 = vmatpush2.msra.mxu0 0.0
  %376 = vmatprep.subr.mxu0 0.0
  %377 = vmatpush2.msra.mxu0 0.0
  %378 = vmatprep.subr.mxu0 0.0
  %379 = vmatpush2.msra.mxu0 0.0
  %380 = vmatprep.subr.mxu0 0.0
  %381 = vmatpush2.msra.mxu0 0.0
  %382 = vmatprep.subr.mxu0 0.0
  %383 = vmatpush2.msra.mxu0 0.0
  %384 = vmatprep.subr.mxu0 0.0
  %385 = vmatpush2.msra.mxu0 0.0
  %386 = vmatprep.subr.mxu0 0.0
  %387 = vmatpush2.msra.mxu0 0.0
  %388 = vmatprep.mubr.f32.mxu0 0.0
  %389 = vmatmul.mubr.f32.gmra.mxu0 %v322
  %v390 = vpop.f32.mrf.mxu0
  %v391 = vadd.f32 0.0, %v390
  %v392 = vpop.f32.mrf.mxu0
  %393 = vdwg.mxu0
  %v395 = vrot.slane %v391, 1
  %v398 = vadd.f32 %v316, %v391
  %v399 = vadd.f32 %v317, %v395
  %v400 = vxor.u32 %v398, 2147483648
  %v401 = vxor.u32 %v399, 2147483648
  %v402 = vmul.f32 %v400, 1.442695
  %v403 = vpow.pop %v402
  %v404 = vmul.f32 %v401, 1.442695
  %v405 = vpow.pop %v404
  %v406 = vadd.f32 %v403, 1.0
  %v407 = vadd.f32 %v405, 1.0
  %v408 = vrcp.pop %v406
  %v409 = vmul.f32 1.0, %v408
  %v410 = vrcp.pop %v407
  %v411 = vmul.f32 1.0, %v410
  %v412 = vtanh.pop %v398
  %v413 = vtanh.pop %v399
  %v414 = vmul.f32 %v409, %v292
  %v415 = vmul.f32 %v411, %v293
  %418 = vrot.lane.b32.xlu0 %v412, 64
  %v419 = vpop.permute.xlu0 %418
  %420 = vrot.lane.b32.xlu0 %v413, 64
  %v421 = vpop.permute.xlu0 %420
  %v424 = vmul.f32 %v409, %v419
  %v425 = vmul.f32 %v411, %v421
  %428 = vrot.lane.b32.xlu0 %v424, 32
  %v429 = vpop.permute.xlu0 %428
  %430 = vrot.lane.b32.xlu0 %v425, 32
  %v431 = vpop.permute.xlu0 %430
  %v434 = vadd.f32 %v414, %v429
  %v435 = vadd.f32 %v415, %v431
  %v436 = vtanh.pop %v434
  %v437 = vtanh.pop %v435
  %440 = vrot.lane.b32.xlu0 %v436, 64
  %v441 = vpop.permute.xlu0 %440
  %442 = vrot.lane.b32.xlu0 %v437, 64
  %v443 = vpop.permute.xlu0 %442
  %v446 = vmul.f32 %v409, %v441
  %v447 = vmul.f32 %v411, %v443
  %450 = vrot.lane.b32.xlu0 %v446, 32
  %v451 = vpop.permute.xlu0 %450
  %452 = vrot.lane.b32.xlu0 %v447, 32
  %v453 = vpop.permute.xlu0 %452
  %456 = vst.msk [vmem:[%s2 + $0x2] sm:$0x1] %vm170, %v451
  %457 = vst.msk [vmem:[%s2 + $0x6] sm:$0x1] %vm170, %v453
  %v458 = vld [vmem:[%s0 + $0x3] sm:$0x1]
  %v459 = vld [vmem:[%s0 + $0x7] sm:$0x1]
  %v460 = vrot.slane %v447, 7
  %v461 = vsel %vm176, %v460, %v446
  %462 = vrot.lane.b32.xlu0 %v461, 32
  %v463 = vpop.permute.xlu0 %462
  %v464 = vsel %vm26, %v463, 0
  %466 = vmatprep.subr.mxu0 0.0
  %467 = vmatpush1.msra.mxu0 0.0
  %468 = vmatprep.subr.mxu0 0.0
  %469 = vmatpush1.msra.mxu0 0.0
  %470 = vmatprep.subr.mxu0 0.0
  %471 = vmatpush1.msra.mxu0 0.0
  %472 = vmatprep.subr.mxu0 0.0
  %473 = vmatpush1.msra.mxu0 0.0
  %474 = vmatprep.subr.mxu0 0.0
  %475 = vmatpush1.msra.mxu0 0.0
  %476 = vmatprep.subr.mxu0 0.0
  %477 = vmatpush1.msra.mxu0 0.0
  %478 = vmatprep.subr.mxu0 0.0
  %479 = vmatpush1.msra.mxu0 0.0
  %480 = vmatprep.subr.mxu0 0.0
  %481 = vmatpush1.msra.mxu0 0.0
  %482 = vmatprep.subr.mxu0 0.0
  %483 = vmatpush1.msra.mxu0 0.0
  %484 = vmatprep.subr.mxu0 0.0
  %485 = vmatpush1.msra.mxu0 0.0
  %486 = vmatprep.subr.mxu0 0.0
  %487 = vmatpush1.msra.mxu0 0.0
  %488 = vmatprep.subr.mxu0 0.0
  %489 = vmatpush1.msra.mxu0 0.0
  %490 = vmatprep.subr.mxu0 0.0
  %491 = vmatpush1.msra.mxu0 %v23
  %492 = vmatprep.subr.mxu0 0.0
  %493 = vmatpush1.msra.mxu0 %v22
  %494 = vmatprep.subr.mxu0 0.0
  %495 = vmatpush1.msra.mxu0 %v21
  %496 = vmatprep.subr.mxu0 0.0
  %497 = vmatpush1.msra.mxu0 %v20
  %498 = vmatprep.subr.mxu0 0.0
  %499 = vmatpush2.msra.mxu0 0.0
  %500 = vmatprep.subr.mxu0 0.0
  %501 = vmatpush2.msra.mxu0 0.0
  %502 = vmatprep.subr.mxu0 0.0
  %503 = vmatpush2.msra.mxu0 0.0
  %504 = vmatprep.subr.mxu0 0.0
  %505 = vmatpush2.msra.mxu0 0.0
  %506 = vmatprep.subr.mxu0 0.0
  %507 = vmatpush2.msra.mxu0 0.0
  %508 = vmatprep.subr.mxu0 0.0
  %509 = vmatpush2.msra.mxu0 0.0
  %510 = vmatprep.subr.mxu0 0.0
  %511 = vmatpush2.msra.mxu0 0.0
  %512 = vmatprep.subr.mxu0 0.0
  %513 = vmatpush2.msra.mxu0 0.0
  %514 = vmatprep.subr.mxu0 0.0
  %515 = vmatpush2.msra.mxu0 0.0
  %516 = vmatprep.subr.mxu0 0.0
  %517 = vmatpush2.msra.mxu0 0.0
  %518 = vmatprep.subr.mxu0 0.0
  %519 = vmatpush2.msra.mxu0 0.0
  %520 = vmatprep.subr.mxu0 0.0
  %521 = vmatpush2.msra.mxu0 0.0
  %522 = vmatprep.subr.mxu0 0.0
  %523 = vmatpush2.msra.mxu0 0.0
  %524 = vmatprep.subr.mxu0 0.0
  %525 = vmatpush2.msra.mxu0 0.0
  %526 = vmatprep.subr.mxu0 0.0
  %527 = vmatpush2.msra.mxu0 0.0
  %528 = vmatprep.subr.mxu0 0.0
  %529 = vmatpush2.msra.mxu0 0.0
  %530 = vmatprep.mubr.f32.mxu0 0.0
  %531 = vmatmul.mubr.f32.gmra.mxu0 %v464
  %v532 = vpop.f32.mrf.mxu0
  %v533 = vadd.f32 0.0, %v532
  %v534 = vpop.f32.mrf.mxu0
  %535 = vdwg.mxu0
  %v537 = vrot.slane %v533, 1
  %v540 = vadd.f32 %v458, %v533
  %v541 = vadd.f32 %v459, %v537
  %v542 = vxor.u32 %v540, 2147483648
  %v543 = vxor.u32 %v541, 2147483648
  %v544 = vmul.f32 %v542, 1.442695
  %v545 = vpow.pop %v544
  %v546 = vmul.f32 %v543, 1.442695
  %v547 = vpow.pop %v546
  %v548 = vadd.f32 %v545, 1.0
  %v549 = vadd.f32 %v547, 1.0
  %v550 = vrcp.pop %v548
  %v551 = vmul.f32 1.0, %v550
  %v552 = vrcp.pop %v549
  %v553 = vmul.f32 1.0, %v552
  %v554 = vtanh.pop %v540
  %v555 = vtanh.pop %v541
  %v556 = vmul.f32 %v551, %v434
  %v557 = vmul.f32 %v553, %v435
  %560 = vrot.lane.b32.xlu0 %v554, 64
  %v561 = vpop.permute.xlu0 %560
  %562 = vrot.lane.b32.xlu0 %v555, 64
  %v563 = vpop.permute.xlu0 %562
  %v566 = vmul.f32 %v551, %v561
  %v567 = vmul.f32 %v553, %v563
  %570 = vrot.lane.b32.xlu0 %v566, 32
  %v571 = vpop.permute.xlu0 %570
  %572 = vrot.lane.b32.xlu0 %v567, 32
  %v573 = vpop.permute.xlu0 %572
  %v576 = vadd.f32 %v556, %v571
  %v577 = vadd.f32 %v557, %v573
  %v578 = vtanh.pop %v576
  %v579 = vtanh.pop %v577
  %582 = vrot.lane.b32.xlu0 %v578, 64
  %v583 = vpop.permute.xlu0 %582
  %584 = vrot.lane.b32.xlu0 %v579, 64
  %v585 = vpop.permute.xlu0 %584
  %v588 = vmul.f32 %v551, %v583
  %v589 = vmul.f32 %v553, %v585
  %592 = vrot.lane.b32.xlu0 %v588, 32
  %v593 = vpop.permute.xlu0 %592
  %594 = vrot.lane.b32.xlu0 %v589, 32
  %v595 = vpop.permute.xlu0 %594
  %598 = vst.msk [vmem:[%s2 + $0x3] sm:$0x1] %vm170, %v593
  %599 = vst.msk [vmem:[%s2 + $0x7] sm:$0x1] %vm170, %v595
  %v600 = vrot.slane %v589, 7
  %v601 = vsel %vm176, %v600, %v588
  %602 = vrot.lane.b32.xlu0 %v601, 32
  %v603 = vpop.permute.xlu0 %602
  %vm605 = vcmask 254976
  %606 = vst.msk [vmem:[#allocation2] sm:$0x3] %vm605, %v603
  %v609 = vrot.slane %v577, 7
  %v610 = vsel %vm176, %v609, %v576
  %611 = vrot.lane.b32.xlu0 %v610, 96
  %v612 = vpop.permute.xlu0 %611
  %614 = vst.msk [vmem:[#allocation3] sm:$0x3] %vm605, %v612
  // Predicated region
  $region14: #{conv1d_into_lstm_forward.9} parent=0 // pred_check
    _
  $region15: #{conv1d_into_lstm_forward.9} parent=0 // pred_check_branch
    %616 = sbr.rel (0) target = $region17
  $region16: #{conv1d_into_lstm_forward.9} parent=0 // pred_region
    _
  $region17: #{conv1d_into_lstm_forward.9} parent=0 // pred_fallthru
    _
  // Predicated region
  $region18: #{conv1d_into_lstm_forward.9} parent=0 // pred_check
    _
  $region19: #{conv1d_into_lstm_forward.9} parent=0 // pred_check_branch
    %618 = sbr.rel (0) target = $region21
  $region20: #{conv1d_into_lstm_forward.9} parent=0 // pred_region
    _
  $region21: #{conv1d_into_lstm_forward.9} parent=0 // pred_fallthru
    _

// kernel: conv1d_into_lstm_forward.10
$region0: #{conv1d_into_lstm_forward.10}
  #allocation0 [shape = 'u32[]', space=smem, size = 0x4, offset = 0x4, fixed_abs, tag = 'smem constant byte address 0x4 - core index']
  #allocation1 [shape = 'u32[144,128]{1,0:T(1,128)}', space=vmem, size = 0x12000, scoped, tag = 'internal scratch']
  %s0 = inlined_call_operand.vmem [shape: f32[8,32], index: 0, kind: input, shape index: {}]
  %s1 = inlined_call_operand.vmem [shape: f32[32,128], index: 1, kind: input, shape index: {}]
  %s2 = inlined_call_operand.vmem [shape: f32[1,128], index: 2, kind: input, shape index: {}]
  %s3 = inlined_call_operand.vmem [shape: f32[8,128], index: 3, kind: output, shape index: {}]
  %s4 = sld [smem:[#allocation0]]
  $region22: #{conv1d_into_lstm_forward.10} parent=0
    _
  %s6 = ssub.s32 1, %s4
  %s7 = scalar_select 0, %s6, %s4
  // Predicated region
  $region2: #{conv1d_into_lstm_forward.10} parent=0 // pred_check
    _
  $region3: #{conv1d_into_lstm_forward.10} parent=0 // pred_check_branch
    %9 = sbr.rel (0) target = $region5
  $region4: #{conv1d_into_lstm_forward.10} parent=0 // pred_region
    _
  $region5: #{conv1d_into_lstm_forward.10} parent=0 // pred_fallthru
    _
  // Predicated region
  $region6: #{conv1d_into_lstm_forward.10} parent=0 // pred_check
    _
  $region7: #{conv1d_into_lstm_forward.10} parent=0 // pred_check_branch
    %11 = sbr.rel (0) target = $region9
  $region8: #{conv1d_into_lstm_forward.10} parent=0 // pred_region
    _
  $region9: #{conv1d_into_lstm_forward.10} parent=0 // pred_fallthru
    _
  // Predicated region
  $region10: #{conv1d_into_lstm_forward.10} parent=0 // pred_check
    _
  $region11: #{conv1d_into_lstm_forward.10} parent=0 // pred_check_branch
    %13 = sbr.rel (0) target = $region13
  $region12: #{conv1d_into_lstm_forward.10} parent=0 // pred_region
    _
  $region13: #{conv1d_into_lstm_forward.10} parent=0 // pred_fallthru
    _
  %v14 = vld [vmem:[%s0] sm:$0xff]
  %v15 = vld [vmem:[%s1] sm:$0xff]
  %v16 = vld [vmem:[%s1 + $0x8] sm:$0xff]
  %v17 = vld [vmem:[%s1 + $0x10] sm:$0xff]
  %v18 = vld [vmem:[%s1 + $0x18] sm:$0xff]
  %v19 = vld [vmem:[%s2] sm:$0x1]
  %v21 = vlaneseq
  %v22 = vshrl.u32 %v21, 7
  %v23 = vsub.s32 0, %v22
  %v24 = vrot.slane %v19, %v23
  %vm26 = vcmask 261120
  %v28 = vsel %vm26, %v14, 0
  %30 = vmatprep.subr.mxu0 0.0
  %31 = vmatpush1.msra.mxu0 0.0
  %32 = vmatprep.subr.mxu0 0.0
  %33 = vmatpush1.msra.mxu0 0.0
  %34 = vmatprep.subr.mxu0 0.0
  %35 = vmatpush1.msra.mxu0 0.0
  %36 = vmatprep.subr.mxu0 0.0
  %37 = vmatpush1.msra.mxu0 0.0
  %38 = vmatprep.subr.mxu0 0.0
  %39 = vmatpush1.msra.mxu0 0.0
  %40 = vmatprep.subr.mxu0 0.0
  %41 = vmatpush1.msra.mxu0 0.0
  %42 = vmatprep.subr.mxu0 0.0
  %43 = vmatpush1.msra.mxu0 0.0
  %44 = vmatprep.subr.mxu0 0.0
  %45 = vmatpush1.msra.mxu0 0.0
  %46 = vmatprep.subr.mxu0 0.0
  %47 = vmatpush1.msra.mxu0 0.0
  %48 = vmatprep.subr.mxu0 0.0
  %49 = vmatpush1.msra.mxu0 0.0
  %50 = vmatprep.subr.mxu0 0.0
  %51 = vmatpush1.msra.mxu0 0.0
  %52 = vmatprep.subr.mxu0 0.0
  %53 = vmatpush1.msra.mxu0 0.0
  %54 = vmatprep.subr.mxu0 0.0
  %55 = vmatpush1.msra.mxu0 %v18
  %56 = vmatprep.subr.mxu0 0.0
  %57 = vmatpush1.msra.mxu0 %v17
  %58 = vmatprep.subr.mxu0 0.0
  %59 = vmatpush1.msra.mxu0 %v16
  %60 = vmatprep.subr.mxu0 0.0
  %61 = vmatpush1.msra.mxu0 %v15
  %62 = vmatprep.subr.mxu0 0.0
  %63 = vmatpush2.msra.mxu0 0.0
  %64 = vmatprep.subr.mxu0 0.0
  %65 = vmatpush2.msra.mxu0 0.0
  %66 = vmatprep.subr.mxu0 0.0
  %67 = vmatpush2.msra.mxu0 0.0
  %68 = vmatprep.subr.mxu0 0.0
  %69 = vmatpush2.msra.mxu0 0.0
  %70 = vmatprep.subr.mxu0 0.0
  %71 = vmatpush2.msra.mxu0 0.0
  %72 = vmatprep.subr.mxu0 0.0
  %73 = vmatpush2.msra.mxu0 0.0
  %74 = vmatprep.subr.mxu0 0.0
  %75 = vmatpush2.msra.mxu0 0.0
  %76 = vmatprep.subr.mxu0 0.0
  %77 = vmatpush2.msra.mxu0 0.0
  %78 = vmatprep.subr.mxu0 0.0
  %79 = vmatpush2.msra.mxu0 0.0
  %80 = vmatprep.subr.mxu0 0.0
  %81 = vmatpush2.msra.mxu0 0.0
  %82 = vmatprep.subr.mxu0 0.0
  %83 = vmatpush2.msra.mxu0 0.0
  %84 = vmatprep.subr.mxu0 0.0
  %85 = vmatpush2.msra.mxu0 0.0
  %86 = vmatprep.subr.mxu0 0.0
  %87 = vmatpush2.msra.mxu0 0.0
  %88 = vmatprep.subr.mxu0 0.0
  %89 = vmatpush2.msra.mxu0 0.0
  %90 = vmatprep.subr.mxu0 0.0
  %91 = vmatpush2.msra.mxu0 0.0
  %92 = vmatprep.subr.mxu0 0.0
  %93 = vmatpush2.msra.mxu0 0.0
  %94 = vmatprep.mubr.f32.mxu0 0.0
  %95 = vmatmul.mubr.f32.gmra.mxu0 %v28
  %v96 = vpop.f32.mrf.mxu0
  %v97 = vadd.f32 %v24, %v96
  %v98 = vpop.f32.mrf.mxu0
  %99 = vdwg.mxu0
  %100 = vst [vmem:[%s3] sm:$0xff] %v97
  // Predicated region
  $region14: #{conv1d_into_lstm_forward.10} parent=0 // pred_check
    _
  $region15: #{conv1d_into_lstm_forward.10} parent=0 // pred_check_branch
    %102 = sbr.rel (0) target = $region17
  $region16: #{conv1d_into_lstm_forward.10} parent=0 // pred_region
    _
  $region17: #{conv1d_into_lstm_forward.10} parent=0 // pred_fallthru
    _
  // Predicated region
  $region18: #{conv1d_into_lstm_forward.10} parent=0 // pred_check
    _
  $region19: #{conv1d_into_lstm_forward.10} parent=0 // pred_check_branch
    %104 = sbr.rel (0) target = $region21
  $region20: #{conv1d_into_lstm_forward.10} parent=0 // pred_region
    _
  $region21: #{conv1d_into_lstm_forward.10} parent=0 // pred_fallthru
    _

// kernel: conv1d_into_lstm_forward.11
$region0: #{conv1d_into_lstm_forward.11}
  #allocation0 [shape = 'u32[]', space=smem, size = 0x4, offset = 0x4, fixed_abs, tag = 'smem constant byte address 0x4 - core index']
  #allocation1 [shape = 'u32[144,128]{1,0:T(1,128)}', space=vmem, size = 0x12000, scoped, tag = 'internal scratch']
  #allocation2 [shape = 'f32[2,32]{1,0:T(2,128)}', space=vmem, size = 0x400, scoped, tag = 'scratch operand']
  #allocation3 [shape = 'f32[2,32]{1,0:T(2,128)}', space=vmem, size = 0x400, scoped, tag = 'scratch operand']
  %s0 = inlined_call_operand.vmem [shape: f32[2,4,128], index: 0, kind: input, shape index: {}]
  %s1 = inlined_call_operand.vmem [shape: f32[32,128], index: 1, kind: input, shape index: {}]
  %s2 = inlined_call_operand.vmem [shape: f32[32,5], index: 2, kind: input, shape index: {}]
  %s3 = inlined_call_operand.vmem [shape: f32[1,5], index: 3, kind: input, shape index: {}]
  %s4 = inlined_call_operand.hbm [shape: f32[2,5], index: 4, kind: output, shape index: {}]
  %s5 = sld [smem:[#allocation0]]
  $region34: #{conv1d_into_lstm_forward.11} parent=0
    _
  %s7 = ssub.s32 1, %s5
  %s8 = scalar_select 0, %s7, %s5
  $region1: #{conv1d_into_lstm_forward.11} parent=0
    #allocation4 [shape = 'u8[1024]{0}', space=vmem, size = 0x400, scoped, tag = 'output window, operand 0, single buffered']
    #allocation5 [shape = 's32[1]{0}', space=sflag, size = 0x4, scoped, tag = 'scoped memory for conv1d_into_lstm_forward.11']
    %9 = vsyncpa [#allocation5], 0
    // Predicated region
    $region2: #{conv1d_into_lstm_forward.11} parent=1 // pred_check
      _
    $region3: #{conv1d_into_lstm_forward.11} parent=1 // pred_check_branch
      %11 = sbr.rel (0) target = $region5
    $region4: #{conv1d_into_lstm_forward.11} parent=1 // pred_region
      _
    $region5: #{conv1d_into_lstm_forward.11} parent=1 // pred_fallthru
      _
    // Predicated region
    $region6: #{conv1d_into_lstm_forward.11} parent=1 // pred_check
      _
    $region7: #{conv1d_into_lstm_forward.11} parent=1 // pred_check_branch
      %13 = sbr.rel (0) target = $region9
    $region8: #{conv1d_into_lstm_forward.11} parent=1 // pred_region
      _
    $region9: #{conv1d_into_lstm_forward.11} parent=1 // pred_fallthru
      _
    // Predicated region
    $region10: #{conv1d_into_lstm_forward.11} parent=1 // pred_check
      _
    $region11: #{conv1d_into_lstm_forward.11} parent=1 // pred_check_branch
      %15 = sbr.rel (0) target = $region13
    $region12: #{conv1d_into_lstm_forward.11} parent=1 // pred_region
      _
    $region13: #{conv1d_into_lstm_forward.11} parent=1 // pred_fallthru
      _
    // Predicated region
    $region14: #{conv1d_into_lstm_forward.11} parent=1 // pred_check
      _
    $region15: #{conv1d_into_lstm_forward.11} parent=1 // pred_check_branch
      %17 = sbr.rel (0) target = $region17
    $region16: #{conv1d_into_lstm_forward.11} parent=1 // pred_region
      _
    $region17: #{conv1d_into_lstm_forward.11} parent=1 // pred_fallthru
      _
    %p18 = scmp.eq.s32.totalorder 0, 0
    // Predicated region
    $region18: #{conv1d_into_lstm_forward.11} parent=1 // pred_check
      %p19 = pneg %p18
    $region19: #{conv1d_into_lstm_forward.11} parent=1 // pred_check_branch
      %21 = sbr.rel (%p19) target = $region21
    $region20: #{conv1d_into_lstm_forward.11} parent=1 // pred_region
      %vm22 = vcmask 254976
      %23 = vst.msk [vmem:[#allocation2] sm:$0x3] %vm22, 0.0
      %24 = vst.msk [vmem:[#allocation3] sm:$0x3] %vm22, 0.0
    $region21: #{conv1d_into_lstm_forward.11} parent=1 // pred_fallthru
      _
    %v25 = vld [vmem:[#allocation2] sm:$0x3]
    %v26 = vld [vmem:[#allocation3] sm:$0x3]
    %v27 = vld [vmem:[%s1] sm:$0xff]
    %v28 = vld [vmem:[%s1 + $0x8] sm:$0xff]
    %v29 = vld [vmem:[%s1 + $0x10] sm:$0xff]
    %v30 = vld [vmem:[%s1 + $0x18] sm:$0xff]
    %v31 = vld [vmem:[%s0] sm:$0x1]
    %v32 = vld [vmem:[%s0 + $0x4] sm:$0x1]
    %vm33 = vcmask 261120
    %v35 = vsel %vm33, %v25, 0
    %37 = vmatprep.subr.mxu0 0.0
    %38 = vmatpush1.msra.mxu0 0.0
    %39 = vmatprep.subr.mxu0 0.0
    %40 = vmatpush1.msra.mxu0 0.0
    %41 = vmatprep.subr.mxu0 0.0
    %42 = vmatpush1.msra.mxu0 0.0
    %43 = vmatprep.subr.mxu0 0.0
    %44 = vmatpush1.msra.mxu0 0.0
    %45 = vmatprep.subr.mxu0 0.0
    %46 = vmatpush1.msra.mxu0 0.0
    %47 = vmatprep.subr.mxu0 0.0
    %48 = vmatpush1.msra.mxu0 0.0
    %49 = vmatprep.subr.mxu0 0.0
    %50 = vmatpush1.msra.mxu0 0.0
    %51 = vmatprep.subr.mxu0 0.0
    %52 = vmatpush1.msra.mxu0 0.0
    %53 = vmatprep.subr.mxu0 0.0
    %54 = vmatpush1.msra.mxu0 0.0
    %55 = vmatprep.subr.mxu0 0.0
    %56 = vmatpush1.msra.mxu0 0.0
    %57 = vmatprep.subr.mxu0 0.0
    %58 = vmatpush1.msra.mxu0 0.0
    %59 = vmatprep.subr.mxu0 0.0
    %60 = vmatpush1.msra.mxu0 0.0
    %61 = vmatprep.subr.mxu0 0.0
    %62 = vmatpush1.msra.mxu0 %v30
    %63 = vmatprep.subr.mxu0 0.0
    %64 = vmatpush1.msra.mxu0 %v29
    %65 = vmatprep.subr.mxu0 0.0
    %66 = vmatpush1.msra.mxu0 %v28
    %67 = vmatprep.subr.mxu0 0.0
    %68 = vmatpush1.msra.mxu0 %v27
    %69 = vmatprep.subr.mxu0 0.0
    %70 = vmatpush2.msra.mxu0 0.0
    %71 = vmatprep.subr.mxu0 0.0
    %72 = vmatpush2.msra.mxu0 0.0
    %73 = vmatprep.subr.mxu0 0.0
    %74 = vmatpush2.msra.mxu0 0.0
    %75 = vmatprep.subr.mxu0 0.0
    %76 = vmatpush2.msra.mxu0 0.0
    %77 = vmatprep.subr.mxu0 0.0
    %78 = vmatpush2.msra.mxu0 0.0
    %79 = vmatprep.subr.mxu0 0.0
    %80 = vmatpush2.msra.mxu0 0.0
    %81 = vmatprep.subr.mxu0 0.0
    %82 = vmatpush2.msra.mxu0 0.0
    %83 = vmatprep.subr.mxu0 0.0
    %84 = vmatpush2.msra.mxu0 0.0
    %85 = vmatprep.subr.mxu0 0.0
    %86 = vmatpush2.msra.mxu0 0.0
    %87 = vmatprep.subr.mxu0 0.0
    %88 = vmatpush2.msra.mxu0 0.0
    %89 = vmatprep.subr.mxu0 0.0
    %90 = vmatpush2.msra.mxu0 0.0
    %91 = vmatprep.subr.mxu0 0.0
    %92 = vmatpush2.msra.mxu0 0.0
    %93 = vmatprep.subr.mxu0 0.0
    %94 = vmatpush2.msra.mxu0 0.0
    %95 = vmatprep.subr.mxu0 0.0
    %96 = vmatpush2.msra.mxu0 0.0
    %97 = vmatprep.subr.mxu0 0.0
    %98 = vmatpush2.msra.mxu0 0.0
    %99 = vmatprep.subr.mxu0 0.0
    %100 = vmatpush2.msra.mxu0 0.0
    %101 = vmatprep.mubr.f32.mxu0 0.0
    %102 = vmatmul.mubr.f32.gmra.mxu0 %v35
    %v103 = vpop.f32.mrf.mxu0
    %v104 = vadd.f32 0.0, %v103
    %v105 = vpop.f32.mrf.mxu0
    %106 = vdwg.mxu0
    %v108 = vrot.slane %v104, 1
    %v111 = vadd.f32 %v31, %v104
    %v112 = vadd.f32 %v32, %v108
    %v113 = vxor.u32 %v111, 2147483648
    %v114 = vxor.u32 %v112, 2147483648
    %v115 = vmul.f32 %v113, 1.442695
    %v116 = vpow.pop %v115
    %v117 = vmul.f32 %v114, 1.442695
    %v118 = vpow.pop %v117
    %v119 = vadd.f32 %v116, 1.0
    %v120 = vadd.f32 %v118, 1.0
    %v121 = vrcp.pop %v119
    %v122 = vmul.f32 1.0, %v121
    %v123 = vrcp.pop %v120
    %v124 = vmul.f32 1.0, %v123
    %v125 = vtanh.pop %v111
    %v126 = vtanh.pop %v112
    %v128 = vrot.slane %v26, 1
    %129 = vrot.lane.b32.xlu0 %v26, 32
    %v130 = vpop.permute.xlu0 %129
    %131 = vrot.lane.b32.xlu0 %v128, 32
    %v132 = vpop.permute.xlu0 %131
    %v135 = vmul.f32 %v122, %v130
    %v136 = vmul.f32 %v124, %v132
    %139 = vrot.lane.b32.xlu0 %v125, 64
    %v140 = vpop.permute.xlu0 %139
    %141 = vrot.lane.b32.xlu0 %v126, 64
    %v142 = vpop.permute.xlu0 %141
    %v145 = vmul.f32 %v122, %v140
    %v146 = vmul.f32 %v124, %v142
    %149 = vrot.lane.b32.xlu0 %v145, 32
    %v150 = vpop.permute.xlu0 %149
    %151 = vrot.lane.b32.xlu0 %v146, 32
    %v152 = vpop.permute.xlu0 %151
    %v155 = vadd.f32 %v135, %v150
    %v156 = vadd.f32 %v136, %v152
    %v157 = vtanh.pop %v155
    %v158 = vtanh.pop %v156
    %161 = vrot.lane.b32.xlu0 %v157, 64
    %v162 = vpop.permute.xlu0 %161
    %163 = vrot.lane.b32.xlu0 %v158, 64
    %v164 = vpop.permute.xlu0 %163
    %v167 = vmul.f32 %v122, %v162
    %v168 = vmul.f32 %v124, %v164
    %v169 = vld [vmem:[%s0 + $0x1] sm:$0x1]
    %v170 = vld [vmem:[%s0 + $0x5] sm:$0x1]
    %v173 = vrot.slane %v168, 7
    %vm174 = vcmask 1041409
    %v175 = vsel %vm174, %v173, %v167
    %176 = vrot.lane.b32.xlu0 %v175, 32
    %v177 = vpop.permute.xlu0 %176
    %v178 = vsel %vm33, %v177, 0
    %180 = vmatprep.subr.mxu0 0.0
    %181 = vmatpush1.msra.mxu0 0.0
    %182 = vmatprep.subr.mxu0 0.0
    %183 = vmatpush1.msra.mxu0 0.0
    %184 = vmatprep.subr.mxu0 0.0
    %185 = vmatpush1.msra.mxu0 0.0
    %186 = vmatprep.subr.mxu0 0.0
    %187 = vmatpush1.msra.mxu0 0.0
    %188 = vmatprep.subr.mxu0 0.0
    %189 = vmatpush1.msra.mxu0 0.0
    %190 = vmatprep.subr.mxu0 0.0
    %191 = vmatpush1.msra.mxu0 0.0
    %192 = vmatprep.subr.mxu0 0.0
    %193 = vmatpush1.msra.mxu0 0.0
    %194 = vmatprep.subr.mxu0 0.0
    %195 = vmatpush1.msra.mxu0 0.0
    %196 = vmatprep.subr.mxu0 0.0
    %197 = vmatpush1.msra.mxu0 0.0
    %198 = vmatprep.subr.mxu0 0.0
    %199 = vmatpush1.msra.mxu0 0.0
    %200 = vmatprep.subr.mxu0 0.0
    %201 = vmatpush1.msra.mxu0 0.0
    %202 = vmatprep.subr.mxu0 0.0
    %203 = vmatpush1.msra.mxu0 0.0
    %204 = vmatprep.subr.mxu0 0.0
    %205 = vmatpush1.msra.mxu0 %v30
    %206 = vmatprep.subr.mxu0 0.0
    %207 = vmatpush1.msra.mxu0 %v29
    %208 = vmatprep.subr.mxu0 0.0
    %209 = vmatpush1.msra.mxu0 %v28
    %210 = vmatprep.subr.mxu0 0.0
    %211 = vmatpush1.msra.mxu0 %v27
    %212 = vmatprep.subr.mxu0 0.0
    %213 = vmatpush2.msra.mxu0 0.0
    %214 = vmatprep.subr.mxu0 0.0
    %215 = vmatpush2.msra.mxu0 0.0
    %216 = vmatprep.subr.mxu0 0.0
    %217 = vmatpush2.msra.mxu0 0.0
    %218 = vmatprep.subr.mxu0 0.0
    %219 = vmatpush2.msra.mxu0 0.0
    %220 = vmatprep.subr.mxu0 0.0
    %221 = vmatpush2.msra.mxu0 0.0
    %222 = vmatprep.subr.mxu0 0.0
    %223 = vmatpush2.msra.mxu0 0.0
    %224 = vmatprep.subr.mxu0 0.0
    %225 = vmatpush2.msra.mxu0 0.0
    %226 = vmatprep.subr.mxu0 0.0
    %227 = vmatpush2.msra.mxu0 0.0
    %228 = vmatprep.subr.mxu0 0.0
    %229 = vmatpush2.msra.mxu0 0.0
    %230 = vmatprep.subr.mxu0 0.0
    %231 = vmatpush2.msra.mxu0 0.0
    %232 = vmatprep.subr.mxu0 0.0
    %233 = vmatpush2.msra.mxu0 0.0
    %234 = vmatprep.subr.mxu0 0.0
    %235 = vmatpush2.msra.mxu0 0.0
    %236 = vmatprep.subr.mxu0 0.0
    %237 = vmatpush2.msra.mxu0 0.0
    %238 = vmatprep.subr.mxu0 0.0
    %239 = vmatpush2.msra.mxu0 0.0
    %240 = vmatprep.subr.mxu0 0.0
    %241 = vmatpush2.msra.mxu0 0.0
    %242 = vmatprep.subr.mxu0 0.0
    %243 = vmatpush2.msra.mxu0 0.0
    %244 = vmatprep.mubr.f32.mxu0 0.0
    %245 = vmatmul.mubr.f32.gmra.mxu0 %v178
    %v246 = vpop.f32.mrf.mxu0
    %v247 = vadd.f32 0.0, %v246
    %v248 = vpop.f32.mrf.mxu0
    %249 = vdwg.mxu0
    %v251 = vrot.slane %v247, 1
    %v254 = vadd.f32 %v169, %v247
    %v255 = vadd.f32 %v170, %v251
    %v256 = vxor.u32 %v254, 2147483648
    %v257 = vxor.u32 %v255, 2147483648
    %v258 = vmul.f32 %v256, 1.442695
    %v259 = vpow.pop %v258
    %v260 = vmul.f32 %v257, 1.442695
    %v261 = vpow.pop %v260
    %v262 = vadd.f32 %v259, 1.0
    %v263 = vadd.f32 %v261, 1.0
    %v264 = vrcp.pop %v262
    %v265 = vmul.f32 1.0, %v264
    %v266 = vrcp.pop %v263
    %v267 = vmul.f32 1.0, %v266
    %v268 = vtanh.pop %v254
    %v269 = vtanh.pop %v255
    %v270 = vmul.f32 %v265, %v155
    %v271 = vmul.f32 %v267, %v156
    %274 = vrot.lane.b32.xlu0 %v268, 64
    %v275 = vpop.permute.xlu0 %274
    %276 = vrot.lane.b32.xlu0 %v269, 64
    %v277 = vpop.permute.xlu0 %276
    %v280 = vmul.f32 %v265, %v275
    %v281 = vmul.f32 %v267, %v277
    %284 = vrot.lane.b32.xlu0 %v280, 32
    %v285 = vpop.permute.xlu0 %284
    %286 = vrot.lane.b32.xlu0 %v281, 32
    %v287 = vpop.permute.xlu0 %286
    %v290 = vadd.f32 %v270, %v285
    %v291 = vadd.f32 %v271, %v287
    %v292 = vtanh.pop %v290
    %v293 = vtanh.pop %v291
    %296 = vrot.lane.b32.xlu0 %v292, 64
    %v297 = vpop.permute.xlu0 %296
    %298 = vrot.lane.b32.xlu0 %v293, 64
    %v299 = vpop.permute.xlu0 %298
    %v302 = vmul.f32 %v265, %v297
    %v303 = vmul.f32 %v267, %v299
    %v304 = vld [vmem:[%s0 + $0x2] sm:$0x1]
    %v305 = vld [vmem:[%s0 + $0x6] sm:$0x1]
    %v308 = vrot.slane %v303, 7
    %v309 = vsel %vm174, %v308, %v302
    %310 = vrot.lane.b32.xlu0 %v309, 32
    %v311 = vpop.permute.xlu0 %310
    %v312 = vsel %vm33, %v311, 0
    %314 = vmatprep.subr.mxu0 0.0
    %315 = vmatpush1.msra.mxu0 0.0
    %316 = vmatprep.subr.mxu0 0.0
    %317 = vmatpush1.msra.mxu0 0.0
    %318 = vmatprep.subr.mxu0 0.0
    %319 = vmatpush1.msra.mxu0 0.0
    %320 = vmatprep.subr.mxu0 0.0
    %321 = vmatpush1.msra.mxu0 0.0
    %322 = vmatprep.subr.mxu0 0.0
    %323 = vmatpush1.msra.mxu0 0.0
    %324 = vmatprep.subr.mxu0 0.0
    %325 = vmatpush1.msra.mxu0 0.0
    %326 = vmatprep.subr.mxu0 0.0
    %327 = vmatpush1.msra.mxu0 0.0
    %328 = vmatprep.subr.mxu0 0.0
    %329 = vmatpush1.msra.mxu0 0.0
    %330 = vmatprep.subr.mxu0 0.0
    %331 = vmatpush1.msra.mxu0 0.0
    %332 = vmatprep.subr.mxu0 0.0
    %333 = vmatpush1.msra.mxu0 0.0
    %334 = vmatprep.subr.mxu0 0.0
    %335 = vmatpush1.msra.mxu0 0.0
    %336 = vmatprep.subr.mxu0 0.0
    %337 = vmatpush1.msra.mxu0 0.0
    %338 = vmatprep.subr.mxu0 0.0
    %339 = vmatpush1.msra.mxu0 %v30
    %340 = vmatprep.subr.mxu0 0.0
    %341 = vmatpush1.msra.mxu0 %v29
    %342 = vmatprep.subr.mxu0 0.0
    %343 = vmatpush1.msra.mxu0 %v28
    %344 = vmatprep.subr.mxu0 0.0
    %345 = vmatpush1.msra.mxu0 %v27
    %346 = vmatprep.subr.mxu0 0.0
    %347 = vmatpush2.msra.mxu0 0.0
    %348 = vmatprep.subr.mxu0 0.0
    %349 = vmatpush2.msra.mxu0 0.0
    %350 = vmatprep.subr.mxu0 0.0
    %351 = vmatpush2.msra.mxu0 0.0
    %352 = vmatprep.subr.mxu0 0.0
    %353 = vmatpush2.msra.mxu0 0.0
    %354 = vmatprep.subr.mxu0 0.0
    %355 = vmatpush2.msra.mxu0 0.0
    %356 = vmatprep.subr.mxu0 0.0
    %357 = vmatpush2.msra.mxu0 0.0
    %358 = vmatprep.subr.mxu0 0.0
    %359 = vmatpush2.msra.mxu0 0.0
    %360 = vmatprep.subr.mxu0 0.0
    %361 = vmatpush2.msra.mxu0 0.0
    %362 = vmatprep.subr.mxu0 0.0
    %363 = vmatpush2.msra.mxu0 0.0
    %364 = vmatprep.subr.mxu0 0.0
    %365 = vmatpush2.msra.mxu0 0.0
    %366 = vmatprep.subr.mxu0 0.0
    %367 = vmatpush2.msra.mxu0 0.0
    %368 = vmatprep.subr.mxu0 0.0
    %369 = vmatpush2.msra.mxu0 0.0
    %370 = vmatprep.subr.mxu0 0.0
    %371 = vmatpush2.msra.mxu0 0.0
    %372 = vmatprep.subr.mxu0 0.0
    %373 = vmatpush2.msra.mxu0 0.0
    %374 = vmatprep.subr.mxu0 0.0
    %375 = vmatpush2.msra.mxu0 0.0
    %376 = vmatprep.subr.mxu0 0.0
    %377 = vmatpush2.msra.mxu0 0.0
    %378 = vmatprep.mubr.f32.mxu0 0.0
    %379 = vmatmul.mubr.f32.gmra.mxu0 %v312
    %v380 = vpop.f32.mrf.mxu0
    %v381 = vadd.f32 0.0, %v380
    %v382 = vpop.f32.mrf.mxu0
    %383 = vdwg.mxu0
    %v385 = vrot.slane %v381, 1
    %v388 = vadd.f32 %v304, %v381
    %v389 = vadd.f32 %v305, %v385
    %v390 = vxor.u32 %v388, 2147483648
    %v391 = vxor.u32 %v389, 2147483648
    %v392 = vmul.f32 %v390, 1.442695
    %v393 = vpow.pop %v392
    %v394 = vmul.f32 %v391, 1.442695
    %v395 = vpow.pop %v394
    %v396 = vadd.f32 %v393, 1.0
    %v397 = vadd.f32 %v395, 1.0
    %v398 = vrcp.pop %v396
    %v399 = vmul.f32 1.0, %v398
    %v400 = vrcp.pop %v397
    %v401 = vmul.f32 1.0, %v400
    %v402 = vtanh.pop %v388
    %v403 = vtanh.pop %v389
    %v404 = vmul.f32 %v399, %v290
    %v405 = vmul.f32 %v401, %v291
    %408 = vrot.lane.b32.xlu0 %v402, 64
    %v409 = vpop.permute.xlu0 %408
    %410 = vrot.lane.b32.xlu0 %v403, 64
    %v411 = vpop.permute.xlu0 %410
    %v414 = vmul.f32 %v399, %v409
    %v415 = vmul.f32 %v401, %v411
    %418 = vrot.lane.b32.xlu0 %v414, 32
    %v419 = vpop.permute.xlu0 %418
    %420 = vrot.lane.b32.xlu0 %v415, 32
    %v421 = vpop.permute.xlu0 %420
    %v424 = vadd.f32 %v404, %v419
    %v425 = vadd.f32 %v405, %v421
    %v426 = vtanh.pop %v424
    %v427 = vtanh.pop %v425
    %430 = vrot.lane.b32.xlu0 %v426, 64
    %v431 = vpop.permute.xlu0 %430
    %432 = vrot.lane.b32.xlu0 %v427, 64
    %v433 = vpop.permute.xlu0 %432
    %v436 = vmul.f32 %v399, %v431
    %v437 = vmul.f32 %v401, %v433
    %v438 = vld [vmem:[%s0 + $0x3] sm:$0x1]
    %v439 = vld [vmem:[%s0 + $0x7] sm:$0x1]
    %v442 = vrot.slane %v437, 7
    %v443 = vsel %vm174, %v442, %v436
    %444 = vrot.lane.b32.xlu0 %v443, 32
    %v445 = vpop.permute.xlu0 %444
    %v446 = vsel %vm33, %v445, 0
    %448 = vmatprep.subr.mxu0 0.0
    %449 = vmatpush1.msra.mxu0 0.0
    %450 = vmatprep.subr.mxu0 0.0
    %451 = vmatpush1.msra.mxu0 0.0
    %452 = vmatprep.subr.mxu0 0.0
    %453 = vmatpush1.msra.mxu0 0.0
    %454 = vmatprep.subr.mxu0 0.0
    %455 = vmatpush1.msra.mxu0 0.0
    %456 = vmatprep.subr.mxu0 0.0
    %457 = vmatpush1.msra.mxu0 0.0
    %458 = vmatprep.subr.mxu0 0.0
    %459 = vmatpush1.msra.mxu0 0.0
    %460 = vmatprep.subr.mxu0 0.0
    %461 = vmatpush1.msra.mxu0 0.0
    %462 = vmatprep.subr.mxu0 0.0
    %463 = vmatpush1.msra.mxu0 0.0
    %464 = vmatprep.subr.mxu0 0.0
    %465 = vmatpush1.msra.mxu0 0.0
    %466 = vmatprep.subr.mxu0 0.0
    %467 = vmatpush1.msra.mxu0 0.0
    %468 = vmatprep.subr.mxu0 0.0
    %469 = vmatpush1.msra.mxu0 0.0
    %470 = vmatprep.subr.mxu0 0.0
    %471 = vmatpush1.msra.mxu0 0.0
    %472 = vmatprep.subr.mxu0 0.0
    %473 = vmatpush1.msra.mxu0 %v30
    %474 = vmatprep.subr.mxu0 0.0
    %475 = vmatpush1.msra.mxu0 %v29
    %476 = vmatprep.subr.mxu0 0.0
    %477 = vmatpush1.msra.mxu0 %v28
    %478 = vmatprep.subr.mxu0 0.0
    %479 = vmatpush1.msra.mxu0 %v27
    %480 = vmatprep.subr.mxu0 0.0
    %481 = vmatpush2.msra.mxu0 0.0
    %482 = vmatprep.subr.mxu0 0.0
    %483 = vmatpush2.msra.mxu0 0.0
    %484 = vmatprep.subr.mxu0 0.0
    %485 = vmatpush2.msra.mxu0 0.0
    %486 = vmatprep.subr.mxu0 0.0
    %487 = vmatpush2.msra.mxu0 0.0
    %488 = vmatprep.subr.mxu0 0.0
    %489 = vmatpush2.msra.mxu0 0.0
    %490 = vmatprep.subr.mxu0 0.0
    %491 = vmatpush2.msra.mxu0 0.0
    %492 = vmatprep.subr.mxu0 0.0
    %493 = vmatpush2.msra.mxu0 0.0
    %494 = vmatprep.subr.mxu0 0.0
    %495 = vmatpush2.msra.mxu0 0.0
    %496 = vmatprep.subr.mxu0 0.0
    %497 = vmatpush2.msra.mxu0 0.0
    %498 = vmatprep.subr.mxu0 0.0
    %499 = vmatpush2.msra.mxu0 0.0
    %500 = vmatprep.subr.mxu0 0.0
    %501 = vmatpush2.msra.mxu0 0.0
    %502 = vmatprep.subr.mxu0 0.0
    %503 = vmatpush2.msra.mxu0 0.0
    %504 = vmatprep.subr.mxu0 0.0
    %505 = vmatpush2.msra.mxu0 0.0
    %506 = vmatprep.subr.mxu0 0.0
    %507 = vmatpush2.msra.mxu0 0.0
    %508 = vmatprep.subr.mxu0 0.0
    %509 = vmatpush2.msra.mxu0 0.0
    %510 = vmatprep.subr.mxu0 0.0
    %511 = vmatpush2.msra.mxu0 0.0
    %512 = vmatprep.mubr.f32.mxu0 0.0
    %513 = vmatmul.mubr.f32.gmra.mxu0 %v446
    %v514 = vpop.f32.mrf.mxu0
    %v515 = vadd.f32 0.0, %v514
    %v516 = vpop.f32.mrf.mxu0
    %517 = vdwg.mxu0
    %v519 = vrot.slane %v515, 1
    %v522 = vadd.f32 %v438, %v515
    %v523 = vadd.f32 %v439, %v519
    %v524 = vxor.u32 %v522, 2147483648
    %v525 = vxor.u32 %v523, 2147483648
    %v526 = vmul.f32 %v524, 1.442695
    %v527 = vpow.pop %v526
    %v528 = vmul.f32 %v525, 1.442695
    %v529 = vpow.pop %v528
    %v530 = vadd.f32 %v527, 1.0
    %v531 = vadd.f32 %v529, 1.0
    %v532 = vrcp.pop %v530
    %v533 = vmul.f32 1.0, %v532
    %v534 = vrcp.pop %v531
    %v535 = vmul.f32 1.0, %v534
    %v536 = vtanh.pop %v522
    %v537 = vtanh.pop %v523
    %v538 = vmul.f32 %v533, %v424
    %v539 = vmul.f32 %v535, %v425
    %542 = vrot.lane.b32.xlu0 %v536, 64
    %v543 = vpop.permute.xlu0 %542
    %544 = vrot.lane.b32.xlu0 %v537, 64
    %v545 = vpop.permute.xlu0 %544
    %v548 = vmul.f32 %v533, %v543
    %v549 = vmul.f32 %v535, %v545
    %552 = vrot.lane.b32.xlu0 %v548, 32
    %v553 = vpop.permute.xlu0 %552
    %554 = vrot.lane.b32.xlu0 %v549, 32
    %v555 = vpop.permute.xlu0 %554
    %v558 = vadd.f32 %v538, %v553
    %v559 = vadd.f32 %v539, %v555
    %v560 = vtanh.pop %v558
    %v561 = vtanh.pop %v559
    %564 = vrot.lane.b32.xlu0 %v560, 64
    %v565 = vpop.permute.xlu0 %564
    %566 = vrot.lane.b32.xlu0 %v561, 64
    %v567 = vpop.permute.xlu0 %566
    %v570 = vmul.f32 %v533, %v565
    %v571 = vmul.f32 %v535, %v567
    %v574 = vrot.slane %v571, 7
    %v575 = vsel %vm174, %v574, %v570
    %576 = vrot.lane.b32.xlu0 %v575, 32
    %v577 = vpop.permute.xlu0 %576
    %vm579 = vcmask 254976
    %580 = vst.msk [vmem:[#allocation2] sm:$0x3] %vm579, %v577
    %v583 = vrot.slane %v559, 7
    %v584 = vsel %vm174, %v583, %v558
    %585 = vrot.lane.b32.xlu0 %v584, 96
    %v586 = vpop.permute.xlu0 %585
    %588 = vst.msk [vmem:[#allocation3] sm:$0x3] %vm579, %v586
    // Predicated region
    $region22: #{conv1d_into_lstm_forward.11} parent=1 // pred_check
      %p589 = pneg %p18
    $region23: #{conv1d_into_lstm_forward.11} parent=1 // pred_check_branch
      %591 = sbr.rel (%p589) target = $region25
    $region24: #{conv1d_into_lstm_forward.11} parent=1 // pred_region
      %v592 = vld [vmem:[%s2] sm:$0xff]
      %v593 = vld [vmem:[%s2 + $0x8] sm:$0xff]
      %v594 = vld [vmem:[%s2 + $0x10] sm:$0xff]
      %v595 = vld [vmem:[%s2 + $0x18] sm:$0xff]
      %v596 = vld [vmem:[%s3] sm:$0x1]
      %v598 = vlaneseq
      %v599 = vshrl.u32 %v598, 7
      %v600 = vsub.s32 0, %v599
      %v601 = vrot.slane %v596, %v600
      %v603 = vsel %vm33, %v577, 0
      %605 = vmatprep.subr.mxu0 0.0
      %606 = vmatpush1.msra.mxu0 0.0
      %607 = vmatprep.subr.mxu0 0.0
      %608 = vmatpush1.msra.mxu0 0.0
      %609 = vmatprep.subr.mxu0 0.0
      %610 = vmatpush1.msra.mxu0 0.0
      %611 = vmatprep.subr.mxu0 0.0
      %612 = vmatpush1.msra.mxu0 0.0
      %613 = vmatprep.subr.mxu0 0.0
      %614 = vmatpush1.msra.mxu0 0.0
      %615 = vmatprep.subr.mxu0 0.0
      %616 = vmatpush1.msra.mxu0 0.0
      %617 = vmatprep.subr.mxu0 0.0
      %618 = vmatpush1.msra.mxu0 0.0
      %619 = vmatprep.subr.mxu0 0.0
      %620 = vmatpush1.msra.mxu0 0.0
      %621 = vmatprep.subr.mxu0 0.0
      %622 = vmatpush1.msra.mxu0 0.0
      %623 = vmatprep.subr.mxu0 0.0
      %624 = vmatpush1.msra.mxu0 0.0
      %625 = vmatprep.subr.mxu0 0.0
      %626 = vmatpush1.msra.mxu0 0.0
      %627 = vmatprep.subr.mxu0 0.0
      %628 = vmatpush1.msra.mxu0 0.0
      %629 = vmatprep.subr.mxu0 0.0
      %630 = vmatpush1.msra.mxu0 %v595
      %631 = vmatprep.subr.mxu0 0.0
      %632 = vmatpush1.msra.mxu0 %v594
      %633 = vmatprep.subr.mxu0 0.0
      %634 = vmatpush1.msra.mxu0 %v593
      %635 = vmatprep.subr.mxu0 0.0
      %636 = vmatpush1.msra.mxu0 %v592
      %637 = vmatprep.subr.mxu0 0.0
      %638 = vmatpush2.msra.mxu0 0.0
      %639 = vmatprep.subr.mxu0 0.0
      %640 = vmatpush2.msra.mxu0 0.0
      %641 = vmatprep.subr.mxu0 0.0
      %642 = vmatpush2.msra.mxu0 0.0
      %643 = vmatprep.subr.mxu0 0.0
      %644 = vmatpush2.msra.mxu0 0.0
      %645 = vmatprep.subr.mxu0 0.0
      %646 = vmatpush2.msra.mxu0 0.0
      %647 = vmatprep.subr.mxu0 0.0
      %648 = vmatpush2.msra.mxu0 0.0
      %649 = vmatprep.subr.mxu0 0.0
      %650 = vmatpush2.msra.mxu0 0.0
      %651 = vmatprep.subr.mxu0 0.0
      %652 = vmatpush2.msra.mxu0 0.0
      %653 = vmatprep.subr.mxu0 0.0
      %654 = vmatpush2.msra.mxu0 0.0
      %655 = vmatprep.subr.mxu0 0.0
      %656 = vmatpush2.msra.mxu0 0.0
      %657 = vmatprep.subr.mxu0 0.0
      %658 = vmatpush2.msra.mxu0 0.0
      %659 = vmatprep.subr.mxu0 0.0
      %660 = vmatpush2.msra.mxu0 0.0
      %661 = vmatprep.subr.mxu0 0.0
      %662 = vmatpush2.msra.mxu0 0.0
      %663 = vmatprep.subr.mxu0 0.0
      %664 = vmatpush2.msra.mxu0 0.0
      %665 = vmatprep.subr.mxu0 0.0
      %666 = vmatpush2.msra.mxu0 0.0
      %667 = vmatprep.subr.mxu0 0.0
      %668 = vmatpush2.msra.mxu0 0.0
      %669 = vmatprep.mubr.f32.mxu0 0.0
      %670 = vmatmul.mubr.f32.gmra.mxu0 %v603
      %v671 = vpop.f32.mrf.mxu0
      %v672 = vadd.f32 %v601, %v671
      %v673 = vpop.f32.mrf.mxu0
      %674 = vdwg.mxu0
      %vm675 = vcmask 33792
      %676 = vst.msk [vmem:[#allocation4] sm:$0x3] %vm675, %v672
    $region25: #{conv1d_into_lstm_forward.11} parent=1 // pred_fallthru
      _
    // Predicated region
    $region26: #{conv1d_into_lstm_forward.11} parent=1 // pred_check
      _
    $region27: #{conv1d_into_lstm_forward.11} parent=1 // pred_check_branch
      %678 = sbr.rel (0) target = $region29
    $region28: #{conv1d_into_lstm_forward.11} parent=1 // pred_region
      %s680 = ssub.s32 32, 32
      %681 = vsyncadd [#allocation5], %s680
      %s683 = sshll.u32 [#allocation4], 4
      %s684 = int_to_ptr.vmem [resolvable:$true] %s683
      %686 = dma.vmem_to_hbm [thread:$0]  %s684, 32, %s4, [#allocation5]
    $region29: #{conv1d_into_lstm_forward.11} parent=1 // pred_fallthru
      _
    // Predicated region
    $region30: #{conv1d_into_lstm_forward.11} parent=1 // pred_check
      _
    $region31: #{conv1d_into_lstm_forward.11} parent=1 // pred_check_branch
      %688 = sbr.rel (0) target = $region33
    $region32: #{conv1d_into_lstm_forward.11} parent=1 // pred_region
      %689 = dma.done [#allocation5], 32
    $region33: #{conv1d_into_lstm_forward.11} parent=1 // pred_fallthru
      _
    %690 = vsyncpa [#allocation5], 1

</llo_original>
